<compile_context>
chip_gen: v7x
topology: tpu7x:2x2x1
jax: 0.10.0
libtpu: 0.0.40
codegen_flags: <defaults>
</compile_context>

<pallas_src>
import functools

import jax
import jax.numpy as jnp
from jax import lax
from jax.experimental import pallas as pl
from jax.experimental.pallas import tpu as pltpu

EPS = 1e-5
NEG_SLOPE = 0.01  # PyTorch LeakyReLU default


def _round_up(x, m):
    return ((x + m - 1) // m) * m


@functools.lru_cache(maxsize=None)
def _vmem_capacity_bytes():
    try:
        return int(pltpu.get_tpu_info().vmem_capacity_bytes)
    except Exception:
        return 64 << 20  # conservative fallback: v7x per-core VMEM


def _choose_tiles(M, Kp, Cp):
    """Generation-aware M tile for pass 1 + pipeline VMEM budget."""
    cap = _vmem_capacity_bytes()
    if cap >= (128 << 20):                      # v5e / v6e: 128 MiB VMEM
        budget, vmem_limit, tm = 64 << 20, 100 << 20, 2048
    else:                                       # v7x: 64 MiB per core
        budget, vmem_limit, tm = 28 << 20, 48 << 20, 512
    w_bytes = 2 * (Kp * Cp * 2)                 # resident bf16 weight, 2 pipeline bufs
    stats_bytes = 2 * (8 * Cp * 4)              # per-tile stats block, 2 bufs
    # per-step pipeline buffers: bf16 P tile + bf16 Y tile, double buffered
    while tm > 64 and 2 * tm * (Kp + Cp) * 2 + w_bytes + stats_bytes > budget:
        tm //= 2
    if M < tm:
        tm = _round_up(max(M, 16), 16)          # 16 = bf16 sublane packing granularity
    return tm, budget, vmem_limit


def _choose_tm2(tm, n_tiles, Cp, budget):
    """Pass-2 tile: multiple of tm that divides Mp; bigger = fewer grid steps."""
    best = 1
    for f in range(1, n_tiles + 1):
        if n_tiles % f:
            continue
        tm2 = tm * f
        if tm2 <= 4096 and 2 * tm2 * Cp * (2 + 4) <= budget:
            best = f
    return tm * best


# ---------------------------------------------------------------------------
# Pass 1: conv-as-matmul per M tile + per-tile per-channel sum / sum-of-squares
# ---------------------------------------------------------------------------
def _conv_stats_kernel(p_ref, w_ref, y_ref, stats_ref):
    # p_ref: (TM, Kp) bf16, w_ref: (Kp, Cp) bf16 (constant block index)
    # y_ref: (TM, Cp) bf16 conv output tile
    # stats_ref: (8, Cp) f32 per-tile partials (row 0 = sum, row 1 = sumsq)
    y = jnp.dot(p_ref[...], w_ref[...], preferred_element_type=jnp.float32)
    y_ref[...] = y.astype(y_ref.dtype)          # bf16 writeback; stats stay on f32 acc
    stats_ref[...] = jnp.zeros_like(stats_ref)
    stats_ref[0:1, :] = jnp.sum(y, axis=0, keepdims=True)
    stats_ref[1:2, :] = jnp.sum(y * y, axis=0, keepdims=True)


# ---------------------------------------------------------------------------
# Pass 2: folded BatchNorm affine (scale/shift) + LeakyReLU
# ---------------------------------------------------------------------------
def _bn_lrelu_kernel(y_ref, ss_ref, o_ref):
    # y_ref: (TM2, Cp) bf16; ss_ref: (8, Cp) f32 (row 0 = scale, row 1 = shift)
    z = y_ref[...].astype(jnp.float32) * ss_ref[0:1, :] + ss_ref[1:2, :]
    o_ref[...] = jnp.where(z > 0, z, NEG_SLOPE * z)


# ---------------------------------------------------------------------------
# Wrapper: bf16 im2col glue in JAX, hot path in two tiled Pallas kernels
# ---------------------------------------------------------------------------
@functools.partial(jax.jit, static_argnames=("stride", "channels_last"))
def block_forward(x, w, b, gamma, beta, stride=1, channels_last=False):
    """x: (N, Cin, D, H, W); w: (Cout, Cin, 3, 3, 3); b/gamma/beta: (Cout,).

    `b` is accepted for API parity with Conv3d but is not used: under
    training-mode BatchNorm the per-channel bias is exactly cancelled by the
    mean subtraction, so adding it would be dead math.
    """
    N, Cin, D, H, W = x.shape
    Cout = w.shape[0]
    s = stride
    Do = (D + 2 - 3) // s + 1
    Ho = (H + 2 - 3) // s + 1
    Wo = (W + 2 - 3) // s + 1
    M = N * Do * Ho * Wo
    K = Cin * 27

    Kp = _round_up(K, 128)                      # lane-align the contraction axis
    # lane-dense channels; 256-granular when Cout > 128 to fill v6e/v7x's 256-wide MXU
    Cp = _round_up(Cout, 256) if Cout > 128 else _round_up(Cout, 128)
    TM, budget, vmem_limit = _choose_tiles(M, Kp, Cp)
    Mp = _round_up(M, TM)
    n_tiles = Mp // TM
    TM2 = _choose_tm2(TM, n_tiles, Cp, budget)
    n_tiles2 = Mp // TM2

    # ---- im2col (padding=1, 3x3x3 window, stride s), entirely in bf16 ----
    x_pad = jnp.pad(x, ((0, 0), (0, 0), (1, 1), (1, 1), (1, 1))).astype(jnp.bfloat16)
    cols = []
    for kd in range(3):
        for kh in range(3):
            for kw in range(3):
                cols.append(x_pad[:, :,
                                  kd:kd + (Do - 1) * s + 1:s,
                                  kh:kh + (Ho - 1) * s + 1:s,
                                  kw:kw + (Wo - 1) * s + 1:s])  # (N,Cin,Do,Ho,Wo)
    patches = jnp.stack(cols, axis=2)                     # (N, Cin, 27, Do, Ho, Wo)
    patches = jnp.transpose(patches, (0, 3, 4, 5, 1, 2))  # (N, Do, Ho, Wo, Cin, 27)
    P = jnp.pad(patches.reshape(M, K), ((0, Mp - M), (0, Kp - K)))   # bf16 (Mp, Kp)

    # weight -> (Kp, Cp), same (ci, kd, kh, kw) flatten order as the patches
    Wm = w.reshape(Cout, K).T.astype(jnp.bfloat16)
    Wm = jnp.pad(Wm, ((0, Kp - K), (0, Cp - Cout)))

    # ---- pass 1: conv matmul + per-tile channel sums (tiled, parallel) ----
    y_flat, stats_partial = pl.pallas_call(
        _conv_stats_kernel,
        out_shape=(jax.ShapeDtypeStruct((Mp, Cp), jnp.bfloat16),
                   jax.ShapeDtypeStruct((n_tiles * 8, Cp), jnp.float32)),
        grid_spec=pltpu.PrefetchScalarGridSpec(
            num_scalar_prefetch=0,
            grid=(n_tiles,),
            in_specs=[pl.BlockSpec((TM, Kp), lambda i: (i, 0)),
                      pl.BlockSpec((Kp, Cp), lambda i: (0, 0))],
            out_specs=[pl.BlockSpec((TM, Cp), lambda i: (i, 0)),
                       pl.BlockSpec((8, Cp), lambda i: (i, 0))]),
        compiler_params=pltpu.CompilerParams(
            dimension_semantics=("parallel",),   # no cross-tile state -> megacore OK
            vmem_limit_bytes=vmem_limit),
    )(P, Wm)

    # ---- per-channel scale/shift from the partial sums (tiny, plain JAX) ----
    sp = stats_partial.reshape(n_tiles, 8, Cp)
    sum1 = sp[:, 0, :].sum(axis=0)
    sum2 = sp[:, 1, :].sum(axis=0)
    cnt = jnp.float32(M)                         # zero-padded P rows contribute 0
    mean = sum1 / cnt
    var = jnp.maximum(sum2 / cnt - mean * mean, 0.0)  # guard f32 cancellation
    gamma_p = jnp.pad(gamma.astype(jnp.float32), (0, Cp - Cout))
    beta_p = jnp.pad(beta.astype(jnp.float32), (0, Cp - Cout))
    scale = gamma_p * lax.rsqrt(var + EPS)
    shift = beta_p - mean * scale
    ss = jnp.pad(jnp.stack([scale, shift], axis=0), ((0, 6), (0, 0)))  # (8, Cp)

    # ---- pass 2: normalize + affine + LeakyReLU (bigger tiles, parallel) ----
    out_flat = pl.pallas_call(
        _bn_lrelu_kernel,
        out_shape=jax.ShapeDtypeStruct((Mp, Cp), jnp.float32),
        grid_spec=pltpu.PrefetchScalarGridSpec(
            num_scalar_prefetch=0,
            grid=(n_tiles2,),
            in_specs=[pl.BlockSpec((TM2, Cp), lambda i: (i, 0)),
                      pl.BlockSpec((8, Cp), lambda i: (0, 0))],
            out_specs=pl.BlockSpec((TM2, Cp), lambda i: (i, 0))),
        compiler_params=pltpu.CompilerParams(
            dimension_semantics=("parallel",),
            vmem_limit_bytes=vmem_limit),
    )(y_flat, ss)

    # (Mp, Cp) -> (N, Do, Ho, Wo, Cout); optionally keep channels-last when
    # chaining Blocks to avoid the extra HBM round-trip of the transpose.
    out = out_flat[:M, :Cout].reshape(N, Do, Ho, Wo, Cout)
    if channels_last:
        return out
    return jnp.transpose(out, (0, 4, 1, 2, 3))   # NCDHW, matching the PyTorch module


# ---------------------------------------------------------------------------
# Pure-JAX reference (for correctness check)
# ---------------------------------------------------------------------------
def block_reference(x, w, b, gamma, beta, stride=1, matmul_dtype=jnp.float32):
    Cout = w.shape[0]
    y = lax.conv_general_dilated(
        x.astype(matmul_dtype), w.astype(matmul_dtype),
        window_strides=(stride,) * 3, padding=((1, 1),) * 3,
        dimension_numbers=("NCDHW", "OIDHW", "NCDHW"),
        preferred_element_type=jnp.float32)
    y = y + b.reshape(1, Cout, 1, 1, 1)
    mean = y.mean(axis=(0, 2, 3, 4), keepdims=True)
    var = ((y - mean) ** 2).mean(axis=(0, 2, 3, 4), keepdims=True)
    y_hat = (y - mean) * lax.rsqrt(var + EPS)
    z = gamma.reshape(1, Cout, 1, 1, 1) * y_hat + beta.reshape(1, Cout, 1, 1, 1)
    return jnp.where(z > 0, z, NEG_SLOPE * z)


if __name__ == "__main__":
    key = jax.random.PRNGKey(0)
    kx, kw, kb, kg, kbe = jax.random.split(key, 5)

    N, Cin, Cout = 2, 4, 8
    D = H = W = 10          # stride 1 -> M = 2000 (exercises padding / multi-tile)

    x = jax.random.normal(kx, (N, Cin, D, H, W), jnp.float32)

    # deterministic PyTorch-like init; non-trivial gamma/beta to exercise affine
    fan_in = Cin * 27
    bound = 1.0 / float(fan_in) ** 0.5
    w = jax.random.uniform(kw, (Cout, Cin, 3, 3, 3), jnp.float32, -bound, bound)
    b = jax.random.uniform(kb, (Cout,), jnp.float32, -bound, bound)
    gamma = 1.0 + 0.1 * jax.random.normal(kg, (Cout,), jnp.float32)
    beta = 0.1 * jax.random.normal(kbe, (Cout,), jnp.float32)

    for stride in (1, 2):
        out = jax.block_until_ready(
            block_forward(x, w, b, gamma, beta, stride=stride))

        # checks: bf16-operand reference (tight-ish; Y is stored bf16 between
        # passes, so tolerance is a little looser than a pure f32-Y pipeline)
        ref_bf16 = block_reference(x, w, b, gamma, beta, stride=stride,
                                   matmul_dtype=jnp.bfloat16)
        # looser check against the full-f32 (PyTorch-semantics) reference
        ref_f32 = block_reference(x, w, b, gamma, beta, stride=stride,
                                  matmul_dtype=jnp.float32)

        assert out.shape == ref_f32.shape, (stride, out.shape, ref_f32.shape)
        assert jnp.allclose(out, ref_bf16, rtol=2e-2, atol=2e-2), (
            stride, float(jnp.max(jnp.abs(out - ref_bf16))))
        assert jnp.allclose(out, ref_f32, rtol=7e-2, atol=7e-2), (
            stride, float(jnp.max(jnp.abs(out - ref_f32))))

    print("KERNEL_OK")
</pallas_src>

<mosaic_0001>
module attributes {stable_mosaic.version = 11 : i64} {
  func.func @_conv_stats_kernel(%arg0: i32, %arg1: memref<512x128xbf16, #tpu.memory_space<vmem>>, %arg2: memref<128x128xbf16, #tpu.memory_space<vmem>>, %arg3: memref<512x128xbf16, #tpu.memory_space<vmem>>, %arg4: memref<8x128xf32, #tpu.memory_space<vmem>>) attributes {dimension_semantics = [#tpu.dimension_semantics<parallel>], iteration_bounds = array<i64: 4>, scalar_prefetch = 0 : i64, scratch_operands = 0 : i64, tpu.core_type = #tpu.core_type<tc>, window_params = [{transform_indices = @transform_0, window_bounds = array<i64: 512, 128>}, {pipeline_mode = #tpu.pipeline_mode<synchronous>, transform_indices = @transform_1, window_bounds = array<i64: 128, 128>}, {transform_indices = @transform_2, window_bounds = array<i64: 512, 128>}, {transform_indices = @transform_3, window_bounds = array<i64: 8, 128>}]} {
    %c0 = arith.constant 0 : index
    %c0_0 = arith.constant 0 : index
    %0 = vector.load %arg1[%c0, %c0_0] : memref<512x128xbf16, #tpu.memory_space<vmem>>, vector<512x128xbf16>
    %c0_1 = arith.constant 0 : index
    %c0_2 = arith.constant 0 : index
    %1 = vector.load %arg2[%c0_1, %c0_2] : memref<128x128xbf16, #tpu.memory_space<vmem>>, vector<128x128xbf16>
    %cst = arith.constant dense<0.000000e+00> : vector<512x128xf32>
    %2 = tpu.matmul %0, %1, %cst {dimension_numbers = #tpu.dot_dimension_numbers<[1], [0], [0], [1], [0, 0, 1, 1], [], []>} : vector<512x128xbf16>, vector<128x128xbf16>, vector<512x128xf32> -> vector<512x128xf32>
    %3 = arith.truncf %2 : vector<512x128xf32> to vector<512x128xbf16>
    %c0_3 = arith.constant 0 : index
    %c0_4 = arith.constant 0 : index
    %4 = vector.load %arg3[%c0_3, %c0_4] : memref<512x128xbf16, #tpu.memory_space<vmem>>, vector<512x128xbf16>
    tpu.vector_store %arg3[%c0_3, %c0_4], %3 {strides = array<i32>} : memref<512x128xbf16, #tpu.memory_space<vmem>>, vector<512x128xbf16>,
    %cst_5 = arith.constant 0.000000e+00 : f32
    %5 = vector.broadcast %cst_5 : f32 to vector<8x128xf32>
    %c0_6 = arith.constant 0 : index
    %c0_7 = arith.constant 0 : index
    %6 = vector.load %arg4[%c0_6, %c0_7] : memref<8x128xf32, #tpu.memory_space<vmem>>, vector<8x128xf32>
    tpu.vector_store %arg4[%c0_6, %c0_7], %5 {strides = array<i32>} : memref<8x128xf32, #tpu.memory_space<vmem>>, vector<8x128xf32>,
    %cst_8 = arith.constant dense<0.000000e+00> : vector<128xf32>
    %7 = vector.multi_reduction <add>, %2, %cst_8 [0] : vector<512x128xf32> to vector<128xf32>
    %8 = vector.shape_cast %7 : vector<128xf32> to vector<1x128xf32>
    %c0_9 = arith.constant 0 : index
    %c0_10 = arith.constant 0 : index
    %9 = vector.load %arg4[%c0_9, %c0_10] : memref<8x128xf32, #tpu.memory_space<vmem>>, vector<1x128xf32>
    tpu.vector_store %arg4[%c0_9, %c0_10], %8 {strides = array<i32>} : memref<8x128xf32, #tpu.memory_space<vmem>>, vector<1x128xf32>,
    %10 = arith.mulf %2, %2 : vector<512x128xf32>
    %cst_11 = arith.constant dense<0.000000e+00> : vector<128xf32>
    %11 = vector.multi_reduction <add>, %10, %cst_11 [0] : vector<512x128xf32> to vector<128xf32>
    %12 = vector.shape_cast %11 : vector<128xf32> to vector<1x128xf32>
    %c1 = arith.constant 1 : index
    %c0_12 = arith.constant 0 : index
    %13 = vector.load %arg4[%c1, %c0_12] : memref<8x128xf32, #tpu.memory_space<vmem>>, vector<1x128xf32>
    tpu.vector_store %arg4[%c1, %c0_12], %12 {strides = array<i32>} : memref<8x128xf32, #tpu.memory_space<vmem>>, vector<1x128xf32>,
    return
  }
  func.func @transform_0(%arg0: i32) -> (i32, i32) {
    %c0_i32 = arith.constant 0 : i32
    %c0_i32_0 = arith.constant 0 : i32
    return %arg0, %c0_i32 : i32, i32
  }
  func.func @transform_1(%arg0: i32) -> (i32, i32) {
    %c0_i32 = arith.constant 0 : i32
    %c0_i32_0 = arith.constant 0 : i32
    %c0_i32_1 = arith.constant 0 : i32
    return %c0_i32, %c0_i32_0 : i32, i32
  }
  func.func @transform_2(%arg0: i32) -> (i32, i32) {
    %c0_i32 = arith.constant 0 : i32
    %c0_i32_0 = arith.constant 0 : i32
    return %arg0, %c0_i32 : i32, i32
  }
  func.func @transform_3(%arg0: i32) -> (i32, i32) {
    %c0_i32 = arith.constant 0 : i32
    %c0_i32_0 = arith.constant 0 : i32
    return %arg0, %c0_i32 : i32, i32
  }
}

module attributes {stable_mosaic.version = 11 : i64} {
  func.func @_bn_lrelu_kernel(%arg0: i32, %arg1: memref<2048x128xbf16, #tpu.memory_space<vmem>>, %arg2: memref<8x128xf32, #tpu.memory_space<vmem>>, %arg3: memref<2048x128xf32, #tpu.memory_space<vmem>>) attributes {dimension_semantics = [#tpu.dimension_semantics<parallel>], iteration_bounds = array<i64: 1>, scalar_prefetch = 0 : i64, scratch_operands = 0 : i64, tpu.core_type = #tpu.core_type<tc>, window_params = [{transform_indices = @transform_0, window_bounds = array<i64: 2048, 128>}, {pipeline_mode = #tpu.pipeline_mode<synchronous>, transform_indices = @transform_1, window_bounds = array<i64: 8, 128>}, {transform_indices = @transform_2, window_bounds = array<i64: 2048, 128>}]} {
    %c0 = arith.constant 0 : index
    %c0_0 = arith.constant 0 : index
    %0 = vector.load %arg1[%c0, %c0_0] : memref<2048x128xbf16, #tpu.memory_space<vmem>>, vector<2048x128xbf16>
    %1 = arith.extf %0 : vector<2048x128xbf16> to vector<2048x128xf32>
    %c0_1 = arith.constant 0 : index
    %c0_2 = arith.constant 0 : index
    %2 = vector.load %arg2[%c0_1, %c0_2] : memref<8x128xf32, #tpu.memory_space<vmem>>, vector<1x128xf32>
    %3 = vector.broadcast %2 : vector<1x128xf32> to vector<2048x128xf32>
    %4 = arith.mulf %1, %3 : vector<2048x128xf32>
    %c1 = arith.constant 1 : index
    %c0_3 = arith.constant 0 : index
    %5 = vector.load %arg2[%c1, %c0_3] : memref<8x128xf32, #tpu.memory_space<vmem>>, vector<1x128xf32>
    %6 = vector.broadcast %5 : vector<1x128xf32> to vector<2048x128xf32>
    %7 = arith.addf %4, %6 : vector<2048x128xf32>
    %cst = arith.constant 0.000000e+00 : f32
    %8 = vector.broadcast %cst : f32 to vector<2048x128xf32>
    %9 = arith.cmpf ogt, %7, %8 : vector<2048x128xf32>
    %cst_4 = arith.constant 0.00999999977 : f32
    %10 = vector.broadcast %cst_4 : f32 to vector<2048x128xf32>
    %11 = arith.mulf %10, %7 : vector<2048x128xf32>
    %12 = arith.select %9, %7, %11 : vector<2048x128xi1>, vector<2048x128xf32>
    %c0_5 = arith.constant 0 : index
    %c0_6 = arith.constant 0 : index
    %13 = vector.load %arg3[%c0_5, %c0_6] : memref<2048x128xf32, #tpu.memory_space<vmem>>, vector<2048x128xf32>
    tpu.vector_store %arg3[%c0_5, %c0_6], %12 {strides = array<i32>} : memref<2048x128xf32, #tpu.memory_space<vmem>>, vector<2048x128xf32>,
    return
  }
  func.func @transform_0(%arg0: i32) -> (i32, i32) {
    %c0_i32 = arith.constant 0 : i32
    %c0_i32_0 = arith.constant 0 : i32
    return %arg0, %c0_i32 : i32, i32
  }
  func.func @transform_1(%arg0: i32) -> (i32, i32) {
    %c0_i32 = arith.constant 0 : i32
    %c0_i32_0 = arith.constant 0 : i32
    %c0_i32_1 = arith.constant 0 : i32
    return %c0_i32, %c0_i32_0 : i32, i32
  }
  func.func @transform_2(%arg0: i32) -> (i32, i32) {
    %c0_i32 = arith.constant 0 : i32
    %c0_i32_0 = arith.constant 0 : i32
    return %arg0, %c0_i32 : i32, i32
  }
}

</mosaic_0001>

<llo_original>
// kernel: block_forward.2
$region0: #{block_forward.2}
  #allocation0 [shape = 'u32[]', space=smem, size = 0x4, offset = 0x4, fixed_abs, tag = 'smem constant byte address 0x4 - core index']
  #allocation1 [shape = 'u32[144,128]{1,0:T(1,128)}', space=vmem, size = 0x12000, scoped, tag = 'internal scratch']
  %s0 = inlined_call_operand.vmem [shape: bf16[2048,128], index: 0, kind: input, shape index: {}]
  %s1 = inlined_call_operand.vmem [shape: bf16[128,128], index: 1, kind: input, shape index: {}]
  %s2 = inlined_call_operand.vmem [shape: bf16[2048,128], index: 2, kind: output, shape index: {0}]
  %s3 = inlined_call_operand.vmem [shape: f32[32,128], index: 3, kind: output, shape index: {1}]
  %4 = xla_tuple %s2, %s3
  %s5 = sld [smem:[#allocation0]]
  $region49: #{block_forward.2} parent=0
    _
  %s7 = ssub.s32 1, %s5
  %s8 = scalar_select 0, %s7, %s5
  loop: start=0, step=1, limit=6
  $region2: #{block_forward.2} parent=0 // loop_pre_header
    _
  $region3: #{block_forward.2} parent=0 // loop_header
    %s10 = sphi 0, %s14
    %p11 = scmp.ge.s32.totalorder %s10, 6
    %s20 = sphi 0, %s22
    %s23 = sphi 0, %s20
    %s24 = sphi 0, %s23
    %s40 = sphi 0, %s24
    %s44 = sphi 0, %s44
    %s46 = sphi 0, %s44
    %s47 = sphi 0, %s46
    %s61 = sphi 0, %s47
    %s67 = sphi 0, %s69
    %s70 = sphi 0, %s67
    %s71 = sphi 0, %s70
    %s87 = sphi 0, %s71
    %s93 = sphi 0, %s95
    %s96 = sphi 0, %s93
    %s97 = sphi 0, %s96
    %s113 = sphi 0, %s97
  $region4: #{block_forward.2} parent=0 // loop_header_branch
    %13 = sbr.rel (%p11) target = $region8
  $region5: #{block_forward.2} parent=0 // loop_body
    %s15 = ssub.s32 %s10, 1
    %s16 = ssub.s32 %s10, 2
    %s17 = sadd.s32 %s10, 1
    %s18 = ssub.s32 %s10, %s17
    %p19 = scmp.eq.s32.totalorder %s18, 0
    %s21 = sadd.s32 %s20, 1
    %s22 = scalar_select %p19, %s20, %s21
    %p25 = pneg %p19
    %p26 = scmp.eq.s32.totalorder %s10, 3
    %p27 = por %p25, %p26
    %p28 = scmp.ne.s32.totalorder %s20, %s23
    %p29 = scmp.eq.s32.totalorder %s10, 0
    %p30 = por %p28, %p29
    %p31 = scmp.ne.s32.totalorder %s20, %s23
    %p32 = scmp.eq.s32.totalorder %s15, 3
    %p33 = por %p31, %p32
    %p34 = scmp.ne.s32.totalorder %s23, %s24
    %p35 = scmp.eq.s32.totalorder %s15, 0
    %p36 = por %p34, %p35
    %p37 = scmp.ne.s32.totalorder %s23, %s24
    %p38 = scmp.eq.s32.totalorder %s16, 3
    %p39 = por %p37, %p38
    %p41 = scmp.ne.s32.totalorder %s24, %s40
    %p42 = scmp.eq.s32.totalorder %s16, 0
    %p43 = por %p41, %p42
    %s45 = sadd.s32 %s44, 1
    %p48 = scmp.eq.s32.totalorder %s10, 3
    %p49 = scmp.ne.s32.totalorder %s44, %s46
    %p50 = scmp.eq.s32.totalorder %s10, 0
    %p51 = por %p49, %p50
    %p52 = scmp.ne.s32.totalorder %s44, %s46
    %p53 = scmp.eq.s32.totalorder %s15, 3
    %p54 = por %p52, %p53
    %p55 = scmp.ne.s32.totalorder %s46, %s47
    %p56 = scmp.eq.s32.totalorder %s15, 0
    %p57 = por %p55, %p56
    %p58 = scmp.ne.s32.totalorder %s46, %s47
    %p59 = scmp.eq.s32.totalorder %s16, 3
    %p60 = por %p58, %p59
    %p62 = scmp.ne.s32.totalorder %s47, %s61
    %p63 = scmp.eq.s32.totalorder %s16, 0
    %p64 = por %p62, %p63
    %s65 = ssub.s32 %s10, %s17
    %p66 = scmp.eq.s32.totalorder %s65, 0
    %s68 = sadd.s32 %s67, 1
    %s69 = scalar_select %p66, %s67, %s68
    %p72 = pneg %p66
    %p73 = scmp.eq.s32.totalorder %s10, 3
    %p74 = por %p72, %p73
    %p75 = scmp.ne.s32.totalorder %s67, %s70
    %p76 = scmp.eq.s32.totalorder %s10, 0
    %p77 = por %p75, %p76
    %p78 = scmp.ne.s32.totalorder %s67, %s70
    %p79 = scmp.eq.s32.totalorder %s15, 3
    %p80 = por %p78, %p79
    %p81 = scmp.ne.s32.totalorder %s70, %s71
    %p82 = scmp.eq.s32.totalorder %s15, 0
    %p83 = por %p81, %p82
    %p84 = scmp.ne.s32.totalorder %s70, %s71
    %p85 = scmp.eq.s32.totalorder %s16, 3
    %p86 = por %p84, %p85
    %p88 = scmp.ne.s32.totalorder %s71, %s87
    %p89 = scmp.eq.s32.totalorder %s16, 0
    %p90 = por %p88, %p89
    %s91 = ssub.s32 %s10, %s17
    %p92 = scmp.eq.s32.totalorder %s91, 0
    %s94 = sadd.s32 %s93, 1
    %s95 = scalar_select %p92, %s93, %s94
    %p98 = pneg %p92
    %p99 = scmp.eq.s32.totalorder %s10, 3
    %p100 = por %p98, %p99
    %p101 = scmp.ne.s32.totalorder %s93, %s96
    %p102 = scmp.eq.s32.totalorder %s10, 0
    %p103 = por %p101, %p102
    %p104 = scmp.ne.s32.totalorder %s93, %s96
    %p105 = scmp.eq.s32.totalorder %s15, 3
    %p106 = por %p104, %p105
    %p107 = scmp.ne.s32.totalorder %s96, %s97
    %p108 = scmp.eq.s32.totalorder %s15, 0
    %p109 = por %p107, %p108
    %p110 = scmp.ne.s32.totalorder %s96, %s97
    %p111 = scmp.eq.s32.totalorder %s16, 3
    %p112 = por %p110, %p111
    %p114 = scmp.ne.s32.totalorder %s97, %s113
    %p115 = scmp.eq.s32.totalorder %s16, 0
    %p116 = por %p114, %p115
    %p117 = scmp.le.s32.totalorder 1, %s10
    %p118 = scmp.lt.s32.totalorder %s10, 5
    %p119 = pnand %p117, %p118
    %p120 = pneg %p119
    // Predicated region
    $region9: #{block_forward.2} parent=5 // pred_check
      _
    $region10: #{block_forward.2} parent=5 // pred_check_branch
      %122 = sbr.rel (%p119) target = $region12
    $region11: #{block_forward.2} parent=5 // pred_region
      %s123 = ssub.s32 %s10, 1
      // Predicated region
      $region13: #{block_forward.2} parent=11 // pred_check
        %p124 = pneg %p57
      $region14: #{block_forward.2} parent=11 // pred_check_branch
        %126 = sbr.rel (%p124) target = $region16
      $region15: #{block_forward.2} parent=11 // pred_region
        _
      $region16: #{block_forward.2} parent=11 // pred_fallthru
        _
    $region12: #{block_forward.2} parent=5 // pred_fallthru
      _
    %p127 = scmp.lt.s32.totalorder %s10, 4
    // Predicated region
    $region17: #{block_forward.2} parent=5 // pred_check
      %p128 = pneg %p127
    $region18: #{block_forward.2} parent=5 // pred_check_branch
      %130 = sbr.rel (%p128) target = $region20
    $region19: #{block_forward.2} parent=5 // pred_region
      // Predicated region
      $region21: #{block_forward.2} parent=19 // pred_check
        %p131 = pneg %p30
      $region22: #{block_forward.2} parent=19 // pred_check_branch
        %133 = sbr.rel (%p131) target = $region24
      $region23: #{block_forward.2} parent=19 // pred_region
        %s134 = smul.u32 64, %s10
        %p135 = scmp.lt.s32.totalorder %s134, 255
        %s136 = scalar_select %p135, %s134, 255
        %s137 = smul.addr %s136, 4
        %s138 = scalar_lea.vmem %s0, %s137
        %s139 = smul.u32 64, %s10
      $region24: #{block_forward.2} parent=19 // pred_fallthru
        _
    $region20: #{block_forward.2} parent=5 // pred_fallthru
      _
    %p140 = scmp.le.s32.totalorder 1, %s10
    %p141 = scmp.lt.s32.totalorder %s10, 5
    %p142 = pnand %p140, %p141
    %p143 = pneg %p142
    // Predicated region
    $region25: #{block_forward.2} parent=5 // pred_check
      _
    $region26: #{block_forward.2} parent=5 // pred_check_branch
      %145 = sbr.rel (%p142) target = $region28
    $region27: #{block_forward.2} parent=5 // pred_region
      %s146 = ssub.s32 %s10, 1
      %s147 = smul.u32 64, %s15
      %p148 = scmp.lt.s32.totalorder %s147, 255
      %s149 = scalar_select %p148, %s147, 255
      %s150 = smul.addr %s149, 4
      %s151 = scalar_lea.vmem %s0, %s150
      %p152 = pneg %p36
      %p153 = pneg %p33
      %p154 = pneg %p57
      %p155 = pneg %p54
      %p156 = pneg %p83
      %p157 = pneg %p80
      %s158 = smul.u32 64, %s15
      %p159 = scmp.lt.s32.totalorder %s158, 255
      %s160 = scalar_select %p159, %s158, 255
      %s161 = smul.addr %s160, 4
      %s162 = scalar_lea.vmem %s2, %s161
      %p163 = pneg %p109
      %p164 = pneg %p106
      %p165 = scmp.lt.s32.totalorder %s15, 3
      %s166 = scalar_select %p165, %s15, 3
      %s167 = smul.addr %s166, 8
      %s168 = scalar_lea.vmem %s3, %s167
      %s169 = smul.u32 64, %s15
      %p170 = scmp.lt.s32.totalorder %s169, 255
      %s171 = scalar_select %p170, %s169, 255
      %s172 = smul.addr %s171, 4
      %s173 = scalar_lea.vmem %s0, %s172
      %s174 = smul.u32 64, %s15
      %s175 = smul.u32 64, %s15
      %p176 = scmp.lt.s32.totalorder %s175, 255
      %s177 = scalar_select %p176, %s175, 255
      %s178 = smul.addr %s177, 4
      %s179 = scalar_lea.vmem %s2, %s178
      %s180 = smul.u32 64, %s15
      %p181 = scmp.lt.s32.totalorder %s15, 3
      %s182 = scalar_select %p181, %s15, 3
      %s183 = smul.addr %s182, 8
      %s184 = scalar_lea.vmem %s3, %s183
      %v186 = vld [vmem:[%s173] sm:$0xf]
      %v187 = vld [vmem:[%s173 + $0x4] sm:$0xf]
      %v188 = vld [vmem:[%s173 + $0x8] sm:$0xf]
      %v189 = vld [vmem:[%s173 + $0xc] sm:$0xf]
      %v190 = vld [vmem:[%s173 + $0x10] sm:$0xf]
      %v191 = vld [vmem:[%s173 + $0x14] sm:$0xf]
      %v192 = vld [vmem:[%s173 + $0x18] sm:$0xf]
      %v193 = vld [vmem:[%s173 + $0x1c] sm:$0xf]
      %v194 = vld [vmem:[%s173 + $0x20] sm:$0xf]
      %v195 = vld [vmem:[%s173 + $0x24] sm:$0xf]
      %v196 = vld [vmem:[%s173 + $0x28] sm:$0xf]
      %v197 = vld [vmem:[%s173 + $0x2c] sm:$0xf]
      %v198 = vld [vmem:[%s173 + $0x30] sm:$0xf]
      %v199 = vld [vmem:[%s173 + $0x34] sm:$0xf]
      %v200 = vld [vmem:[%s173 + $0x38] sm:$0xf]
      %v201 = vld [vmem:[%s173 + $0x3c] sm:$0xf]
      %v202 = vld [vmem:[%s173 + $0x40] sm:$0xf]
      %v203 = vld [vmem:[%s173 + $0x44] sm:$0xf]
      %v204 = vld [vmem:[%s173 + $0x48] sm:$0xf]
      %v205 = vld [vmem:[%s173 + $0x4c] sm:$0xf]
      %v206 = vld [vmem:[%s173 + $0x50] sm:$0xf]
      %v207 = vld [vmem:[%s173 + $0x54] sm:$0xf]
      %v208 = vld [vmem:[%s173 + $0x58] sm:$0xf]
      %v209 = vld [vmem:[%s173 + $0x5c] sm:$0xf]
      %v210 = vld [vmem:[%s173 + $0x60] sm:$0xf]
      %v211 = vld [vmem:[%s173 + $0x64] sm:$0xf]
      %v212 = vld [vmem:[%s173 + $0x68] sm:$0xf]
      %v213 = vld [vmem:[%s173 + $0x6c] sm:$0xf]
      %v214 = vld [vmem:[%s173 + $0x70] sm:$0xf]
      %v215 = vld [vmem:[%s173 + $0x74] sm:$0xf]
      %v216 = vld [vmem:[%s173 + $0x78] sm:$0xf]
      %v217 = vld [vmem:[%s173 + $0x7c] sm:$0xf]
      %v218 = vld [vmem:[%s173 + $0x80] sm:$0xf]
      %v219 = vld [vmem:[%s173 + $0x84] sm:$0xf]
      %v220 = vld [vmem:[%s173 + $0x88] sm:$0xf]
      %v221 = vld [vmem:[%s173 + $0x8c] sm:$0xf]
      %v222 = vld [vmem:[%s173 + $0x90] sm:$0xf]
      %v223 = vld [vmem:[%s173 + $0x94] sm:$0xf]
      %v224 = vld [vmem:[%s173 + $0x98] sm:$0xf]
      %v225 = vld [vmem:[%s173 + $0x9c] sm:$0xf]
      %v226 = vld [vmem:[%s173 + $0xa0] sm:$0xf]
      %v227 = vld [vmem:[%s173 + $0xa4] sm:$0xf]
      %v228 = vld [vmem:[%s173 + $0xa8] sm:$0xf]
      %v229 = vld [vmem:[%s173 + $0xac] sm:$0xf]
      %v230 = vld [vmem:[%s173 + $0xb0] sm:$0xf]
      %v231 = vld [vmem:[%s173 + $0xb4] sm:$0xf]
      %v232 = vld [vmem:[%s173 + $0xb8] sm:$0xf]
      %v233 = vld [vmem:[%s173 + $0xbc] sm:$0xf]
      %v234 = vld [vmem:[%s173 + $0xc0] sm:$0xf]
      %v235 = vld [vmem:[%s173 + $0xc4] sm:$0xf]
      %v236 = vld [vmem:[%s173 + $0xc8] sm:$0xf]
      %v237 = vld [vmem:[%s173 + $0xcc] sm:$0xf]
      %v238 = vld [vmem:[%s173 + $0xd0] sm:$0xf]
      %v239 = vld [vmem:[%s173 + $0xd4] sm:$0xf]
      %v240 = vld [vmem:[%s173 + $0xd8] sm:$0xf]
      %v241 = vld [vmem:[%s173 + $0xdc] sm:$0xf]
      %v242 = vld [vmem:[%s173 + $0xe0] sm:$0xf]
      %v243 = vld [vmem:[%s173 + $0xe4] sm:$0xf]
      %v244 = vld [vmem:[%s173 + $0xe8] sm:$0xf]
      %v245 = vld [vmem:[%s173 + $0xec] sm:$0xf]
      %v246 = vld [vmem:[%s173 + $0xf0] sm:$0xf]
      %v247 = vld [vmem:[%s173 + $0xf4] sm:$0xf]
      %v248 = vld [vmem:[%s173 + $0xf8] sm:$0xf]
      %v249 = vld [vmem:[%s173 + $0xfc] sm:$0xf]
      %v250 = vld [vmem:[%s1] sm:$0xf]
      %v251 = vld [vmem:[%s1 + $0x4] sm:$0xf]
      %v252 = vld [vmem:[%s1 + $0x8] sm:$0xf]
      %v253 = vld [vmem:[%s1 + $0xc] sm:$0xf]
      %v254 = vld [vmem:[%s1 + $0x10] sm:$0xf]
      %v255 = vld [vmem:[%s1 + $0x14] sm:$0xf]
      %v256 = vld [vmem:[%s1 + $0x18] sm:$0xf]
      %v257 = vld [vmem:[%s1 + $0x1c] sm:$0xf]
      %v258 = vld [vmem:[%s1 + $0x20] sm:$0xf]
      %v259 = vld [vmem:[%s1 + $0x24] sm:$0xf]
      %v260 = vld [vmem:[%s1 + $0x28] sm:$0xf]
      %v261 = vld [vmem:[%s1 + $0x2c] sm:$0xf]
      %v262 = vld [vmem:[%s1 + $0x30] sm:$0xf]
      %v263 = vld [vmem:[%s1 + $0x34] sm:$0xf]
      %v264 = vld [vmem:[%s1 + $0x38] sm:$0xf]
      %v265 = vld [vmem:[%s1 + $0x3c] sm:$0xf]
      %v330 = vunpack.c.l.b16 %v186
      %v331 = vunpack.c.l.b16 %v187
      %v332 = vunpack.c.l.b16 %v188
      %v333 = vunpack.c.l.b16 %v189
      %v334 = vunpack.c.l.b16 %v190
      %v335 = vunpack.c.l.b16 %v191
      %v336 = vunpack.c.l.b16 %v192
      %v337 = vunpack.c.l.b16 %v193
      %v338 = vunpack.c.l.b16 %v194
      %v339 = vunpack.c.l.b16 %v195
      %v340 = vunpack.c.l.b16 %v196
      %v341 = vunpack.c.l.b16 %v197
      %v342 = vunpack.c.l.b16 %v198
      %v343 = vunpack.c.l.b16 %v199
      %v344 = vunpack.c.l.b16 %v200
      %v345 = vunpack.c.l.b16 %v201
      %v346 = vunpack.c.l.b16 %v202
      %v347 = vunpack.c.l.b16 %v203
      %v348 = vunpack.c.l.b16 %v204
      %v349 = vunpack.c.l.b16 %v205
      %v350 = vunpack.c.l.b16 %v206
      %v351 = vunpack.c.l.b16 %v207
      %v352 = vunpack.c.l.b16 %v208
      %v353 = vunpack.c.l.b16 %v209
      %v354 = vunpack.c.l.b16 %v210
      %v355 = vunpack.c.l.b16 %v211
      %v356 = vunpack.c.l.b16 %v212
      %v357 = vunpack.c.l.b16 %v213
      %v358 = vunpack.c.l.b16 %v214
      %v359 = vunpack.c.l.b16 %v215
      %v360 = vunpack.c.l.b16 %v216
      %v361 = vunpack.c.l.b16 %v217
      %v362 = vunpack.c.l.b16 %v218
      %v363 = vunpack.c.l.b16 %v219
      %v364 = vunpack.c.l.b16 %v220
      %v365 = vunpack.c.l.b16 %v221
      %v366 = vunpack.c.l.b16 %v222
      %v367 = vunpack.c.l.b16 %v223
      %v368 = vunpack.c.l.b16 %v224
      %v369 = vunpack.c.l.b16 %v225
      %v370 = vunpack.c.l.b16 %v226
      %v371 = vunpack.c.l.b16 %v227
      %v372 = vunpack.c.l.b16 %v228
      %v373 = vunpack.c.l.b16 %v229
      %v374 = vunpack.c.l.b16 %v230
      %v375 = vunpack.c.l.b16 %v231
      %v376 = vunpack.c.l.b16 %v232
      %v377 = vunpack.c.l.b16 %v233
      %v378 = vunpack.c.l.b16 %v234
      %v379 = vunpack.c.l.b16 %v235
      %v380 = vunpack.c.l.b16 %v236
      %v381 = vunpack.c.l.b16 %v237
      %v382 = vunpack.c.l.b16 %v238
      %v383 = vunpack.c.l.b16 %v239
      %v384 = vunpack.c.l.b16 %v240
      %v385 = vunpack.c.l.b16 %v241
      %v386 = vunpack.c.l.b16 %v242
      %v387 = vunpack.c.l.b16 %v243
      %v388 = vunpack.c.l.b16 %v244
      %v389 = vunpack.c.l.b16 %v245
      %v390 = vunpack.c.l.b16 %v246
      %v391 = vunpack.c.l.b16 %v247
      %v392 = vunpack.c.l.b16 %v248
      %v393 = vunpack.c.l.b16 %v249
      %v394 = vpack.c.b16 %v331, %v330
      %v395 = vpack.c.b16 %v333, %v332
      %v396 = vpack.c.b16 %v335, %v334
      %v397 = vpack.c.b16 %v337, %v336
      %v398 = vpack.c.b16 %v339, %v338
      %v399 = vpack.c.b16 %v341, %v340
      %v400 = vpack.c.b16 %v343, %v342
      %v401 = vpack.c.b16 %v345, %v344
      %v402 = vpack.c.b16 %v347, %v346
      %v403 = vpack.c.b16 %v349, %v348
      %v404 = vpack.c.b16 %v351, %v350
      %v405 = vpack.c.b16 %v353, %v352
      %v406 = vpack.c.b16 %v355, %v354
      %v407 = vpack.c.b16 %v357, %v356
      %v408 = vpack.c.b16 %v359, %v358
      %v409 = vpack.c.b16 %v361, %v360
      %v410 = vpack.c.b16 %v363, %v362
      %v411 = vpack.c.b16 %v365, %v364
      %v412 = vpack.c.b16 %v367, %v366
      %v413 = vpack.c.b16 %v369, %v368
      %v414 = vpack.c.b16 %v371, %v370
      %v415 = vpack.c.b16 %v373, %v372
      %v416 = vpack.c.b16 %v375, %v374
      %v417 = vpack.c.b16 %v377, %v376
      %v418 = vpack.c.b16 %v379, %v378
      %v419 = vpack.c.b16 %v381, %v380
      %v420 = vpack.c.b16 %v383, %v382
      %v421 = vpack.c.b16 %v385, %v384
      %v422 = vpack.c.b16 %v387, %v386
      %v423 = vpack.c.b16 %v389, %v388
      %v424 = vpack.c.b16 %v391, %v390
      %v425 = vpack.c.b16 %v393, %v392
      %v474 = vunpack.c.l.b16 %v250
      %v475 = vunpack.c.l.b16 %v251
      %v476 = vunpack.c.l.b16 %v252
      %v477 = vunpack.c.l.b16 %v253
      %v478 = vunpack.c.l.b16 %v254
      %v479 = vunpack.c.l.b16 %v255
      %v480 = vunpack.c.l.b16 %v256
      %v481 = vunpack.c.l.b16 %v257
      %v482 = vunpack.c.l.b16 %v258
      %v483 = vunpack.c.l.b16 %v259
      %v484 = vunpack.c.l.b16 %v260
      %v485 = vunpack.c.l.b16 %v261
      %v486 = vunpack.c.l.b16 %v262
      %v487 = vunpack.c.l.b16 %v263
      %v488 = vunpack.c.l.b16 %v264
      %v489 = vunpack.c.l.b16 %v265
      %v490 = vpack.c.b16 %v475, %v474
      %v491 = vpack.c.b16 %v477, %v476
      %v492 = vpack.c.b16 %v479, %v478
      %v493 = vpack.c.b16 %v481, %v480
      %v494 = vpack.c.b16 %v483, %v482
      %v495 = vpack.c.b16 %v485, %v484
      %v496 = vpack.c.b16 %v487, %v486
      %v497 = vpack.c.b16 %v489, %v488
      %506 = vmatprep.subr.bf16.mxu0 0
      %507 = vmatpush1.bf16.msra.mxu0 %v490
      %508 = vmatprep.subr.bf16.mxu0 0
      %509 = vmatpush1.bf16.msra.mxu0 %v491
      %510 = vmatprep.subr.bf16.mxu0 0
      %511 = vmatpush1.bf16.msra.mxu0 %v492
      %512 = vmatprep.subr.bf16.mxu0 0
      %513 = vmatpush1.bf16.msra.mxu0 %v493
      %514 = vmatprep.subr.bf16.mxu0 0
      %515 = vmatpush1.bf16.msra.mxu0 %v494
      %516 = vmatprep.subr.bf16.mxu0 0
      %517 = vmatpush1.bf16.msra.mxu0 %v495
      %518 = vmatprep.subr.bf16.mxu0 0
      %519 = vmatpush1.bf16.msra.mxu0 %v496
      %520 = vmatprep.subr.bf16.mxu0 0
      %521 = vmatpush1.bf16.msra.mxu0 %v497
      %522 = vmatprep.subr.bf16.mxu0 0
      %523 = vmatpush1.bf16.msra.mxu0 0
      %524 = vmatprep.subr.bf16.mxu0 0
      %525 = vmatpush1.bf16.msra.mxu0 0
      %526 = vmatprep.subr.bf16.mxu0 0
      %527 = vmatpush1.bf16.msra.mxu0 0
      %528 = vmatprep.subr.bf16.mxu0 0
      %529 = vmatpush1.bf16.msra.mxu0 0
      %530 = vmatprep.subr.bf16.mxu0 0
      %531 = vmatpush1.bf16.msra.mxu0 0
      %532 = vmatprep.subr.bf16.mxu0 0
      %533 = vmatpush1.bf16.msra.mxu0 0
      %534 = vmatprep.subr.bf16.mxu0 0
      %535 = vmatpush1.bf16.msra.mxu0 0
      %536 = vmatprep.subr.bf16.mxu0 0
      %537 = vmatpush1.bf16.msra.mxu0 0
      %538 = vmatprep.mubr.bf16.mxu0 0
      %539 = vmatmul.mubr.bf16.gmra.mrb[0].mxu0 %v394
      %v540 = vpop.f32.mrb[0].mxu0
      %v541 = vadd.f32 0.0, %v540
      %v542 = vpop.f32.mrb[0].mxu0
      %v543 = vpop.f32.mrb[0].mxu0
      %v544 = vadd.f32 0.0, %v543
      %v545 = vpop.f32.mrb[0].mxu0
      %546 = vmatprep.mubr.bf16.mxu0 0
      %547 = vmatmul.mubr.bf16.gmra.mrb[0].mxu0 %v395
      %v548 = vpop.f32.mrb[0].mxu0
      %v549 = vadd.f32 0.0, %v548
      %v550 = vpop.f32.mrb[0].mxu0
      %v551 = vpop.f32.mrb[0].mxu0
      %v552 = vadd.f32 0.0, %v551
      %v553 = vpop.f32.mrb[0].mxu0
      %554 = vmatprep.mubr.bf16.mxu0 0
      %555 = vmatmul.mubr.bf16.gmra.mrb[0].mxu0 %v396
      %v556 = vpop.f32.mrb[0].mxu0
      %v557 = vadd.f32 0.0, %v556
      %v558 = vpop.f32.mrb[0].mxu0
      %v559 = vpop.f32.mrb[0].mxu0
      %v560 = vadd.f32 0.0, %v559
      %v561 = vpop.f32.mrb[0].mxu0
      %562 = vmatprep.mubr.bf16.mxu0 0
      %563 = vmatmul.mubr.bf16.gmra.mrb[0].mxu0 %v397
      %v564 = vpop.f32.mrb[0].mxu0
      %v565 = vadd.f32 0.0, %v564
      %v566 = vpop.f32.mrb[0].mxu0
      %v567 = vpop.f32.mrb[0].mxu0
      %v568 = vadd.f32 0.0, %v567
      %v569 = vpop.f32.mrb[0].mxu0
      %570 = vmatprep.mubr.bf16.mxu0 0
      %571 = vmatmul.mubr.bf16.gmra.mrb[0].mxu0 %v398
      %v572 = vpop.f32.mrb[0].mxu0
      %v573 = vadd.f32 0.0, %v572
      %v574 = vpop.f32.mrb[0].mxu0
      %v575 = vpop.f32.mrb[0].mxu0
      %v576 = vadd.f32 0.0, %v575
      %v577 = vpop.f32.mrb[0].mxu0
      %578 = vmatprep.mubr.bf16.mxu0 0
      %579 = vmatmul.mubr.bf16.gmra.mrb[0].mxu0 %v399
      %v580 = vpop.f32.mrb[0].mxu0
      %v581 = vadd.f32 0.0, %v580
      %v582 = vpop.f32.mrb[0].mxu0
      %v583 = vpop.f32.mrb[0].mxu0
      %v584 = vadd.f32 0.0, %v583
      %v585 = vpop.f32.mrb[0].mxu0
      %586 = vmatprep.mubr.bf16.mxu0 0
      %587 = vmatmul.mubr.bf16.gmra.mrb[0].mxu0 %v400
      %v588 = vpop.f32.mrb[0].mxu0
      %v589 = vadd.f32 0.0, %v588
      %v590 = vpop.f32.mrb[0].mxu0
      %v591 = vpop.f32.mrb[0].mxu0
      %v592 = vadd.f32 0.0, %v591
      %v593 = vpop.f32.mrb[0].mxu0
      %594 = vmatprep.mubr.bf16.mxu0 0
      %595 = vmatmul.mubr.bf16.gmra.mrb[0].mxu0 %v401
      %v596 = vpop.f32.mrb[0].mxu0
      %v597 = vadd.f32 0.0, %v596
      %v598 = vpop.f32.mrb[0].mxu0
      %v599 = vpop.f32.mrb[0].mxu0
      %v600 = vadd.f32 0.0, %v599
      %v601 = vpop.f32.mrb[0].mxu0
      %602 = vmatprep.mubr.bf16.mxu0 0
      %603 = vmatmul.mubr.bf16.gmra.mrb[0].mxu0 %v402
      %v604 = vpop.f32.mrb[0].mxu0
      %v605 = vadd.f32 0.0, %v604
      %v606 = vpop.f32.mrb[0].mxu0
      %v607 = vpop.f32.mrb[0].mxu0
      %v608 = vadd.f32 0.0, %v607
      %v609 = vpop.f32.mrb[0].mxu0
      %610 = vmatprep.mubr.bf16.mxu0 0
      %611 = vmatmul.mubr.bf16.gmra.mrb[0].mxu0 %v403
      %v612 = vpop.f32.mrb[0].mxu0
      %v613 = vadd.f32 0.0, %v612
      %v614 = vpop.f32.mrb[0].mxu0
      %v615 = vpop.f32.mrb[0].mxu0
      %v616 = vadd.f32 0.0, %v615
      %v617 = vpop.f32.mrb[0].mxu0
      %618 = vmatprep.mubr.bf16.mxu0 0
      %619 = vmatmul.mubr.bf16.gmra.mrb[0].mxu0 %v404
      %v620 = vpop.f32.mrb[0].mxu0
      %v621 = vadd.f32 0.0, %v620
      %v622 = vpop.f32.mrb[0].mxu0
      %v623 = vpop.f32.mrb[0].mxu0
      %v624 = vadd.f32 0.0, %v623
      %v625 = vpop.f32.mrb[0].mxu0
      %626 = vmatprep.mubr.bf16.mxu0 0
      %627 = vmatmul.mubr.bf16.gmra.mrb[0].mxu0 %v405
      %v628 = vpop.f32.mrb[0].mxu0
      %v629 = vadd.f32 0.0, %v628
      %v630 = vpop.f32.mrb[0].mxu0
      %v631 = vpop.f32.mrb[0].mxu0
      %v632 = vadd.f32 0.0, %v631
      %v633 = vpop.f32.mrb[0].mxu0
      %634 = vmatprep.mubr.bf16.mxu0 0
      %635 = vmatmul.mubr.bf16.gmra.mrb[0].mxu0 %v406
      %v636 = vpop.f32.mrb[0].mxu0
      %v637 = vadd.f32 0.0, %v636
      %v638 = vpop.f32.mrb[0].mxu0
      %v639 = vpop.f32.mrb[0].mxu0
      %v640 = vadd.f32 0.0, %v639
      %v641 = vpop.f32.mrb[0].mxu0
      %642 = vmatprep.mubr.bf16.mxu0 0
      %643 = vmatmul.mubr.bf16.gmra.mrb[0].mxu0 %v407
      %v644 = vpop.f32.mrb[0].mxu0
      %v645 = vadd.f32 0.0, %v644
      %v646 = vpop.f32.mrb[0].mxu0
      %v647 = vpop.f32.mrb[0].mxu0
      %v648 = vadd.f32 0.0, %v647
      %v649 = vpop.f32.mrb[0].mxu0
      %650 = vmatprep.mubr.bf16.mxu0 0
      %651 = vmatmul.mubr.bf16.gmra.mrb[0].mxu0 %v408
      %v652 = vpop.f32.mrb[0].mxu0
      %v653 = vadd.f32 0.0, %v652
      %v654 = vpop.f32.mrb[0].mxu0
      %v655 = vpop.f32.mrb[0].mxu0
      %v656 = vadd.f32 0.0, %v655
      %v657 = vpop.f32.mrb[0].mxu0
      %658 = vmatprep.mubr.bf16.mxu0 0
      %659 = vmatmul.mubr.bf16.gmra.mrb[0].mxu0 %v409
      %v660 = vpop.f32.mrb[0].mxu0
      %v661 = vadd.f32 0.0, %v660
      %v662 = vpop.f32.mrb[0].mxu0
      %v663 = vpop.f32.mrb[0].mxu0
      %v664 = vadd.f32 0.0, %v663
      %v665 = vpop.f32.mrb[0].mxu0
      %666 = vmatprep.mubr.bf16.mxu0 0
      %667 = vmatmul.mubr.bf16.gmra.mrb[0].mxu0 %v410
      %v668 = vpop.f32.mrb[0].mxu0
      %v669 = vadd.f32 0.0, %v668
      %v670 = vpop.f32.mrb[0].mxu0
      %v671 = vpop.f32.mrb[0].mxu0
      %v672 = vadd.f32 0.0, %v671
      %v673 = vpop.f32.mrb[0].mxu0
      %674 = vmatprep.mubr.bf16.mxu0 0
      %675 = vmatmul.mubr.bf16.gmra.mrb[0].mxu0 %v411
      %v676 = vpop.f32.mrb[0].mxu0
      %v677 = vadd.f32 0.0, %v676
      %v678 = vpop.f32.mrb[0].mxu0
      %v679 = vpop.f32.mrb[0].mxu0
      %v680 = vadd.f32 0.0, %v679
      %v681 = vpop.f32.mrb[0].mxu0
      %682 = vmatprep.mubr.bf16.mxu0 0
      %683 = vmatmul.mubr.bf16.gmra.mrb[0].mxu0 %v412
      %v684 = vpop.f32.mrb[0].mxu0
      %v685 = vadd.f32 0.0, %v684
      %v686 = vpop.f32.mrb[0].mxu0
      %v687 = vpop.f32.mrb[0].mxu0
      %v688 = vadd.f32 0.0, %v687
      %v689 = vpop.f32.mrb[0].mxu0
      %690 = vmatprep.mubr.bf16.mxu0 0
      %691 = vmatmul.mubr.bf16.gmra.mrb[0].mxu0 %v413
      %v692 = vpop.f32.mrb[0].mxu0
      %v693 = vadd.f32 0.0, %v692
      %v694 = vpop.f32.mrb[0].mxu0
      %v695 = vpop.f32.mrb[0].mxu0
      %v696 = vadd.f32 0.0, %v695
      %v697 = vpop.f32.mrb[0].mxu0
      %698 = vmatprep.mubr.bf16.mxu0 0
      %699 = vmatmul.mubr.bf16.gmra.mrb[0].mxu0 %v414
      %v700 = vpop.f32.mrb[0].mxu0
      %v701 = vadd.f32 0.0, %v700
      %v702 = vpop.f32.mrb[0].mxu0
      %v703 = vpop.f32.mrb[0].mxu0
      %v704 = vadd.f32 0.0, %v703
      %v705 = vpop.f32.mrb[0].mxu0
      %706 = vmatprep.mubr.bf16.mxu0 0
      %707 = vmatmul.mubr.bf16.gmra.mrb[0].mxu0 %v415
      %v708 = vpop.f32.mrb[0].mxu0
      %v709 = vadd.f32 0.0, %v708
      %v710 = vpop.f32.mrb[0].mxu0
      %v711 = vpop.f32.mrb[0].mxu0
      %v712 = vadd.f32 0.0, %v711
      %v713 = vpop.f32.mrb[0].mxu0
      %714 = vmatprep.mubr.bf16.mxu0 0
      %715 = vmatmul.mubr.bf16.gmra.mrb[0].mxu0 %v416
      %v716 = vpop.f32.mrb[0].mxu0
      %v717 = vadd.f32 0.0, %v716
      %v718 = vpop.f32.mrb[0].mxu0
      %v719 = vpop.f32.mrb[0].mxu0
      %v720 = vadd.f32 0.0, %v719
      %v721 = vpop.f32.mrb[0].mxu0
      %722 = vmatprep.mubr.bf16.mxu0 0
      %723 = vmatmul.mubr.bf16.gmra.mrb[0].mxu0 %v417
      %v724 = vpop.f32.mrb[0].mxu0
      %v725 = vadd.f32 0.0, %v724
      %v726 = vpop.f32.mrb[0].mxu0
      %v727 = vpop.f32.mrb[0].mxu0
      %v728 = vadd.f32 0.0, %v727
      %v729 = vpop.f32.mrb[0].mxu0
      %730 = vmatprep.mubr.bf16.mxu0 0
      %731 = vmatmul.mubr.bf16.gmra.mrb[0].mxu0 %v418
      %v732 = vpop.f32.mrb[0].mxu0
      %v733 = vadd.f32 0.0, %v732
      %v734 = vpop.f32.mrb[0].mxu0
      %v735 = vpop.f32.mrb[0].mxu0
      %v736 = vadd.f32 0.0, %v735
      %v737 = vpop.f32.mrb[0].mxu0
      %738 = vmatprep.mubr.bf16.mxu0 0
      %739 = vmatmul.mubr.bf16.gmra.mrb[0].mxu0 %v419
      %v740 = vpop.f32.mrb[0].mxu0
      %v741 = vadd.f32 0.0, %v740
      %v742 = vpop.f32.mrb[0].mxu0
      %v743 = vpop.f32.mrb[0].mxu0
      %v744 = vadd.f32 0.0, %v743
      %v745 = vpop.f32.mrb[0].mxu0
      %746 = vmatprep.mubr.bf16.mxu0 0
      %747 = vmatmul.mubr.bf16.gmra.mrb[0].mxu0 %v420
      %v748 = vpop.f32.mrb[0].mxu0
      %v749 = vadd.f32 0.0, %v748
      %v750 = vpop.f32.mrb[0].mxu0
      %v751 = vpop.f32.mrb[0].mxu0
      %v752 = vadd.f32 0.0, %v751
      %v753 = vpop.f32.mrb[0].mxu0
      %754 = vmatprep.mubr.bf16.mxu0 0
      %755 = vmatmul.mubr.bf16.gmra.mrb[0].mxu0 %v421
      %v756 = vpop.f32.mrb[0].mxu0
      %v757 = vadd.f32 0.0, %v756
      %v758 = vpop.f32.mrb[0].mxu0
      %v759 = vpop.f32.mrb[0].mxu0
      %v760 = vadd.f32 0.0, %v759
      %v761 = vpop.f32.mrb[0].mxu0
      %762 = vmatprep.mubr.bf16.mxu0 0
      %763 = vmatmul.mubr.bf16.gmra.mrb[0].mxu0 %v422
      %v764 = vpop.f32.mrb[0].mxu0
      %v765 = vadd.f32 0.0, %v764
      %v766 = vpop.f32.mrb[0].mxu0
      %v767 = vpop.f32.mrb[0].mxu0
      %v768 = vadd.f32 0.0, %v767
      %v769 = vpop.f32.mrb[0].mxu0
      %770 = vmatprep.mubr.bf16.mxu0 0
      %771 = vmatmul.mubr.bf16.gmra.mrb[0].mxu0 %v423
      %v772 = vpop.f32.mrb[0].mxu0
      %v773 = vadd.f32 0.0, %v772
      %v774 = vpop.f32.mrb[0].mxu0
      %v775 = vpop.f32.mrb[0].mxu0
      %v776 = vadd.f32 0.0, %v775
      %v777 = vpop.f32.mrb[0].mxu0
      %778 = vmatprep.mubr.bf16.mxu0 0
      %779 = vmatmul.mubr.bf16.gmra.mrb[0].mxu0 %v424
      %v780 = vpop.f32.mrb[0].mxu0
      %v781 = vadd.f32 0.0, %v780
      %v782 = vpop.f32.mrb[0].mxu0
      %v783 = vpop.f32.mrb[0].mxu0
      %v784 = vadd.f32 0.0, %v783
      %v785 = vpop.f32.mrb[0].mxu0
      %786 = vmatprep.mubr.bf16.mxu0 0
      %787 = vmatmul.mubr.bf16.gmra.mrb[0].mxu0 %v425
      %v788 = vpop.f32.mrb[0].mxu0
      %v789 = vadd.f32 0.0, %v788
      %v790 = vpop.f32.mrb[0].mxu0
      %v791 = vpop.f32.mrb[0].mxu0
      %v792 = vadd.f32 0.0, %v791
      %v793 = vpop.f32.mrb[0].mxu0
      %794 = vdwg.mxu0
      %v795 = vpack.c.bf16 %v544, %v541
      %v796 = vpack.c.bf16 %v552, %v549
      %v797 = vpack.c.bf16 %v560, %v557
      %v798 = vpack.c.bf16 %v568, %v565
      %v799 = vpack.c.bf16 %v576, %v573
      %v800 = vpack.c.bf16 %v584, %v581
      %v801 = vpack.c.bf16 %v592, %v589
      %v802 = vpack.c.bf16 %v600, %v597
      %v803 = vpack.c.bf16 %v608, %v605
      %v804 = vpack.c.bf16 %v616, %v613
      %v805 = vpack.c.bf16 %v624, %v621
      %v806 = vpack.c.bf16 %v632, %v629
      %v807 = vpack.c.bf16 %v640, %v637
      %v808 = vpack.c.bf16 %v648, %v645
      %v809 = vpack.c.bf16 %v656, %v653
      %v810 = vpack.c.bf16 %v664, %v661
      %v811 = vpack.c.bf16 %v672, %v669
      %v812 = vpack.c.bf16 %v680, %v677
      %v813 = vpack.c.bf16 %v688, %v685
      %v814 = vpack.c.bf16 %v696, %v693
      %v815 = vpack.c.bf16 %v704, %v701
      %v816 = vpack.c.bf16 %v712, %v709
      %v817 = vpack.c.bf16 %v720, %v717
      %v818 = vpack.c.bf16 %v728, %v725
      %v819 = vpack.c.bf16 %v736, %v733
      %v820 = vpack.c.bf16 %v744, %v741
      %v821 = vpack.c.bf16 %v752, %v749
      %v822 = vpack.c.bf16 %v760, %v757
      %v823 = vpack.c.bf16 %v768, %v765
      %v824 = vpack.c.bf16 %v776, %v773
      %v825 = vpack.c.bf16 %v784, %v781
      %v826 = vpack.c.bf16 %v792, %v789
      %v859 = vunpack.c.l.b16 %v795
      %v860 = vunpack.c.h.b16 %v795
      %v861 = vunpack.c.l.b16 %v796
      %v862 = vunpack.c.h.b16 %v796
      %v863 = vunpack.c.l.b16 %v797
      %v864 = vunpack.c.h.b16 %v797
      %v865 = vunpack.c.l.b16 %v798
      %v866 = vunpack.c.h.b16 %v798
      %v867 = vunpack.c.l.b16 %v799
      %v868 = vunpack.c.h.b16 %v799
      %v869 = vunpack.c.l.b16 %v800
      %v870 = vunpack.c.h.b16 %v800
      %v871 = vunpack.c.l.b16 %v801
      %v872 = vunpack.c.h.b16 %v801
      %v873 = vunpack.c.l.b16 %v802
      %v874 = vunpack.c.h.b16 %v802
      %v875 = vunpack.c.l.b16 %v803
      %v876 = vunpack.c.h.b16 %v803
      %v877 = vunpack.c.l.b16 %v804
      %v878 = vunpack.c.h.b16 %v804
      %v879 = vunpack.c.l.b16 %v805
      %v880 = vunpack.c.h.b16 %v805
      %v881 = vunpack.c.l.b16 %v806
      %v882 = vunpack.c.h.b16 %v806
      %v883 = vunpack.c.l.b16 %v807
      %v884 = vunpack.c.h.b16 %v807
      %v885 = vunpack.c.l.b16 %v808
      %v886 = vunpack.c.h.b16 %v808
      %v887 = vunpack.c.l.b16 %v809
      %v888 = vunpack.c.h.b16 %v809
      %v889 = vunpack.c.l.b16 %v810
      %v890 = vunpack.c.h.b16 %v810
      %v891 = vunpack.c.l.b16 %v811
      %v892 = vunpack.c.h.b16 %v811
      %v893 = vunpack.c.l.b16 %v812
      %v894 = vunpack.c.h.b16 %v812
      %v895 = vunpack.c.l.b16 %v813
      %v896 = vunpack.c.h.b16 %v813
      %v897 = vunpack.c.l.b16 %v814
      %v898 = vunpack.c.h.b16 %v814
      %v899 = vunpack.c.l.b16 %v815
      %v900 = vunpack.c.h.b16 %v815
      %v901 = vunpack.c.l.b16 %v816
      %v902 = vunpack.c.h.b16 %v816
      %v903 = vunpack.c.l.b16 %v817
      %v904 = vunpack.c.h.b16 %v817
      %v905 = vunpack.c.l.b16 %v818
      %v906 = vunpack.c.h.b16 %v818
      %v907 = vunpack.c.l.b16 %v819
      %v908 = vunpack.c.h.b16 %v819
      %v909 = vunpack.c.l.b16 %v820
      %v910 = vunpack.c.h.b16 %v820
      %v911 = vunpack.c.l.b16 %v821
      %v912 = vunpack.c.h.b16 %v821
      %v913 = vunpack.c.l.b16 %v822
      %v914 = vunpack.c.h.b16 %v822
      %v915 = vunpack.c.l.b16 %v823
      %v916 = vunpack.c.h.b16 %v823
      %v917 = vunpack.c.l.b16 %v824
      %v918 = vunpack.c.h.b16 %v824
      %v919 = vunpack.c.l.b16 %v825
      %v920 = vunpack.c.h.b16 %v825
      %v921 = vunpack.c.l.b16 %v826
      %v922 = vunpack.c.h.b16 %v826
      %v923 = vpack.c.b16 %v859, %v859
      %v924 = vpack.c.b16 %v860, %v860
      %v925 = vpack.c.b16 %v861, %v861
      %v926 = vpack.c.b16 %v862, %v862
      %v927 = vpack.c.b16 %v863, %v863
      %v928 = vpack.c.b16 %v864, %v864
      %v929 = vpack.c.b16 %v865, %v865
      %v930 = vpack.c.b16 %v866, %v866
      %v931 = vpack.c.b16 %v867, %v867
      %v932 = vpack.c.b16 %v868, %v868
      %v933 = vpack.c.b16 %v869, %v869
      %v934 = vpack.c.b16 %v870, %v870
      %v935 = vpack.c.b16 %v871, %v871
      %v936 = vpack.c.b16 %v872, %v872
      %v937 = vpack.c.b16 %v873, %v873
      %v938 = vpack.c.b16 %v874, %v874
      %v939 = vpack.c.b16 %v875, %v875
      %v940 = vpack.c.b16 %v876, %v876
      %v941 = vpack.c.b16 %v877, %v877
      %v942 = vpack.c.b16 %v878, %v878
      %v943 = vpack.c.b16 %v879, %v879
      %v944 = vpack.c.b16 %v880, %v880
      %v945 = vpack.c.b16 %v881, %v881
      %v946 = vpack.c.b16 %v882, %v882
      %v947 = vpack.c.b16 %v883, %v883
      %v948 = vpack.c.b16 %v884, %v884
      %v949 = vpack.c.b16 %v885, %v885
      %v950 = vpack.c.b16 %v886, %v886
      %v951 = vpack.c.b16 %v887, %v887
      %v952 = vpack.c.b16 %v888, %v888
      %v953 = vpack.c.b16 %v889, %v889
      %v954 = vpack.c.b16 %v890, %v890
      %v955 = vpack.c.b16 %v891, %v891
      %v956 = vpack.c.b16 %v892, %v892
      %v957 = vpack.c.b16 %v893, %v893
      %v958 = vpack.c.b16 %v894, %v894
      %v959 = vpack.c.b16 %v895, %v895
      %v960 = vpack.c.b16 %v896, %v896
      %v961 = vpack.c.b16 %v897, %v897
      %v962 = vpack.c.b16 %v898, %v898
      %v963 = vpack.c.b16 %v899, %v899
      %v964 = vpack.c.b16 %v900, %v900
      %v965 = vpack.c.b16 %v901, %v901
      %v966 = vpack.c.b16 %v902, %v902
      %v967 = vpack.c.b16 %v903, %v903
      %v968 = vpack.c.b16 %v904, %v904
      %v969 = vpack.c.b16 %v905, %v905
      %v970 = vpack.c.b16 %v906, %v906
      %v971 = vpack.c.b16 %v907, %v907
      %v972 = vpack.c.b16 %v908, %v908
      %v973 = vpack.c.b16 %v909, %v909
      %v974 = vpack.c.b16 %v910, %v910
      %v975 = vpack.c.b16 %v911, %v911
      %v976 = vpack.c.b16 %v912, %v912
      %v977 = vpack.c.b16 %v913, %v913
      %v978 = vpack.c.b16 %v914, %v914
      %v979 = vpack.c.b16 %v915, %v915
      %v980 = vpack.c.b16 %v916, %v916
      %v981 = vpack.c.b16 %v917, %v917
      %v982 = vpack.c.b16 %v918, %v918
      %v983 = vpack.c.b16 %v919, %v919
      %v984 = vpack.c.b16 %v920, %v920
      %v985 = vpack.c.b16 %v921, %v921
      %v986 = vpack.c.b16 %v922, %v922
      %1051 = vst [vmem:[%s179] sm:$0xf] %v923
      %1052 = vst [vmem:[%s179 + $0x4] sm:$0xf] %v924
      %1053 = vst [vmem:[%s179 + $0x8] sm:$0xf] %v925
      %1054 = vst [vmem:[%s179 + $0xc] sm:$0xf] %v926
      %1055 = vst [vmem:[%s179 + $0x10] sm:$0xf] %v927
      %1056 = vst [vmem:[%s179 + $0x14] sm:$0xf] %v928
      %1057 = vst [vmem:[%s179 + $0x18] sm:$0xf] %v929
      %1058 = vst [vmem:[%s179 + $0x1c] sm:$0xf] %v930
      %1059 = vst [vmem:[%s179 + $0x20] sm:$0xf] %v931
      %1060 = vst [vmem:[%s179 + $0x24] sm:$0xf] %v932
      %1061 = vst [vmem:[%s179 + $0x28] sm:$0xf] %v933
      %1062 = vst [vmem:[%s179 + $0x2c] sm:$0xf] %v934
      %1063 = vst [vmem:[%s179 + $0x30] sm:$0xf] %v935
      %1064 = vst [vmem:[%s179 + $0x34] sm:$0xf] %v936
      %1065 = vst [vmem:[%s179 + $0x38] sm:$0xf] %v937
      %1066 = vst [vmem:[%s179 + $0x3c] sm:$0xf] %v938
      %1067 = vst [vmem:[%s179 + $0x40] sm:$0xf] %v939
      %1068 = vst [vmem:[%s179 + $0x44] sm:$0xf] %v940
      %1069 = vst [vmem:[%s179 + $0x48] sm:$0xf] %v941
      %1070 = vst [vmem:[%s179 + $0x4c] sm:$0xf] %v942
      %1071 = vst [vmem:[%s179 + $0x50] sm:$0xf] %v943
      %1072 = vst [vmem:[%s179 + $0x54] sm:$0xf] %v944
      %1073 = vst [vmem:[%s179 + $0x58] sm:$0xf] %v945
      %1074 = vst [vmem:[%s179 + $0x5c] sm:$0xf] %v946
      %1075 = vst [vmem:[%s179 + $0x60] sm:$0xf] %v947
      %1076 = vst [vmem:[%s179 + $0x64] sm:$0xf] %v948
      %1077 = vst [vmem:[%s179 + $0x68] sm:$0xf] %v949
      %1078 = vst [vmem:[%s179 + $0x6c] sm:$0xf] %v950
      %1079 = vst [vmem:[%s179 + $0x70] sm:$0xf] %v951
      %1080 = vst [vmem:[%s179 + $0x74] sm:$0xf] %v952
      %1081 = vst [vmem:[%s179 + $0x78] sm:$0xf] %v953
      %1082 = vst [vmem:[%s179 + $0x7c] sm:$0xf] %v954
      %1083 = vst [vmem:[%s179 + $0x80] sm:$0xf] %v955
      %1084 = vst [vmem:[%s179 + $0x84] sm:$0xf] %v956
      %1085 = vst [vmem:[%s179 + $0x88] sm:$0xf] %v957
      %1086 = vst [vmem:[%s179 + $0x8c] sm:$0xf] %v958
      %1087 = vst [vmem:[%s179 + $0x90] sm:$0xf] %v959
      %1088 = vst [vmem:[%s179 + $0x94] sm:$0xf] %v960
      %1089 = vst [vmem:[%s179 + $0x98] sm:$0xf] %v961
      %1090 = vst [vmem:[%s179 + $0x9c] sm:$0xf] %v962
      %1091 = vst [vmem:[%s179 + $0xa0] sm:$0xf] %v963
      %1092 = vst [vmem:[%s179 + $0xa4] sm:$0xf] %v964
      %1093 = vst [vmem:[%s179 + $0xa8] sm:$0xf] %v965
      %1094 = vst [vmem:[%s179 + $0xac] sm:$0xf] %v966
      %1095 = vst [vmem:[%s179 + $0xb0] sm:$0xf] %v967
      %1096 = vst [vmem:[%s179 + $0xb4] sm:$0xf] %v968
      %1097 = vst [vmem:[%s179 + $0xb8] sm:$0xf] %v969
      %1098 = vst [vmem:[%s179 + $0xbc] sm:$0xf] %v970
      %1099 = vst [vmem:[%s179 + $0xc0] sm:$0xf] %v971
      %1100 = vst [vmem:[%s179 + $0xc4] sm:$0xf] %v972
      %1101 = vst [vmem:[%s179 + $0xc8] sm:$0xf] %v973
      %1102 = vst [vmem:[%s179 + $0xcc] sm:$0xf] %v974
      %1103 = vst [vmem:[%s179 + $0xd0] sm:$0xf] %v975
      %1104 = vst [vmem:[%s179 + $0xd4] sm:$0xf] %v976
      %1105 = vst [vmem:[%s179 + $0xd8] sm:$0xf] %v977
      %1106 = vst [vmem:[%s179 + $0xdc] sm:$0xf] %v978
      %1107 = vst [vmem:[%s179 + $0xe0] sm:$0xf] %v979
      %1108 = vst [vmem:[%s179 + $0xe4] sm:$0xf] %v980
      %1109 = vst [vmem:[%s179 + $0xe8] sm:$0xf] %v981
      %1110 = vst [vmem:[%s179 + $0xec] sm:$0xf] %v982
      %1111 = vst [vmem:[%s179 + $0xf0] sm:$0xf] %v983
      %1112 = vst [vmem:[%s179 + $0xf4] sm:$0xf] %v984
      %1113 = vst [vmem:[%s179 + $0xf8] sm:$0xf] %v985
      %1114 = vst [vmem:[%s179 + $0xfc] sm:$0xf] %v986
      %1115 = vst [vmem:[%s184] sm:$0xff] 0.0
      %v1116 = vadd.f32 %v541, %v544
      %v1117 = vadd.f32 %v1116, %v549
      %v1118 = vadd.f32 %v1117, %v552
      %v1119 = vadd.f32 %v1118, %v557
      %v1120 = vadd.f32 %v1119, %v560
      %v1121 = vadd.f32 %v1120, %v565
      %v1122 = vadd.f32 %v1121, %v568
      %v1123 = vadd.f32 %v1122, %v573
      %v1124 = vadd.f32 %v1123, %v576
      %v1125 = vadd.f32 %v1124, %v581
      %v1126 = vadd.f32 %v1125, %v584
      %v1127 = vadd.f32 %v1126, %v589
      %v1128 = vadd.f32 %v1127, %v592
      %v1129 = vadd.f32 %v1128, %v597
      %v1130 = vadd.f32 %v1129, %v600
      %v1131 = vadd.f32 %v1130, %v605
      %v1132 = vadd.f32 %v1131, %v608
      %v1133 = vadd.f32 %v1132, %v613
      %v1134 = vadd.f32 %v1133, %v616
      %v1135 = vadd.f32 %v1134, %v621
      %v1136 = vadd.f32 %v1135, %v624
      %v1137 = vadd.f32 %v1136, %v629
      %v1138 = vadd.f32 %v1137, %v632
      %v1139 = vadd.f32 %v1138, %v637
      %v1140 = vadd.f32 %v1139, %v640
      %v1141 = vadd.f32 %v1140, %v645
      %v1142 = vadd.f32 %v1141, %v648
      %v1143 = vadd.f32 %v1142, %v653
      %v1144 = vadd.f32 %v1143, %v656
      %v1145 = vadd.f32 %v1144, %v661
      %v1146 = vadd.f32 %v1145, %v664
      %v1147 = vadd.f32 %v1146, %v669
      %v1148 = vadd.f32 %v1147, %v672
      %v1149 = vadd.f32 %v1148, %v677
      %v1150 = vadd.f32 %v1149, %v680
      %v1151 = vadd.f32 %v1150, %v685
      %v1152 = vadd.f32 %v1151, %v688
      %v1153 = vadd.f32 %v1152, %v693
      %v1154 = vadd.f32 %v1153, %v696
      %v1155 = vadd.f32 %v1154, %v701
      %v1156 = vadd.f32 %v1155, %v704
      %v1157 = vadd.f32 %v1156, %v709
      %v1158 = vadd.f32 %v1157, %v712
      %v1159 = vadd.f32 %v1158, %v717
      %v1160 = vadd.f32 %v1159, %v720
      %v1161 = vadd.f32 %v1160, %v725
      %v1162 = vadd.f32 %v1161, %v728
      %v1163 = vadd.f32 %v1162, %v733
      %v1164 = vadd.f32 %v1163, %v736
      %v1165 = vadd.f32 %v1164, %v741
      %v1166 = vadd.f32 %v1165, %v744
      %v1167 = vadd.f32 %v1166, %v749
      %v1168 = vadd.f32 %v1167, %v752
      %v1169 = vadd.f32 %v1168, %v757
      %v1170 = vadd.f32 %v1169, %v760
      %v1171 = vadd.f32 %v1170, %v765
      %v1172 = vadd.f32 %v1171, %v768
      %v1173 = vadd.f32 %v1172, %v773
      %v1174 = vadd.f32 %v1173, %v776
      %v1175 = vadd.f32 %v1174, %v781
      %v1176 = vadd.f32 %v1175, %v784
      %v1177 = vadd.f32 %v1176, %v789
      %v1178 = vadd.f32 %v1177, %v792
      %v1179 = vrot.slane %v1178, 4
      %v1180 = vadd.f32 %v1178, %v1179
      %v1181 = vrot.slane %v1180, 2
      %v1182 = vadd.f32 %v1180, %v1181
      %v1183 = vrot.slane %v1182, 1
      %v1184 = vadd.f32 %v1182, %v1183
      %1185 = vst [vmem:[%s184] sm:$0x1] %v1184
      %v1186 = vmul.f32 %v541, %v541
      %v1187 = vmul.f32 %v544, %v544
      %v1188 = vmul.f32 %v549, %v549
      %v1189 = vmul.f32 %v552, %v552
      %v1190 = vmul.f32 %v557, %v557
      %v1191 = vmul.f32 %v560, %v560
      %v1192 = vmul.f32 %v565, %v565
      %v1193 = vmul.f32 %v568, %v568
      %v1194 = vmul.f32 %v573, %v573
      %v1195 = vmul.f32 %v576, %v576
      %v1196 = vmul.f32 %v581, %v581
      %v1197 = vmul.f32 %v584, %v584
      %v1198 = vmul.f32 %v589, %v589
      %v1199 = vmul.f32 %v592, %v592
      %v1200 = vmul.f32 %v597, %v597
      %v1201 = vmul.f32 %v600, %v600
      %v1202 = vmul.f32 %v605, %v605
      %v1203 = vmul.f32 %v608, %v608
      %v1204 = vmul.f32 %v613, %v613
      %v1205 = vmul.f32 %v616, %v616
      %v1206 = vmul.f32 %v621, %v621
      %v1207 = vmul.f32 %v624, %v624
      %v1208 = vmul.f32 %v629, %v629
      %v1209 = vmul.f32 %v632, %v632
      %v1210 = vmul.f32 %v637, %v637
      %v1211 = vmul.f32 %v640, %v640
      %v1212 = vmul.f32 %v645, %v645
      %v1213 = vmul.f32 %v648, %v648
      %v1214 = vmul.f32 %v653, %v653
      %v1215 = vmul.f32 %v656, %v656
      %v1216 = vmul.f32 %v661, %v661
      %v1217 = vmul.f32 %v664, %v664
      %v1218 = vmul.f32 %v669, %v669
      %v1219 = vmul.f32 %v672, %v672
      %v1220 = vmul.f32 %v677, %v677
      %v1221 = vmul.f32 %v680, %v680
      %v1222 = vmul.f32 %v685, %v685
      %v1223 = vmul.f32 %v688, %v688
      %v1224 = vmul.f32 %v693, %v693
      %v1225 = vmul.f32 %v696, %v696
      %v1226 = vmul.f32 %v701, %v701
      %v1227 = vmul.f32 %v704, %v704
      %v1228 = vmul.f32 %v709, %v709
      %v1229 = vmul.f32 %v712, %v712
      %v1230 = vmul.f32 %v717, %v717
      %v1231 = vmul.f32 %v720, %v720
      %v1232 = vmul.f32 %v725, %v725
      %v1233 = vmul.f32 %v728, %v728
      %v1234 = vmul.f32 %v733, %v733
      %v1235 = vmul.f32 %v736, %v736
      %v1236 = vmul.f32 %v741, %v741
      %v1237 = vmul.f32 %v744, %v744
      %v1238 = vmul.f32 %v749, %v749
      %v1239 = vmul.f32 %v752, %v752
      %v1240 = vmul.f32 %v757, %v757
      %v1241 = vmul.f32 %v760, %v760
      %v1242 = vmul.f32 %v765, %v765
      %v1243 = vmul.f32 %v768, %v768
      %v1244 = vmul.f32 %v773, %v773
      %v1245 = vmul.f32 %v776, %v776
      %v1246 = vmul.f32 %v781, %v781
      %v1247 = vmul.f32 %v784, %v784
      %v1248 = vmul.f32 %v789, %v789
      %v1249 = vmul.f32 %v792, %v792
      %v1250 = vadd.f32 %v1186, %v1187
      %v1251 = vadd.f32 %v1250, %v1188
      %v1252 = vadd.f32 %v1251, %v1189
      %v1253 = vadd.f32 %v1252, %v1190
      %v1254 = vadd.f32 %v1253, %v1191
      %v1255 = vadd.f32 %v1254, %v1192
      %v1256 = vadd.f32 %v1255, %v1193
      %v1257 = vadd.f32 %v1256, %v1194
      %v1258 = vadd.f32 %v1257, %v1195
      %v1259 = vadd.f32 %v1258, %v1196
      %v1260 = vadd.f32 %v1259, %v1197
      %v1261 = vadd.f32 %v1260, %v1198
      %v1262 = vadd.f32 %v1261, %v1199
      %v1263 = vadd.f32 %v1262, %v1200
      %v1264 = vadd.f32 %v1263, %v1201
      %v1265 = vadd.f32 %v1264, %v1202
      %v1266 = vadd.f32 %v1265, %v1203
      %v1267 = vadd.f32 %v1266, %v1204
      %v1268 = vadd.f32 %v1267, %v1205
      %v1269 = vadd.f32 %v1268, %v1206
      %v1270 = vadd.f32 %v1269, %v1207
      %v1271 = vadd.f32 %v1270, %v1208
      %v1272 = vadd.f32 %v1271, %v1209
      %v1273 = vadd.f32 %v1272, %v1210
      %v1274 = vadd.f32 %v1273, %v1211
      %v1275 = vadd.f32 %v1274, %v1212
      %v1276 = vadd.f32 %v1275, %v1213
      %v1277 = vadd.f32 %v1276, %v1214
      %v1278 = vadd.f32 %v1277, %v1215
      %v1279 = vadd.f32 %v1278, %v1216
      %v1280 = vadd.f32 %v1279, %v1217
      %v1281 = vadd.f32 %v1280, %v1218
      %v1282 = vadd.f32 %v1281, %v1219
      %v1283 = vadd.f32 %v1282, %v1220
      %v1284 = vadd.f32 %v1283, %v1221
      %v1285 = vadd.f32 %v1284, %v1222
      %v1286 = vadd.f32 %v1285, %v1223
      %v1287 = vadd.f32 %v1286, %v1224
      %v1288 = vadd.f32 %v1287, %v1225
      %v1289 = vadd.f32 %v1288, %v1226
      %v1290 = vadd.f32 %v1289, %v1227
      %v1291 = vadd.f32 %v1290, %v1228
      %v1292 = vadd.f32 %v1291, %v1229
      %v1293 = vadd.f32 %v1292, %v1230
      %v1294 = vadd.f32 %v1293, %v1231
      %v1295 = vadd.f32 %v1294, %v1232
      %v1296 = vadd.f32 %v1295, %v1233
      %v1297 = vadd.f32 %v1296, %v1234
      %v1298 = vadd.f32 %v1297, %v1235
      %v1299 = vadd.f32 %v1298, %v1236
      %v1300 = vadd.f32 %v1299, %v1237
      %v1301 = vadd.f32 %v1300, %v1238
      %v1302 = vadd.f32 %v1301, %v1239
      %v1303 = vadd.f32 %v1302, %v1240
      %v1304 = vadd.f32 %v1303, %v1241
      %v1305 = vadd.f32 %v1304, %v1242
      %v1306 = vadd.f32 %v1305, %v1243
      %v1307 = vadd.f32 %v1306, %v1244
      %v1308 = vadd.f32 %v1307, %v1245
      %v1309 = vadd.f32 %v1308, %v1246
      %v1310 = vadd.f32 %v1309, %v1247
      %v1311 = vadd.f32 %v1310, %v1248
      %v1312 = vadd.f32 %v1311, %v1249
      %v1313 = vrot.slane %v1312, 4
      %v1314 = vadd.f32 %v1312, %v1313
      %v1315 = vrot.slane %v1314, 2
      %v1316 = vadd.f32 %v1314, %v1315
      %v1317 = vrot.slane %v1316, 1
      %v1318 = vadd.f32 %v1316, %v1317
      %1319 = vst [vmem:[%s184 + $0x1] sm:$0x1] %v1318
      %s1320 = smul.u32 64, %s15
      %p1321 = scmp.lt.s32.totalorder %s1320, 255
      %s1322 = scalar_select %p1321, %s1320, 255
      %s1323 = smul.addr %s1322, 4
      %s1324 = scalar_lea.vmem %s2, %s1323
      %p1325 = scmp.lt.s32.totalorder %s15, 3
      %s1326 = scalar_select %p1325, %s15, 3
      %s1327 = smul.addr %s1326, 8
      %s1328 = scalar_lea.vmem %s3, %s1327
      // Predicated region
      $region29: #{block_forward.2} parent=27 // pred_check
        %p1329 = pneg %p80
      $region30: #{block_forward.2} parent=27 // pred_check_branch
        %1331 = sbr.rel (%p1329) target = $region32
      $region31: #{block_forward.2} parent=27 // pred_region
        %s1332 = smul.u32 64, %s15
      $region32: #{block_forward.2} parent=27 // pred_fallthru
        _
      // Predicated region
      $region33: #{block_forward.2} parent=27 // pred_check
        %p1333 = pneg %p106
      $region34: #{block_forward.2} parent=27 // pred_check_branch
        %1335 = sbr.rel (%p1333) target = $region36
      $region35: #{block_forward.2} parent=27 // pred_region
        _
      $region36: #{block_forward.2} parent=27 // pred_fallthru
        _
    $region28: #{block_forward.2} parent=5 // pred_fallthru
      _
    %p1336 = scmp.le.s32.totalorder 2, %s10
    // Predicated region
    $region37: #{block_forward.2} parent=5 // pred_check
      %p1337 = pneg %p1336
    $region38: #{block_forward.2} parent=5 // pred_check_branch
      %1339 = sbr.rel (%p1337) target = $region40
    $region39: #{block_forward.2} parent=5 // pred_region
      %s1340 = ssub.s32 %s10, 2
      // Predicated region
      $region41: #{block_forward.2} parent=39 // pred_check
        %p1341 = pneg %p86
      $region42: #{block_forward.2} parent=39 // pred_check_branch
        %1343 = sbr.rel (%p1341) target = $region44
      $region43: #{block_forward.2} parent=39 // pred_region
        %s1344 = smul.u32 64, %s16
        %p1345 = scmp.lt.s32.totalorder %s1344, 255
        %s1346 = scalar_select %p1345, %s1344, 255
        %s1347 = smul.addr %s1346, 4
        %s1348 = scalar_lea.vmem %s2, %s1347
      $region44: #{block_forward.2} parent=39 // pred_fallthru
        _
      // Predicated region
      $region45: #{block_forward.2} parent=39 // pred_check
        %p1349 = pneg %p112
      $region46: #{block_forward.2} parent=39 // pred_check_branch
        %1351 = sbr.rel (%p1349) target = $region48
      $region47: #{block_forward.2} parent=39 // pred_region
        %p1352 = scmp.lt.s32.totalorder %s16, 3
        %s1353 = scalar_select %p1352, %s16, 3
        %s1354 = smul.addr %s1353, 8
        %s1355 = scalar_lea.vmem %s3, %s1354
      $region48: #{block_forward.2} parent=39 // pred_fallthru
        _
    $region40: #{block_forward.2} parent=5 // pred_fallthru
      _
  $region6: #{block_forward.2} parent=0 // loop_footer
    %s14 = sadd.s32 1, %s10
  $region7: #{block_forward.2} parent=0 // loop_footer_branch
    %9 = sbr.rel target = $region3
  $region8: #{block_forward.2} parent=0 // loop_exit
    _

// kernel: block_forward.3
$region0: #{block_forward.3}
  #allocation0 [shape = 'u32[]', space=smem, size = 0x4, offset = 0x4, fixed_abs, tag = 'smem constant byte address 0x4 - core index']
  #allocation1 [shape = 'u32[144,128]{1,0:T(1,128)}', space=vmem, size = 0x12000, scoped, tag = 'internal scratch']
  %s0 = inlined_call_operand.vmem [shape: bf16[2048,128], index: 0, kind: input, shape index: {}]
  %s1 = inlined_call_operand.vmem [shape: f32[8,128], index: 1, kind: input, shape index: {}]
  %s2 = inlined_call_operand.vmem [shape: f32[2048,128], index: 2, kind: output, shape index: {}]
  %s3 = sld [smem:[#allocation0]]
  $region18: #{block_forward.3} parent=0
    _
  %s5 = ssub.s32 1, %s3
  %s6 = scalar_select 0, %s5, %s3
  // Predicated region
  $region2: #{block_forward.3} parent=0 // pred_check
    _
  $region3: #{block_forward.3} parent=0 // pred_check_branch
    %8 = sbr.rel (0) target = $region5
  $region4: #{block_forward.3} parent=0 // pred_region
    _
  $region5: #{block_forward.3} parent=0 // pred_fallthru
    _
  // Predicated region
  $region6: #{block_forward.3} parent=0 // pred_check
    _
  $region7: #{block_forward.3} parent=0 // pred_check_branch
    %10 = sbr.rel (0) target = $region9
  $region8: #{block_forward.3} parent=0 // pred_region
    _
  $region9: #{block_forward.3} parent=0 // pred_fallthru
    _
  %v11 = vld [vmem:[%s0] sm:$0xf]
  %v12 = vld [vmem:[%s0 + $0x4] sm:$0xf]
  %v13 = vld [vmem:[%s0 + $0x8] sm:$0xf]
  %v14 = vld [vmem:[%s0 + $0xc] sm:$0xf]
  %v15 = vld [vmem:[%s0 + $0x10] sm:$0xf]
  %v16 = vld [vmem:[%s0 + $0x14] sm:$0xf]
  %v17 = vld [vmem:[%s0 + $0x18] sm:$0xf]
  %v18 = vld [vmem:[%s0 + $0x1c] sm:$0xf]
  %v19 = vld [vmem:[%s0 + $0x20] sm:$0xf]
  %v20 = vld [vmem:[%s0 + $0x24] sm:$0xf]
  %v21 = vld [vmem:[%s0 + $0x28] sm:$0xf]
  %v22 = vld [vmem:[%s0 + $0x2c] sm:$0xf]
  %v23 = vld [vmem:[%s0 + $0x30] sm:$0xf]
  %v24 = vld [vmem:[%s0 + $0x34] sm:$0xf]
  %v25 = vld [vmem:[%s0 + $0x38] sm:$0xf]
  %v26 = vld [vmem:[%s0 + $0x3c] sm:$0xf]
  %v27 = vld [vmem:[%s0 + $0x40] sm:$0xf]
  %v28 = vld [vmem:[%s0 + $0x44] sm:$0xf]
  %v29 = vld [vmem:[%s0 + $0x48] sm:$0xf]
  %v30 = vld [vmem:[%s0 + $0x4c] sm:$0xf]
  %v31 = vld [vmem:[%s0 + $0x50] sm:$0xf]
  %v32 = vld [vmem:[%s0 + $0x54] sm:$0xf]
  %v33 = vld [vmem:[%s0 + $0x58] sm:$0xf]
  %v34 = vld [vmem:[%s0 + $0x5c] sm:$0xf]
  %v35 = vld [vmem:[%s0 + $0x60] sm:$0xf]
  %v36 = vld [vmem:[%s0 + $0x64] sm:$0xf]
  %v37 = vld [vmem:[%s0 + $0x68] sm:$0xf]
  %v38 = vld [vmem:[%s0 + $0x6c] sm:$0xf]
  %v39 = vld [vmem:[%s0 + $0x70] sm:$0xf]
  %v40 = vld [vmem:[%s0 + $0x74] sm:$0xf]
  %v41 = vld [vmem:[%s0 + $0x78] sm:$0xf]
  %v42 = vld [vmem:[%s0 + $0x7c] sm:$0xf]
  %v43 = vld [vmem:[%s0 + $0x80] sm:$0xf]
  %v44 = vld [vmem:[%s0 + $0x84] sm:$0xf]
  %v45 = vld [vmem:[%s0 + $0x88] sm:$0xf]
  %v46 = vld [vmem:[%s0 + $0x8c] sm:$0xf]
  %v47 = vld [vmem:[%s0 + $0x90] sm:$0xf]
  %v48 = vld [vmem:[%s0 + $0x94] sm:$0xf]
  %v49 = vld [vmem:[%s0 + $0x98] sm:$0xf]
  %v50 = vld [vmem:[%s0 + $0x9c] sm:$0xf]
  %v51 = vld [vmem:[%s0 + $0xa0] sm:$0xf]
  %v52 = vld [vmem:[%s0 + $0xa4] sm:$0xf]
  %v53 = vld [vmem:[%s0 + $0xa8] sm:$0xf]
  %v54 = vld [vmem:[%s0 + $0xac] sm:$0xf]
  %v55 = vld [vmem:[%s0 + $0xb0] sm:$0xf]
  %v56 = vld [vmem:[%s0 + $0xb4] sm:$0xf]
  %v57 = vld [vmem:[%s0 + $0xb8] sm:$0xf]
  %v58 = vld [vmem:[%s0 + $0xbc] sm:$0xf]
  %v59 = vld [vmem:[%s0 + $0xc0] sm:$0xf]
  %v60 = vld [vmem:[%s0 + $0xc4] sm:$0xf]
  %v61 = vld [vmem:[%s0 + $0xc8] sm:$0xf]
  %v62 = vld [vmem:[%s0 + $0xcc] sm:$0xf]
  %v63 = vld [vmem:[%s0 + $0xd0] sm:$0xf]
  %v64 = vld [vmem:[%s0 + $0xd4] sm:$0xf]
  %v65 = vld [vmem:[%s0 + $0xd8] sm:$0xf]
  %v66 = vld [vmem:[%s0 + $0xdc] sm:$0xf]
  %v67 = vld [vmem:[%s0 + $0xe0] sm:$0xf]
  %v68 = vld [vmem:[%s0 + $0xe4] sm:$0xf]
  %v69 = vld [vmem:[%s0 + $0xe8] sm:$0xf]
  %v70 = vld [vmem:[%s0 + $0xec] sm:$0xf]
  %v71 = vld [vmem:[%s0 + $0xf0] sm:$0xf]
  %v72 = vld [vmem:[%s0 + $0xf4] sm:$0xf]
  %v73 = vld [vmem:[%s0 + $0xf8] sm:$0xf]
  %v74 = vld [vmem:[%s0 + $0xfc] sm:$0xf]
  %v75 = vld [vmem:[%s0 + $0x100] sm:$0xf]
  %v76 = vld [vmem:[%s0 + $0x104] sm:$0xf]
  %v77 = vld [vmem:[%s0 + $0x108] sm:$0xf]
  %v78 = vld [vmem:[%s0 + $0x10c] sm:$0xf]
  %v79 = vld [vmem:[%s0 + $0x110] sm:$0xf]
  %v80 = vld [vmem:[%s0 + $0x114] sm:$0xf]
  %v81 = vld [vmem:[%s0 + $0x118] sm:$0xf]
  %v82 = vld [vmem:[%s0 + $0x11c] sm:$0xf]
  %v83 = vld [vmem:[%s0 + $0x120] sm:$0xf]
  %v84 = vld [vmem:[%s0 + $0x124] sm:$0xf]
  %v85 = vld [vmem:[%s0 + $0x128] sm:$0xf]
  %v86 = vld [vmem:[%s0 + $0x12c] sm:$0xf]
  %v87 = vld [vmem:[%s0 + $0x130] sm:$0xf]
  %v88 = vld [vmem:[%s0 + $0x134] sm:$0xf]
  %v89 = vld [vmem:[%s0 + $0x138] sm:$0xf]
  %v90 = vld [vmem:[%s0 + $0x13c] sm:$0xf]
  %v91 = vld [vmem:[%s0 + $0x140] sm:$0xf]
  %v92 = vld [vmem:[%s0 + $0x144] sm:$0xf]
  %v93 = vld [vmem:[%s0 + $0x148] sm:$0xf]
  %v94 = vld [vmem:[%s0 + $0x14c] sm:$0xf]
  %v95 = vld [vmem:[%s0 + $0x150] sm:$0xf]
  %v96 = vld [vmem:[%s0 + $0x154] sm:$0xf]
  %v97 = vld [vmem:[%s0 + $0x158] sm:$0xf]
  %v98 = vld [vmem:[%s0 + $0x15c] sm:$0xf]
  %v99 = vld [vmem:[%s0 + $0x160] sm:$0xf]
  %v100 = vld [vmem:[%s0 + $0x164] sm:$0xf]
  %v101 = vld [vmem:[%s0 + $0x168] sm:$0xf]
  %v102 = vld [vmem:[%s0 + $0x16c] sm:$0xf]
  %v103 = vld [vmem:[%s0 + $0x170] sm:$0xf]
  %v104 = vld [vmem:[%s0 + $0x174] sm:$0xf]
  %v105 = vld [vmem:[%s0 + $0x178] sm:$0xf]
  %v106 = vld [vmem:[%s0 + $0x17c] sm:$0xf]
  %v107 = vld [vmem:[%s0 + $0x180] sm:$0xf]
  %v108 = vld [vmem:[%s0 + $0x184] sm:$0xf]
  %v109 = vld [vmem:[%s0 + $0x188] sm:$0xf]
  %v110 = vld [vmem:[%s0 + $0x18c] sm:$0xf]
  %v111 = vld [vmem:[%s0 + $0x190] sm:$0xf]
  %v112 = vld [vmem:[%s0 + $0x194] sm:$0xf]
  %v113 = vld [vmem:[%s0 + $0x198] sm:$0xf]
  %v114 = vld [vmem:[%s0 + $0x19c] sm:$0xf]
  %v115 = vld [vmem:[%s0 + $0x1a0] sm:$0xf]
  %v116 = vld [vmem:[%s0 + $0x1a4] sm:$0xf]
  %v117 = vld [vmem:[%s0 + $0x1a8] sm:$0xf]
  %v118 = vld [vmem:[%s0 + $0x1ac] sm:$0xf]
  %v119 = vld [vmem:[%s0 + $0x1b0] sm:$0xf]
  %v120 = vld [vmem:[%s0 + $0x1b4] sm:$0xf]
  %v121 = vld [vmem:[%s0 + $0x1b8] sm:$0xf]
  %v122 = vld [vmem:[%s0 + $0x1bc] sm:$0xf]
  %v123 = vld [vmem:[%s0 + $0x1c0] sm:$0xf]
  %v124 = vld [vmem:[%s0 + $0x1c4] sm:$0xf]
  %v125 = vld [vmem:[%s0 + $0x1c8] sm:$0xf]
  %v126 = vld [vmem:[%s0 + $0x1cc] sm:$0xf]
  %v127 = vld [vmem:[%s0 + $0x1d0] sm:$0xf]
  %v128 = vld [vmem:[%s0 + $0x1d4] sm:$0xf]
  %v129 = vld [vmem:[%s0 + $0x1d8] sm:$0xf]
  %v130 = vld [vmem:[%s0 + $0x1dc] sm:$0xf]
  %v131 = vld [vmem:[%s0 + $0x1e0] sm:$0xf]
  %v132 = vld [vmem:[%s0 + $0x1e4] sm:$0xf]
  %v133 = vld [vmem:[%s0 + $0x1e8] sm:$0xf]
  %v134 = vld [vmem:[%s0 + $0x1ec] sm:$0xf]
  %v135 = vld [vmem:[%s0 + $0x1f0] sm:$0xf]
  %v136 = vld [vmem:[%s0 + $0x1f4] sm:$0xf]
  %v137 = vld [vmem:[%s0 + $0x1f8] sm:$0xf]
  %v138 = vld [vmem:[%s0 + $0x1fc] sm:$0xf]
  %v139 = vld [vmem:[%s0 + $0x200] sm:$0xf]
  %v140 = vld [vmem:[%s0 + $0x204] sm:$0xf]
  %v141 = vld [vmem:[%s0 + $0x208] sm:$0xf]
  %v142 = vld [vmem:[%s0 + $0x20c] sm:$0xf]
  %v143 = vld [vmem:[%s0 + $0x210] sm:$0xf]
  %v144 = vld [vmem:[%s0 + $0x214] sm:$0xf]
  %v145 = vld [vmem:[%s0 + $0x218] sm:$0xf]
  %v146 = vld [vmem:[%s0 + $0x21c] sm:$0xf]
  %v147 = vld [vmem:[%s0 + $0x220] sm:$0xf]
  %v148 = vld [vmem:[%s0 + $0x224] sm:$0xf]
  %v149 = vld [vmem:[%s0 + $0x228] sm:$0xf]
  %v150 = vld [vmem:[%s0 + $0x22c] sm:$0xf]
  %v151 = vld [vmem:[%s0 + $0x230] sm:$0xf]
  %v152 = vld [vmem:[%s0 + $0x234] sm:$0xf]
  %v153 = vld [vmem:[%s0 + $0x238] sm:$0xf]
  %v154 = vld [vmem:[%s0 + $0x23c] sm:$0xf]
  %v155 = vld [vmem:[%s0 + $0x240] sm:$0xf]
  %v156 = vld [vmem:[%s0 + $0x244] sm:$0xf]
  %v157 = vld [vmem:[%s0 + $0x248] sm:$0xf]
  %v158 = vld [vmem:[%s0 + $0x24c] sm:$0xf]
  %v159 = vld [vmem:[%s0 + $0x250] sm:$0xf]
  %v160 = vld [vmem:[%s0 + $0x254] sm:$0xf]
  %v161 = vld [vmem:[%s0 + $0x258] sm:$0xf]
  %v162 = vld [vmem:[%s0 + $0x25c] sm:$0xf]
  %v163 = vld [vmem:[%s0 + $0x260] sm:$0xf]
  %v164 = vld [vmem:[%s0 + $0x264] sm:$0xf]
  %v165 = vld [vmem:[%s0 + $0x268] sm:$0xf]
  %v166 = vld [vmem:[%s0 + $0x26c] sm:$0xf]
  %v167 = vld [vmem:[%s0 + $0x270] sm:$0xf]
  %v168 = vld [vmem:[%s0 + $0x274] sm:$0xf]
  %v169 = vld [vmem:[%s0 + $0x278] sm:$0xf]
  %v170 = vld [vmem:[%s0 + $0x27c] sm:$0xf]
  %v171 = vld [vmem:[%s0 + $0x280] sm:$0xf]
  %v172 = vld [vmem:[%s0 + $0x284] sm:$0xf]
  %v173 = vld [vmem:[%s0 + $0x288] sm:$0xf]
  %v174 = vld [vmem:[%s0 + $0x28c] sm:$0xf]
  %v175 = vld [vmem:[%s0 + $0x290] sm:$0xf]
  %v176 = vld [vmem:[%s0 + $0x294] sm:$0xf]
  %v177 = vld [vmem:[%s0 + $0x298] sm:$0xf]
  %v178 = vld [vmem:[%s0 + $0x29c] sm:$0xf]
  %v179 = vld [vmem:[%s0 + $0x2a0] sm:$0xf]
  %v180 = vld [vmem:[%s0 + $0x2a4] sm:$0xf]
  %v181 = vld [vmem:[%s0 + $0x2a8] sm:$0xf]
  %v182 = vld [vmem:[%s0 + $0x2ac] sm:$0xf]
  %v183 = vld [vmem:[%s0 + $0x2b0] sm:$0xf]
  %v184 = vld [vmem:[%s0 + $0x2b4] sm:$0xf]
  %v185 = vld [vmem:[%s0 + $0x2b8] sm:$0xf]
  %v186 = vld [vmem:[%s0 + $0x2bc] sm:$0xf]
  %v187 = vld [vmem:[%s0 + $0x2c0] sm:$0xf]
  %v188 = vld [vmem:[%s0 + $0x2c4] sm:$0xf]
  %v189 = vld [vmem:[%s0 + $0x2c8] sm:$0xf]
  %v190 = vld [vmem:[%s0 + $0x2cc] sm:$0xf]
  %v191 = vld [vmem:[%s0 + $0x2d0] sm:$0xf]
  %v192 = vld [vmem:[%s0 + $0x2d4] sm:$0xf]
  %v193 = vld [vmem:[%s0 + $0x2d8] sm:$0xf]
  %v194 = vld [vmem:[%s0 + $0x2dc] sm:$0xf]
  %v195 = vld [vmem:[%s0 + $0x2e0] sm:$0xf]
  %v196 = vld [vmem:[%s0 + $0x2e4] sm:$0xf]
  %v197 = vld [vmem:[%s0 + $0x2e8] sm:$0xf]
  %v198 = vld [vmem:[%s0 + $0x2ec] sm:$0xf]
  %v199 = vld [vmem:[%s0 + $0x2f0] sm:$0xf]
  %v200 = vld [vmem:[%s0 + $0x2f4] sm:$0xf]
  %v201 = vld [vmem:[%s0 + $0x2f8] sm:$0xf]
  %v202 = vld [vmem:[%s0 + $0x2fc] sm:$0xf]
  %v203 = vld [vmem:[%s0 + $0x300] sm:$0xf]
  %v204 = vld [vmem:[%s0 + $0x304] sm:$0xf]
  %v205 = vld [vmem:[%s0 + $0x308] sm:$0xf]
  %v206 = vld [vmem:[%s0 + $0x30c] sm:$0xf]
  %v207 = vld [vmem:[%s0 + $0x310] sm:$0xf]
  %v208 = vld [vmem:[%s0 + $0x314] sm:$0xf]
  %v209 = vld [vmem:[%s0 + $0x318] sm:$0xf]
  %v210 = vld [vmem:[%s0 + $0x31c] sm:$0xf]
  %v211 = vld [vmem:[%s0 + $0x320] sm:$0xf]
  %v212 = vld [vmem:[%s0 + $0x324] sm:$0xf]
  %v213 = vld [vmem:[%s0 + $0x328] sm:$0xf]
  %v214 = vld [vmem:[%s0 + $0x32c] sm:$0xf]
  %v215 = vld [vmem:[%s0 + $0x330] sm:$0xf]
  %v216 = vld [vmem:[%s0 + $0x334] sm:$0xf]
  %v217 = vld [vmem:[%s0 + $0x338] sm:$0xf]
  %v218 = vld [vmem:[%s0 + $0x33c] sm:$0xf]
  %v219 = vld [vmem:[%s0 + $0x340] sm:$0xf]
  %v220 = vld [vmem:[%s0 + $0x344] sm:$0xf]
  %v221 = vld [vmem:[%s0 + $0x348] sm:$0xf]
  %v222 = vld [vmem:[%s0 + $0x34c] sm:$0xf]
  %v223 = vld [vmem:[%s0 + $0x350] sm:$0xf]
  %v224 = vld [vmem:[%s0 + $0x354] sm:$0xf]
  %v225 = vld [vmem:[%s0 + $0x358] sm:$0xf]
  %v226 = vld [vmem:[%s0 + $0x35c] sm:$0xf]
  %v227 = vld [vmem:[%s0 + $0x360] sm:$0xf]
  %v228 = vld [vmem:[%s0 + $0x364] sm:$0xf]
  %v229 = vld [vmem:[%s0 + $0x368] sm:$0xf]
  %v230 = vld [vmem:[%s0 + $0x36c] sm:$0xf]
  %v231 = vld [vmem:[%s0 + $0x370] sm:$0xf]
  %v232 = vld [vmem:[%s0 + $0x374] sm:$0xf]
  %v233 = vld [vmem:[%s0 + $0x378] sm:$0xf]
  %v234 = vld [vmem:[%s0 + $0x37c] sm:$0xf]
  %v235 = vld [vmem:[%s0 + $0x380] sm:$0xf]
  %v236 = vld [vmem:[%s0 + $0x384] sm:$0xf]
  %v237 = vld [vmem:[%s0 + $0x388] sm:$0xf]
  %v238 = vld [vmem:[%s0 + $0x38c] sm:$0xf]
  %v239 = vld [vmem:[%s0 + $0x390] sm:$0xf]
  %v240 = vld [vmem:[%s0 + $0x394] sm:$0xf]
  %v241 = vld [vmem:[%s0 + $0x398] sm:$0xf]
  %v242 = vld [vmem:[%s0 + $0x39c] sm:$0xf]
  %v243 = vld [vmem:[%s0 + $0x3a0] sm:$0xf]
  %v244 = vld [vmem:[%s0 + $0x3a4] sm:$0xf]
  %v245 = vld [vmem:[%s0 + $0x3a8] sm:$0xf]
  %v246 = vld [vmem:[%s0 + $0x3ac] sm:$0xf]
  %v247 = vld [vmem:[%s0 + $0x3b0] sm:$0xf]
  %v248 = vld [vmem:[%s0 + $0x3b4] sm:$0xf]
  %v249 = vld [vmem:[%s0 + $0x3b8] sm:$0xf]
  %v250 = vld [vmem:[%s0 + $0x3bc] sm:$0xf]
  %v251 = vld [vmem:[%s0 + $0x3c0] sm:$0xf]
  %v252 = vld [vmem:[%s0 + $0x3c4] sm:$0xf]
  %v253 = vld [vmem:[%s0 + $0x3c8] sm:$0xf]
  %v254 = vld [vmem:[%s0 + $0x3cc] sm:$0xf]
  %v255 = vld [vmem:[%s0 + $0x3d0] sm:$0xf]
  %v256 = vld [vmem:[%s0 + $0x3d4] sm:$0xf]
  %v257 = vld [vmem:[%s0 + $0x3d8] sm:$0xf]
  %v258 = vld [vmem:[%s0 + $0x3dc] sm:$0xf]
  %v259 = vld [vmem:[%s0 + $0x3e0] sm:$0xf]
  %v260 = vld [vmem:[%s0 + $0x3e4] sm:$0xf]
  %v261 = vld [vmem:[%s0 + $0x3e8] sm:$0xf]
  %v262 = vld [vmem:[%s0 + $0x3ec] sm:$0xf]
  %v263 = vld [vmem:[%s0 + $0x3f0] sm:$0xf]
  %v264 = vld [vmem:[%s0 + $0x3f4] sm:$0xf]
  %v265 = vld [vmem:[%s0 + $0x3f8] sm:$0xf]
  %v266 = vld [vmem:[%s0 + $0x3fc] sm:$0xf]
  %v267 = vunpack.c.l.bf16 %v11
  %v268 = vunpack.c.l.bf16 %v12
  %v269 = vunpack.c.l.bf16 %v13
  %v270 = vunpack.c.l.bf16 %v14
  %v271 = vunpack.c.l.bf16 %v15
  %v272 = vunpack.c.l.bf16 %v16
  %v273 = vunpack.c.l.bf16 %v17
  %v274 = vunpack.c.l.bf16 %v18
  %v275 = vunpack.c.l.bf16 %v19
  %v276 = vunpack.c.l.bf16 %v20
  %v277 = vunpack.c.l.bf16 %v21
  %v278 = vunpack.c.l.bf16 %v22
  %v279 = vunpack.c.l.bf16 %v23
  %v280 = vunpack.c.l.bf16 %v24
  %v281 = vunpack.c.l.bf16 %v25
  %v282 = vunpack.c.l.bf16 %v26
  %v283 = vunpack.c.l.bf16 %v27
  %v284 = vunpack.c.l.bf16 %v28
  %v285 = vunpack.c.l.bf16 %v29
  %v286 = vunpack.c.l.bf16 %v30
  %v287 = vunpack.c.l.bf16 %v31
  %v288 = vunpack.c.l.bf16 %v32
  %v289 = vunpack.c.l.bf16 %v33
  %v290 = vunpack.c.l.bf16 %v34
  %v291 = vunpack.c.l.bf16 %v35
  %v292 = vunpack.c.l.bf16 %v36
  %v293 = vunpack.c.l.bf16 %v37
  %v294 = vunpack.c.l.bf16 %v38
  %v295 = vunpack.c.l.bf16 %v39
  %v296 = vunpack.c.l.bf16 %v40
  %v297 = vunpack.c.l.bf16 %v41
  %v298 = vunpack.c.l.bf16 %v42
  %v299 = vunpack.c.l.bf16 %v43
  %v300 = vunpack.c.l.bf16 %v44
  %v301 = vunpack.c.l.bf16 %v45
  %v302 = vunpack.c.l.bf16 %v46
  %v303 = vunpack.c.l.bf16 %v47
  %v304 = vunpack.c.l.bf16 %v48
  %v305 = vunpack.c.l.bf16 %v49
  %v306 = vunpack.c.l.bf16 %v50
  %v307 = vunpack.c.l.bf16 %v51
  %v308 = vunpack.c.l.bf16 %v52
  %v309 = vunpack.c.l.bf16 %v53
  %v310 = vunpack.c.l.bf16 %v54
  %v311 = vunpack.c.l.bf16 %v55
  %v312 = vunpack.c.l.bf16 %v56
  %v313 = vunpack.c.l.bf16 %v57
  %v314 = vunpack.c.l.bf16 %v58
  %v315 = vunpack.c.l.bf16 %v59
  %v316 = vunpack.c.l.bf16 %v60
  %v317 = vunpack.c.l.bf16 %v61
  %v318 = vunpack.c.l.bf16 %v62
  %v319 = vunpack.c.l.bf16 %v63
  %v320 = vunpack.c.l.bf16 %v64
  %v321 = vunpack.c.l.bf16 %v65
  %v322 = vunpack.c.l.bf16 %v66
  %v323 = vunpack.c.l.bf16 %v67
  %v324 = vunpack.c.l.bf16 %v68
  %v325 = vunpack.c.l.bf16 %v69
  %v326 = vunpack.c.l.bf16 %v70
  %v327 = vunpack.c.l.bf16 %v71
  %v328 = vunpack.c.l.bf16 %v72
  %v329 = vunpack.c.l.bf16 %v73
  %v330 = vunpack.c.l.bf16 %v74
  %v331 = vunpack.c.l.bf16 %v75
  %v332 = vunpack.c.l.bf16 %v76
  %v333 = vunpack.c.l.bf16 %v77
  %v334 = vunpack.c.l.bf16 %v78
  %v335 = vunpack.c.l.bf16 %v79
  %v336 = vunpack.c.l.bf16 %v80
  %v337 = vunpack.c.l.bf16 %v81
  %v338 = vunpack.c.l.bf16 %v82
  %v339 = vunpack.c.l.bf16 %v83
  %v340 = vunpack.c.l.bf16 %v84
  %v341 = vunpack.c.l.bf16 %v85
  %v342 = vunpack.c.l.bf16 %v86
  %v343 = vunpack.c.l.bf16 %v87
  %v344 = vunpack.c.l.bf16 %v88
  %v345 = vunpack.c.l.bf16 %v89
  %v346 = vunpack.c.l.bf16 %v90
  %v347 = vunpack.c.l.bf16 %v91
  %v348 = vunpack.c.l.bf16 %v92
  %v349 = vunpack.c.l.bf16 %v93
  %v350 = vunpack.c.l.bf16 %v94
  %v351 = vunpack.c.l.bf16 %v95
  %v352 = vunpack.c.l.bf16 %v96
  %v353 = vunpack.c.l.bf16 %v97
  %v354 = vunpack.c.l.bf16 %v98
  %v355 = vunpack.c.l.bf16 %v99
  %v356 = vunpack.c.l.bf16 %v100
  %v357 = vunpack.c.l.bf16 %v101
  %v358 = vunpack.c.l.bf16 %v102
  %v359 = vunpack.c.l.bf16 %v103
  %v360 = vunpack.c.l.bf16 %v104
  %v361 = vunpack.c.l.bf16 %v105
  %v362 = vunpack.c.l.bf16 %v106
  %v363 = vunpack.c.l.bf16 %v107
  %v364 = vunpack.c.l.bf16 %v108
  %v365 = vunpack.c.l.bf16 %v109
  %v366 = vunpack.c.l.bf16 %v110
  %v367 = vunpack.c.l.bf16 %v111
  %v368 = vunpack.c.l.bf16 %v112
  %v369 = vunpack.c.l.bf16 %v113
  %v370 = vunpack.c.l.bf16 %v114
  %v371 = vunpack.c.l.bf16 %v115
  %v372 = vunpack.c.l.bf16 %v116
  %v373 = vunpack.c.l.bf16 %v117
  %v374 = vunpack.c.l.bf16 %v118
  %v375 = vunpack.c.l.bf16 %v119
  %v376 = vunpack.c.l.bf16 %v120
  %v377 = vunpack.c.l.bf16 %v121
  %v378 = vunpack.c.l.bf16 %v122
  %v379 = vunpack.c.l.bf16 %v123
  %v380 = vunpack.c.l.bf16 %v124
  %v381 = vunpack.c.l.bf16 %v125
  %v382 = vunpack.c.l.bf16 %v126
  %v383 = vunpack.c.l.bf16 %v127
  %v384 = vunpack.c.l.bf16 %v128
  %v385 = vunpack.c.l.bf16 %v129
  %v386 = vunpack.c.l.bf16 %v130
  %v387 = vunpack.c.l.bf16 %v131
  %v388 = vunpack.c.l.bf16 %v132
  %v389 = vunpack.c.l.bf16 %v133
  %v390 = vunpack.c.l.bf16 %v134
  %v391 = vunpack.c.l.bf16 %v135
  %v392 = vunpack.c.l.bf16 %v136
  %v393 = vunpack.c.l.bf16 %v137
  %v394 = vunpack.c.l.bf16 %v138
  %v395 = vunpack.c.l.bf16 %v139
  %v396 = vunpack.c.l.bf16 %v140
  %v397 = vunpack.c.l.bf16 %v141
  %v398 = vunpack.c.l.bf16 %v142
  %v399 = vunpack.c.l.bf16 %v143
  %v400 = vunpack.c.l.bf16 %v144
  %v401 = vunpack.c.l.bf16 %v145
  %v402 = vunpack.c.l.bf16 %v146
  %v403 = vunpack.c.l.bf16 %v147
  %v404 = vunpack.c.l.bf16 %v148
  %v405 = vunpack.c.l.bf16 %v149
  %v406 = vunpack.c.l.bf16 %v150
  %v407 = vunpack.c.l.bf16 %v151
  %v408 = vunpack.c.l.bf16 %v152
  %v409 = vunpack.c.l.bf16 %v153
  %v410 = vunpack.c.l.bf16 %v154
  %v411 = vunpack.c.l.bf16 %v155
  %v412 = vunpack.c.l.bf16 %v156
  %v413 = vunpack.c.l.bf16 %v157
  %v414 = vunpack.c.l.bf16 %v158
  %v415 = vunpack.c.l.bf16 %v159
  %v416 = vunpack.c.l.bf16 %v160
  %v417 = vunpack.c.l.bf16 %v161
  %v418 = vunpack.c.l.bf16 %v162
  %v419 = vunpack.c.l.bf16 %v163
  %v420 = vunpack.c.l.bf16 %v164
  %v421 = vunpack.c.l.bf16 %v165
  %v422 = vunpack.c.l.bf16 %v166
  %v423 = vunpack.c.l.bf16 %v167
  %v424 = vunpack.c.l.bf16 %v168
  %v425 = vunpack.c.l.bf16 %v169
  %v426 = vunpack.c.l.bf16 %v170
  %v427 = vunpack.c.l.bf16 %v171
  %v428 = vunpack.c.l.bf16 %v172
  %v429 = vunpack.c.l.bf16 %v173
  %v430 = vunpack.c.l.bf16 %v174
  %v431 = vunpack.c.l.bf16 %v175
  %v432 = vunpack.c.l.bf16 %v176
  %v433 = vunpack.c.l.bf16 %v177
  %v434 = vunpack.c.l.bf16 %v178
  %v435 = vunpack.c.l.bf16 %v179
  %v436 = vunpack.c.l.bf16 %v180
  %v437 = vunpack.c.l.bf16 %v181
  %v438 = vunpack.c.l.bf16 %v182
  %v439 = vunpack.c.l.bf16 %v183
  %v440 = vunpack.c.l.bf16 %v184
  %v441 = vunpack.c.l.bf16 %v185
  %v442 = vunpack.c.l.bf16 %v186
  %v443 = vunpack.c.l.bf16 %v187
  %v444 = vunpack.c.l.bf16 %v188
  %v445 = vunpack.c.l.bf16 %v189
  %v446 = vunpack.c.l.bf16 %v190
  %v447 = vunpack.c.l.bf16 %v191
  %v448 = vunpack.c.l.bf16 %v192
  %v449 = vunpack.c.l.bf16 %v193
  %v450 = vunpack.c.l.bf16 %v194
  %v451 = vunpack.c.l.bf16 %v195
  %v452 = vunpack.c.l.bf16 %v196
  %v453 = vunpack.c.l.bf16 %v197
  %v454 = vunpack.c.l.bf16 %v198
  %v455 = vunpack.c.l.bf16 %v199
  %v456 = vunpack.c.l.bf16 %v200
  %v457 = vunpack.c.l.bf16 %v201
  %v458 = vunpack.c.l.bf16 %v202
  %v459 = vunpack.c.l.bf16 %v203
  %v460 = vunpack.c.l.bf16 %v204
  %v461 = vunpack.c.l.bf16 %v205
  %v462 = vunpack.c.l.bf16 %v206
  %v463 = vunpack.c.l.bf16 %v207
  %v464 = vunpack.c.l.bf16 %v208
  %v465 = vunpack.c.l.bf16 %v209
  %v466 = vunpack.c.l.bf16 %v210
  %v467 = vunpack.c.l.bf16 %v211
  %v468 = vunpack.c.l.bf16 %v212
  %v469 = vunpack.c.l.bf16 %v213
  %v470 = vunpack.c.l.bf16 %v214
  %v471 = vunpack.c.l.bf16 %v215
  %v472 = vunpack.c.l.bf16 %v216
  %v473 = vunpack.c.l.bf16 %v217
  %v474 = vunpack.c.l.bf16 %v218
  %v475 = vunpack.c.l.bf16 %v219
  %v476 = vunpack.c.l.bf16 %v220
  %v477 = vunpack.c.l.bf16 %v221
  %v478 = vunpack.c.l.bf16 %v222
  %v479 = vunpack.c.l.bf16 %v223
  %v480 = vunpack.c.l.bf16 %v224
  %v481 = vunpack.c.l.bf16 %v225
  %v482 = vunpack.c.l.bf16 %v226
  %v483 = vunpack.c.l.bf16 %v227
  %v484 = vunpack.c.l.bf16 %v228
  %v485 = vunpack.c.l.bf16 %v229
  %v486 = vunpack.c.l.bf16 %v230
  %v487 = vunpack.c.l.bf16 %v231
  %v488 = vunpack.c.l.bf16 %v232
  %v489 = vunpack.c.l.bf16 %v233
  %v490 = vunpack.c.l.bf16 %v234
  %v491 = vunpack.c.l.bf16 %v235
  %v492 = vunpack.c.l.bf16 %v236
  %v493 = vunpack.c.l.bf16 %v237
  %v494 = vunpack.c.l.bf16 %v238
  %v495 = vunpack.c.l.bf16 %v239
  %v496 = vunpack.c.l.bf16 %v240
  %v497 = vunpack.c.l.bf16 %v241
  %v498 = vunpack.c.l.bf16 %v242
  %v499 = vunpack.c.l.bf16 %v243
  %v500 = vunpack.c.l.bf16 %v244
  %v501 = vunpack.c.l.bf16 %v245
  %v502 = vunpack.c.l.bf16 %v246
  %v503 = vunpack.c.l.bf16 %v247
  %v504 = vunpack.c.l.bf16 %v248
  %v505 = vunpack.c.l.bf16 %v249
  %v506 = vunpack.c.l.bf16 %v250
  %v507 = vunpack.c.l.bf16 %v251
  %v508 = vunpack.c.l.bf16 %v252
  %v509 = vunpack.c.l.bf16 %v253
  %v510 = vunpack.c.l.bf16 %v254
  %v511 = vunpack.c.l.bf16 %v255
  %v512 = vunpack.c.l.bf16 %v256
  %v513 = vunpack.c.l.bf16 %v257
  %v514 = vunpack.c.l.bf16 %v258
  %v515 = vunpack.c.l.bf16 %v259
  %v516 = vunpack.c.l.bf16 %v260
  %v517 = vunpack.c.l.bf16 %v261
  %v518 = vunpack.c.l.bf16 %v262
  %v519 = vunpack.c.l.bf16 %v263
  %v520 = vunpack.c.l.bf16 %v264
  %v521 = vunpack.c.l.bf16 %v265
  %v522 = vunpack.c.l.bf16 %v266
  %v523 = vld [vmem:[%s1] sm:$0x1]
  %v524 = vlaneseq
  %v525 = vshrl.u32 %v524, 7
  %v526 = vsub.s32 0, %v525
  %v527 = vrot.slane %v523, %v526
  %v528 = vmul.f32 %v267, %v527
  %v529 = vmul.f32 %v268, %v527
  %v530 = vmul.f32 %v269, %v527
  %v531 = vmul.f32 %v270, %v527
  %v532 = vmul.f32 %v271, %v527
  %v533 = vmul.f32 %v272, %v527
  %v534 = vmul.f32 %v273, %v527
  %v535 = vmul.f32 %v274, %v527
  %v536 = vmul.f32 %v275, %v527
  %v537 = vmul.f32 %v276, %v527
  %v538 = vmul.f32 %v277, %v527
  %v539 = vmul.f32 %v278, %v527
  %v540 = vmul.f32 %v279, %v527
  %v541 = vmul.f32 %v280, %v527
  %v542 = vmul.f32 %v281, %v527
  %v543 = vmul.f32 %v282, %v527
  %v544 = vmul.f32 %v283, %v527
  %v545 = vmul.f32 %v284, %v527
  %v546 = vmul.f32 %v285, %v527
  %v547 = vmul.f32 %v286, %v527
  %v548 = vmul.f32 %v287, %v527
  %v549 = vmul.f32 %v288, %v527
  %v550 = vmul.f32 %v289, %v527
  %v551 = vmul.f32 %v290, %v527
  %v552 = vmul.f32 %v291, %v527
  %v553 = vmul.f32 %v292, %v527
  %v554 = vmul.f32 %v293, %v527
  %v555 = vmul.f32 %v294, %v527
  %v556 = vmul.f32 %v295, %v527
  %v557 = vmul.f32 %v296, %v527
  %v558 = vmul.f32 %v297, %v527
  %v559 = vmul.f32 %v298, %v527
  %v560 = vmul.f32 %v299, %v527
  %v561 = vmul.f32 %v300, %v527
  %v562 = vmul.f32 %v301, %v527
  %v563 = vmul.f32 %v302, %v527
  %v564 = vmul.f32 %v303, %v527
  %v565 = vmul.f32 %v304, %v527
  %v566 = vmul.f32 %v305, %v527
  %v567 = vmul.f32 %v306, %v527
  %v568 = vmul.f32 %v307, %v527
  %v569 = vmul.f32 %v308, %v527
  %v570 = vmul.f32 %v309, %v527
  %v571 = vmul.f32 %v310, %v527
  %v572 = vmul.f32 %v311, %v527
  %v573 = vmul.f32 %v312, %v527
  %v574 = vmul.f32 %v313, %v527
  %v575 = vmul.f32 %v314, %v527
  %v576 = vmul.f32 %v315, %v527
  %v577 = vmul.f32 %v316, %v527
  %v578 = vmul.f32 %v317, %v527
  %v579 = vmul.f32 %v318, %v527
  %v580 = vmul.f32 %v319, %v527
  %v581 = vmul.f32 %v320, %v527
  %v582 = vmul.f32 %v321, %v527
  %v583 = vmul.f32 %v322, %v527
  %v584 = vmul.f32 %v323, %v527
  %v585 = vmul.f32 %v324, %v527
  %v586 = vmul.f32 %v325, %v527
  %v587 = vmul.f32 %v326, %v527
  %v588 = vmul.f32 %v327, %v527
  %v589 = vmul.f32 %v328, %v527
  %v590 = vmul.f32 %v329, %v527
  %v591 = vmul.f32 %v330, %v527
  %v592 = vmul.f32 %v331, %v527
  %v593 = vmul.f32 %v332, %v527
  %v594 = vmul.f32 %v333, %v527
  %v595 = vmul.f32 %v334, %v527
  %v596 = vmul.f32 %v335, %v527
  %v597 = vmul.f32 %v336, %v527
  %v598 = vmul.f32 %v337, %v527
  %v599 = vmul.f32 %v338, %v527
  %v600 = vmul.f32 %v339, %v527
  %v601 = vmul.f32 %v340, %v527
  %v602 = vmul.f32 %v341, %v527
  %v603 = vmul.f32 %v342, %v527
  %v604 = vmul.f32 %v343, %v527
  %v605 = vmul.f32 %v344, %v527
  %v606 = vmul.f32 %v345, %v527
  %v607 = vmul.f32 %v346, %v527
  %v608 = vmul.f32 %v347, %v527
  %v609 = vmul.f32 %v348, %v527
  %v610 = vmul.f32 %v349, %v527
  %v611 = vmul.f32 %v350, %v527
  %v612 = vmul.f32 %v351, %v527
  %v613 = vmul.f32 %v352, %v527
  %v614 = vmul.f32 %v353, %v527
  %v615 = vmul.f32 %v354, %v527
  %v616 = vmul.f32 %v355, %v527
  %v617 = vmul.f32 %v356, %v527
  %v618 = vmul.f32 %v357, %v527
  %v619 = vmul.f32 %v358, %v527
  %v620 = vmul.f32 %v359, %v527
  %v621 = vmul.f32 %v360, %v527
  %v622 = vmul.f32 %v361, %v527
  %v623 = vmul.f32 %v362, %v527
  %v624 = vmul.f32 %v363, %v527
  %v625 = vmul.f32 %v364, %v527
  %v626 = vmul.f32 %v365, %v527
  %v627 = vmul.f32 %v366, %v527
  %v628 = vmul.f32 %v367, %v527
  %v629 = vmul.f32 %v368, %v527
  %v630 = vmul.f32 %v369, %v527
  %v631 = vmul.f32 %v370, %v527
  %v632 = vmul.f32 %v371, %v527
  %v633 = vmul.f32 %v372, %v527
  %v634 = vmul.f32 %v373, %v527
  %v635 = vmul.f32 %v374, %v527
  %v636 = vmul.f32 %v375, %v527
  %v637 = vmul.f32 %v376, %v527
  %v638 = vmul.f32 %v377, %v527
  %v639 = vmul.f32 %v378, %v527
  %v640 = vmul.f32 %v379, %v527
  %v641 = vmul.f32 %v380, %v527
  %v642 = vmul.f32 %v381, %v527
  %v643 = vmul.f32 %v382, %v527
  %v644 = vmul.f32 %v383, %v527
  %v645 = vmul.f32 %v384, %v527
  %v646 = vmul.f32 %v385, %v527
  %v647 = vmul.f32 %v386, %v527
  %v648 = vmul.f32 %v387, %v527
  %v649 = vmul.f32 %v388, %v527
  %v650 = vmul.f32 %v389, %v527
  %v651 = vmul.f32 %v390, %v527
  %v652 = vmul.f32 %v391, %v527
  %v653 = vmul.f32 %v392, %v527
  %v654 = vmul.f32 %v393, %v527
  %v655 = vmul.f32 %v394, %v527
  %v656 = vmul.f32 %v395, %v527
  %v657 = vmul.f32 %v396, %v527
  %v658 = vmul.f32 %v397, %v527
  %v659 = vmul.f32 %v398, %v527
  %v660 = vmul.f32 %v399, %v527
  %v661 = vmul.f32 %v400, %v527
  %v662 = vmul.f32 %v401, %v527
  %v663 = vmul.f32 %v402, %v527
  %v664 = vmul.f32 %v403, %v527
  %v665 = vmul.f32 %v404, %v527
  %v666 = vmul.f32 %v405, %v527
  %v667 = vmul.f32 %v406, %v527
  %v668 = vmul.f32 %v407, %v527
  %v669 = vmul.f32 %v408, %v527
  %v670 = vmul.f32 %v409, %v527
  %v671 = vmul.f32 %v410, %v527
  %v672 = vmul.f32 %v411, %v527
  %v673 = vmul.f32 %v412, %v527
  %v674 = vmul.f32 %v413, %v527
  %v675 = vmul.f32 %v414, %v527
  %v676 = vmul.f32 %v415, %v527
  %v677 = vmul.f32 %v416, %v527
  %v678 = vmul.f32 %v417, %v527
  %v679 = vmul.f32 %v418, %v527
  %v680 = vmul.f32 %v419, %v527
  %v681 = vmul.f32 %v420, %v527
  %v682 = vmul.f32 %v421, %v527
  %v683 = vmul.f32 %v422, %v527
  %v684 = vmul.f32 %v423, %v527
  %v685 = vmul.f32 %v424, %v527
  %v686 = vmul.f32 %v425, %v527
  %v687 = vmul.f32 %v426, %v527
  %v688 = vmul.f32 %v427, %v527
  %v689 = vmul.f32 %v428, %v527
  %v690 = vmul.f32 %v429, %v527
  %v691 = vmul.f32 %v430, %v527
  %v692 = vmul.f32 %v431, %v527
  %v693 = vmul.f32 %v432, %v527
  %v694 = vmul.f32 %v433, %v527
  %v695 = vmul.f32 %v434, %v527
  %v696 = vmul.f32 %v435, %v527
  %v697 = vmul.f32 %v436, %v527
  %v698 = vmul.f32 %v437, %v527
  %v699 = vmul.f32 %v438, %v527
  %v700 = vmul.f32 %v439, %v527
  %v701 = vmul.f32 %v440, %v527
  %v702 = vmul.f32 %v441, %v527
  %v703 = vmul.f32 %v442, %v527
  %v704 = vmul.f32 %v443, %v527
  %v705 = vmul.f32 %v444, %v527
  %v706 = vmul.f32 %v445, %v527
  %v707 = vmul.f32 %v446, %v527
  %v708 = vmul.f32 %v447, %v527
  %v709 = vmul.f32 %v448, %v527
  %v710 = vmul.f32 %v449, %v527
  %v711 = vmul.f32 %v450, %v527
  %v712 = vmul.f32 %v451, %v527
  %v713 = vmul.f32 %v452, %v527
  %v714 = vmul.f32 %v453, %v527
  %v715 = vmul.f32 %v454, %v527
  %v716 = vmul.f32 %v455, %v527
  %v717 = vmul.f32 %v456, %v527
  %v718 = vmul.f32 %v457, %v527
  %v719 = vmul.f32 %v458, %v527
  %v720 = vmul.f32 %v459, %v527
  %v721 = vmul.f32 %v460, %v527
  %v722 = vmul.f32 %v461, %v527
  %v723 = vmul.f32 %v462, %v527
  %v724 = vmul.f32 %v463, %v527
  %v725 = vmul.f32 %v464, %v527
  %v726 = vmul.f32 %v465, %v527
  %v727 = vmul.f32 %v466, %v527
  %v728 = vmul.f32 %v467, %v527
  %v729 = vmul.f32 %v468, %v527
  %v730 = vmul.f32 %v469, %v527
  %v731 = vmul.f32 %v470, %v527
  %v732 = vmul.f32 %v471, %v527
  %v733 = vmul.f32 %v472, %v527
  %v734 = vmul.f32 %v473, %v527
  %v735 = vmul.f32 %v474, %v527
  %v736 = vmul.f32 %v475, %v527
  %v737 = vmul.f32 %v476, %v527
  %v738 = vmul.f32 %v477, %v527
  %v739 = vmul.f32 %v478, %v527
  %v740 = vmul.f32 %v479, %v527
  %v741 = vmul.f32 %v480, %v527
  %v742 = vmul.f32 %v481, %v527
  %v743 = vmul.f32 %v482, %v527
  %v744 = vmul.f32 %v483, %v527
  %v745 = vmul.f32 %v484, %v527
  %v746 = vmul.f32 %v485, %v527
  %v747 = vmul.f32 %v486, %v527
  %v748 = vmul.f32 %v487, %v527
  %v749 = vmul.f32 %v488, %v527
  %v750 = vmul.f32 %v489, %v527
  %v751 = vmul.f32 %v490, %v527
  %v752 = vmul.f32 %v491, %v527
  %v753 = vmul.f32 %v492, %v527
  %v754 = vmul.f32 %v493, %v527
  %v755 = vmul.f32 %v494, %v527
  %v756 = vmul.f32 %v495, %v527
  %v757 = vmul.f32 %v496, %v527
  %v758 = vmul.f32 %v497, %v527
  %v759 = vmul.f32 %v498, %v527
  %v760 = vmul.f32 %v499, %v527
  %v761 = vmul.f32 %v500, %v527
  %v762 = vmul.f32 %v501, %v527
  %v763 = vmul.f32 %v502, %v527
  %v764 = vmul.f32 %v503, %v527
  %v765 = vmul.f32 %v504, %v527
  %v766 = vmul.f32 %v505, %v527
  %v767 = vmul.f32 %v506, %v527
  %v768 = vmul.f32 %v507, %v527
  %v769 = vmul.f32 %v508, %v527
  %v770 = vmul.f32 %v509, %v527
  %v771 = vmul.f32 %v510, %v527
  %v772 = vmul.f32 %v511, %v527
  %v773 = vmul.f32 %v512, %v527
  %v774 = vmul.f32 %v513, %v527
  %v775 = vmul.f32 %v514, %v527
  %v776 = vmul.f32 %v515, %v527
  %v777 = vmul.f32 %v516, %v527
  %v778 = vmul.f32 %v517, %v527
  %v779 = vmul.f32 %v518, %v527
  %v780 = vmul.f32 %v519, %v527
  %v781 = vmul.f32 %v520, %v527
  %v782 = vmul.f32 %v521, %v527
  %v783 = vmul.f32 %v522, %v527
  %v784 = vld [vmem:[%s1 + $0x1] sm:$0x1]
  %v785 = vlaneseq
  %v786 = vshrl.u32 %v785, 7
  %v787 = vsub.s32 0, %v786
  %v788 = vrot.slane %v784, %v787
  %v789 = vadd.f32 %v528, %v788
  %v790 = vadd.f32 %v529, %v788
  %v791 = vadd.f32 %v530, %v788
  %v792 = vadd.f32 %v531, %v788
  %v793 = vadd.f32 %v532, %v788
  %v794 = vadd.f32 %v533, %v788
  %v795 = vadd.f32 %v534, %v788
  %v796 = vadd.f32 %v535, %v788
  %v797 = vadd.f32 %v536, %v788
  %v798 = vadd.f32 %v537, %v788
  %v799 = vadd.f32 %v538, %v788
  %v800 = vadd.f32 %v539, %v788
  %v801 = vadd.f32 %v540, %v788
  %v802 = vadd.f32 %v541, %v788
  %v803 = vadd.f32 %v542, %v788
  %v804 = vadd.f32 %v543, %v788
  %v805 = vadd.f32 %v544, %v788
  %v806 = vadd.f32 %v545, %v788
  %v807 = vadd.f32 %v546, %v788
  %v808 = vadd.f32 %v547, %v788
  %v809 = vadd.f32 %v548, %v788
  %v810 = vadd.f32 %v549, %v788
  %v811 = vadd.f32 %v550, %v788
  %v812 = vadd.f32 %v551, %v788
  %v813 = vadd.f32 %v552, %v788
  %v814 = vadd.f32 %v553, %v788
  %v815 = vadd.f32 %v554, %v788
  %v816 = vadd.f32 %v555, %v788
  %v817 = vadd.f32 %v556, %v788
  %v818 = vadd.f32 %v557, %v788
  %v819 = vadd.f32 %v558, %v788
  %v820 = vadd.f32 %v559, %v788
  %v821 = vadd.f32 %v560, %v788
  %v822 = vadd.f32 %v561, %v788
  %v823 = vadd.f32 %v562, %v788
  %v824 = vadd.f32 %v563, %v788
  %v825 = vadd.f32 %v564, %v788
  %v826 = vadd.f32 %v565, %v788
  %v827 = vadd.f32 %v566, %v788
  %v828 = vadd.f32 %v567, %v788
  %v829 = vadd.f32 %v568, %v788
  %v830 = vadd.f32 %v569, %v788
  %v831 = vadd.f32 %v570, %v788
  %v832 = vadd.f32 %v571, %v788
  %v833 = vadd.f32 %v572, %v788
  %v834 = vadd.f32 %v573, %v788
  %v835 = vadd.f32 %v574, %v788
  %v836 = vadd.f32 %v575, %v788
  %v837 = vadd.f32 %v576, %v788
  %v838 = vadd.f32 %v577, %v788
  %v839 = vadd.f32 %v578, %v788
  %v840 = vadd.f32 %v579, %v788
  %v841 = vadd.f32 %v580, %v788
  %v842 = vadd.f32 %v581, %v788
  %v843 = vadd.f32 %v582, %v788
  %v844 = vadd.f32 %v583, %v788
  %v845 = vadd.f32 %v584, %v788
  %v846 = vadd.f32 %v585, %v788
  %v847 = vadd.f32 %v586, %v788
  %v848 = vadd.f32 %v587, %v788
  %v849 = vadd.f32 %v588, %v788
  %v850 = vadd.f32 %v589, %v788
  %v851 = vadd.f32 %v590, %v788
  %v852 = vadd.f32 %v591, %v788
  %v853 = vadd.f32 %v592, %v788
  %v854 = vadd.f32 %v593, %v788
  %v855 = vadd.f32 %v594, %v788
  %v856 = vadd.f32 %v595, %v788
  %v857 = vadd.f32 %v596, %v788
  %v858 = vadd.f32 %v597, %v788
  %v859 = vadd.f32 %v598, %v788
  %v860 = vadd.f32 %v599, %v788
  %v861 = vadd.f32 %v600, %v788
  %v862 = vadd.f32 %v601, %v788
  %v863 = vadd.f32 %v602, %v788
  %v864 = vadd.f32 %v603, %v788
  %v865 = vadd.f32 %v604, %v788
  %v866 = vadd.f32 %v605, %v788
  %v867 = vadd.f32 %v606, %v788
  %v868 = vadd.f32 %v607, %v788
  %v869 = vadd.f32 %v608, %v788
  %v870 = vadd.f32 %v609, %v788
  %v871 = vadd.f32 %v610, %v788
  %v872 = vadd.f32 %v611, %v788
  %v873 = vadd.f32 %v612, %v788
  %v874 = vadd.f32 %v613, %v788
  %v875 = vadd.f32 %v614, %v788
  %v876 = vadd.f32 %v615, %v788
  %v877 = vadd.f32 %v616, %v788
  %v878 = vadd.f32 %v617, %v788
  %v879 = vadd.f32 %v618, %v788
  %v880 = vadd.f32 %v619, %v788
  %v881 = vadd.f32 %v620, %v788
  %v882 = vadd.f32 %v621, %v788
  %v883 = vadd.f32 %v622, %v788
  %v884 = vadd.f32 %v623, %v788
  %v885 = vadd.f32 %v624, %v788
  %v886 = vadd.f32 %v625, %v788
  %v887 = vadd.f32 %v626, %v788
  %v888 = vadd.f32 %v627, %v788
  %v889 = vadd.f32 %v628, %v788
  %v890 = vadd.f32 %v629, %v788
  %v891 = vadd.f32 %v630, %v788
  %v892 = vadd.f32 %v631, %v788
  %v893 = vadd.f32 %v632, %v788
  %v894 = vadd.f32 %v633, %v788
  %v895 = vadd.f32 %v634, %v788
  %v896 = vadd.f32 %v635, %v788
  %v897 = vadd.f32 %v636, %v788
  %v898 = vadd.f32 %v637, %v788
  %v899 = vadd.f32 %v638, %v788
  %v900 = vadd.f32 %v639, %v788
  %v901 = vadd.f32 %v640, %v788
  %v902 = vadd.f32 %v641, %v788
  %v903 = vadd.f32 %v642, %v788
  %v904 = vadd.f32 %v643, %v788
  %v905 = vadd.f32 %v644, %v788
  %v906 = vadd.f32 %v645, %v788
  %v907 = vadd.f32 %v646, %v788
  %v908 = vadd.f32 %v647, %v788
  %v909 = vadd.f32 %v648, %v788
  %v910 = vadd.f32 %v649, %v788
  %v911 = vadd.f32 %v650, %v788
  %v912 = vadd.f32 %v651, %v788
  %v913 = vadd.f32 %v652, %v788
  %v914 = vadd.f32 %v653, %v788
  %v915 = vadd.f32 %v654, %v788
  %v916 = vadd.f32 %v655, %v788
  %v917 = vadd.f32 %v656, %v788
  %v918 = vadd.f32 %v657, %v788
  %v919 = vadd.f32 %v658, %v788
  %v920 = vadd.f32 %v659, %v788
  %v921 = vadd.f32 %v660, %v788
  %v922 = vadd.f32 %v661, %v788
  %v923 = vadd.f32 %v662, %v788
  %v924 = vadd.f32 %v663, %v788
  %v925 = vadd.f32 %v664, %v788
  %v926 = vadd.f32 %v665, %v788
  %v927 = vadd.f32 %v666, %v788
  %v928 = vadd.f32 %v667, %v788
  %v929 = vadd.f32 %v668, %v788
  %v930 = vadd.f32 %v669, %v788
  %v931 = vadd.f32 %v670, %v788
  %v932 = vadd.f32 %v671, %v788
  %v933 = vadd.f32 %v672, %v788
  %v934 = vadd.f32 %v673, %v788
  %v935 = vadd.f32 %v674, %v788
  %v936 = vadd.f32 %v675, %v788
  %v937 = vadd.f32 %v676, %v788
  %v938 = vadd.f32 %v677, %v788
  %v939 = vadd.f32 %v678, %v788
  %v940 = vadd.f32 %v679, %v788
  %v941 = vadd.f32 %v680, %v788
  %v942 = vadd.f32 %v681, %v788
  %v943 = vadd.f32 %v682, %v788
  %v944 = vadd.f32 %v683, %v788
  %v945 = vadd.f32 %v684, %v788
  %v946 = vadd.f32 %v685, %v788
  %v947 = vadd.f32 %v686, %v788
  %v948 = vadd.f32 %v687, %v788
  %v949 = vadd.f32 %v688, %v788
  %v950 = vadd.f32 %v689, %v788
  %v951 = vadd.f32 %v690, %v788
  %v952 = vadd.f32 %v691, %v788
  %v953 = vadd.f32 %v692, %v788
  %v954 = vadd.f32 %v693, %v788
  %v955 = vadd.f32 %v694, %v788
  %v956 = vadd.f32 %v695, %v788
  %v957 = vadd.f32 %v696, %v788
  %v958 = vadd.f32 %v697, %v788
  %v959 = vadd.f32 %v698, %v788
  %v960 = vadd.f32 %v699, %v788
  %v961 = vadd.f32 %v700, %v788
  %v962 = vadd.f32 %v701, %v788
  %v963 = vadd.f32 %v702, %v788
  %v964 = vadd.f32 %v703, %v788
  %v965 = vadd.f32 %v704, %v788
  %v966 = vadd.f32 %v705, %v788
  %v967 = vadd.f32 %v706, %v788
  %v968 = vadd.f32 %v707, %v788
  %v969 = vadd.f32 %v708, %v788
  %v970 = vadd.f32 %v709, %v788
  %v971 = vadd.f32 %v710, %v788
  %v972 = vadd.f32 %v711, %v788
  %v973 = vadd.f32 %v712, %v788
  %v974 = vadd.f32 %v713, %v788
  %v975 = vadd.f32 %v714, %v788
  %v976 = vadd.f32 %v715, %v788
  %v977 = vadd.f32 %v716, %v788
  %v978 = vadd.f32 %v717, %v788
  %v979 = vadd.f32 %v718, %v788
  %v980 = vadd.f32 %v719, %v788
  %v981 = vadd.f32 %v720, %v788
  %v982 = vadd.f32 %v721, %v788
  %v983 = vadd.f32 %v722, %v788
  %v984 = vadd.f32 %v723, %v788
  %v985 = vadd.f32 %v724, %v788
  %v986 = vadd.f32 %v725, %v788
  %v987 = vadd.f32 %v726, %v788
  %v988 = vadd.f32 %v727, %v788
  %v989 = vadd.f32 %v728, %v788
  %v990 = vadd.f32 %v729, %v788
  %v991 = vadd.f32 %v730, %v788
  %v992 = vadd.f32 %v731, %v788
  %v993 = vadd.f32 %v732, %v788
  %v994 = vadd.f32 %v733, %v788
  %v995 = vadd.f32 %v734, %v788
  %v996 = vadd.f32 %v735, %v788
  %v997 = vadd.f32 %v736, %v788
  %v998 = vadd.f32 %v737, %v788
  %v999 = vadd.f32 %v738, %v788
  %v1000 = vadd.f32 %v739, %v788
  %v1001 = vadd.f32 %v740, %v788
  %v1002 = vadd.f32 %v741, %v788
  %v1003 = vadd.f32 %v742, %v788
  %v1004 = vadd.f32 %v743, %v788
  %v1005 = vadd.f32 %v744, %v788
  %v1006 = vadd.f32 %v745, %v788
  %v1007 = vadd.f32 %v746, %v788
  %v1008 = vadd.f32 %v747, %v788
  %v1009 = vadd.f32 %v748, %v788
  %v1010 = vadd.f32 %v749, %v788
  %v1011 = vadd.f32 %v750, %v788
  %v1012 = vadd.f32 %v751, %v788
  %v1013 = vadd.f32 %v752, %v788
  %v1014 = vadd.f32 %v753, %v788
  %v1015 = vadd.f32 %v754, %v788
  %v1016 = vadd.f32 %v755, %v788
  %v1017 = vadd.f32 %v756, %v788
  %v1018 = vadd.f32 %v757, %v788
  %v1019 = vadd.f32 %v758, %v788
  %v1020 = vadd.f32 %v759, %v788
  %v1021 = vadd.f32 %v760, %v788
  %v1022 = vadd.f32 %v761, %v788
  %v1023 = vadd.f32 %v762, %v788
  %v1024 = vadd.f32 %v763, %v788
  %v1025 = vadd.f32 %v764, %v788
  %v1026 = vadd.f32 %v765, %v788
  %v1027 = vadd.f32 %v766, %v788
  %v1028 = vadd.f32 %v767, %v788
  %v1029 = vadd.f32 %v768, %v788
  %v1030 = vadd.f32 %v769, %v788
  %v1031 = vadd.f32 %v770, %v788
  %v1032 = vadd.f32 %v771, %v788
  %v1033 = vadd.f32 %v772, %v788
  %v1034 = vadd.f32 %v773, %v788
  %v1035 = vadd.f32 %v774, %v788
  %v1036 = vadd.f32 %v775, %v788
  %v1037 = vadd.f32 %v776, %v788
  %v1038 = vadd.f32 %v777, %v788
  %v1039 = vadd.f32 %v778, %v788
  %v1040 = vadd.f32 %v779, %v788
  %v1041 = vadd.f32 %v780, %v788
  %v1042 = vadd.f32 %v781, %v788
  %v1043 = vadd.f32 %v782, %v788
  %v1044 = vadd.f32 %v783, %v788
  %vm1045 = vcmp.gt.f32.partialorder %v789, 0.0
  %vm1046 = vcmp.gt.f32.partialorder %v790, 0.0
  %vm1047 = vcmp.gt.f32.partialorder %v791, 0.0
  %vm1048 = vcmp.gt.f32.partialorder %v792, 0.0
  %vm1049 = vcmp.gt.f32.partialorder %v793, 0.0
  %vm1050 = vcmp.gt.f32.partialorder %v794, 0.0
  %vm1051 = vcmp.gt.f32.partialorder %v795, 0.0
  %vm1052 = vcmp.gt.f32.partialorder %v796, 0.0
  %vm1053 = vcmp.gt.f32.partialorder %v797, 0.0
  %vm1054 = vcmp.gt.f32.partialorder %v798, 0.0
  %vm1055 = vcmp.gt.f32.partialorder %v799, 0.0
  %vm1056 = vcmp.gt.f32.partialorder %v800, 0.0
  %vm1057 = vcmp.gt.f32.partialorder %v801, 0.0
  %vm1058 = vcmp.gt.f32.partialorder %v802, 0.0
  %vm1059 = vcmp.gt.f32.partialorder %v803, 0.0
  %vm1060 = vcmp.gt.f32.partialorder %v804, 0.0
  %vm1061 = vcmp.gt.f32.partialorder %v805, 0.0
  %vm1062 = vcmp.gt.f32.partialorder %v806, 0.0
  %vm1063 = vcmp.gt.f32.partialorder %v807, 0.0
  %vm1064 = vcmp.gt.f32.partialorder %v808, 0.0
  %vm1065 = vcmp.gt.f32.partialorder %v809, 0.0
  %vm1066 = vcmp.gt.f32.partialorder %v810, 0.0
  %vm1067 = vcmp.gt.f32.partialorder %v811, 0.0
  %vm1068 = vcmp.gt.f32.partialorder %v812, 0.0
  %vm1069 = vcmp.gt.f32.partialorder %v813, 0.0
  %vm1070 = vcmp.gt.f32.partialorder %v814, 0.0
  %vm1071 = vcmp.gt.f32.partialorder %v815, 0.0
  %vm1072 = vcmp.gt.f32.partialorder %v816, 0.0
  %vm1073 = vcmp.gt.f32.partialorder %v817, 0.0
  %vm1074 = vcmp.gt.f32.partialorder %v818, 0.0
  %vm1075 = vcmp.gt.f32.partialorder %v819, 0.0
  %vm1076 = vcmp.gt.f32.partialorder %v820, 0.0
  %vm1077 = vcmp.gt.f32.partialorder %v821, 0.0
  %vm1078 = vcmp.gt.f32.partialorder %v822, 0.0
  %vm1079 = vcmp.gt.f32.partialorder %v823, 0.0
  %vm1080 = vcmp.gt.f32.partialorder %v824, 0.0
  %vm1081 = vcmp.gt.f32.partialorder %v825, 0.0
  %vm1082 = vcmp.gt.f32.partialorder %v826, 0.0
  %vm1083 = vcmp.gt.f32.partialorder %v827, 0.0
  %vm1084 = vcmp.gt.f32.partialorder %v828, 0.0
  %vm1085 = vcmp.gt.f32.partialorder %v829, 0.0
  %vm1086 = vcmp.gt.f32.partialorder %v830, 0.0
  %vm1087 = vcmp.gt.f32.partialorder %v831, 0.0
  %vm1088 = vcmp.gt.f32.partialorder %v832, 0.0
  %vm1089 = vcmp.gt.f32.partialorder %v833, 0.0
  %vm1090 = vcmp.gt.f32.partialorder %v834, 0.0
  %vm1091 = vcmp.gt.f32.partialorder %v835, 0.0
  %vm1092 = vcmp.gt.f32.partialorder %v836, 0.0
  %vm1093 = vcmp.gt.f32.partialorder %v837, 0.0
  %vm1094 = vcmp.gt.f32.partialorder %v838, 0.0
  %vm1095 = vcmp.gt.f32.partialorder %v839, 0.0
  %vm1096 = vcmp.gt.f32.partialorder %v840, 0.0
  %vm1097 = vcmp.gt.f32.partialorder %v841, 0.0
  %vm1098 = vcmp.gt.f32.partialorder %v842, 0.0
  %vm1099 = vcmp.gt.f32.partialorder %v843, 0.0
  %vm1100 = vcmp.gt.f32.partialorder %v844, 0.0
  %vm1101 = vcmp.gt.f32.partialorder %v845, 0.0
  %vm1102 = vcmp.gt.f32.partialorder %v846, 0.0
  %vm1103 = vcmp.gt.f32.partialorder %v847, 0.0
  %vm1104 = vcmp.gt.f32.partialorder %v848, 0.0
  %vm1105 = vcmp.gt.f32.partialorder %v849, 0.0
  %vm1106 = vcmp.gt.f32.partialorder %v850, 0.0
  %vm1107 = vcmp.gt.f32.partialorder %v851, 0.0
  %vm1108 = vcmp.gt.f32.partialorder %v852, 0.0
  %vm1109 = vcmp.gt.f32.partialorder %v853, 0.0
  %vm1110 = vcmp.gt.f32.partialorder %v854, 0.0
  %vm1111 = vcmp.gt.f32.partialorder %v855, 0.0
  %vm1112 = vcmp.gt.f32.partialorder %v856, 0.0
  %vm1113 = vcmp.gt.f32.partialorder %v857, 0.0
  %vm1114 = vcmp.gt.f32.partialorder %v858, 0.0
  %vm1115 = vcmp.gt.f32.partialorder %v859, 0.0
  %vm1116 = vcmp.gt.f32.partialorder %v860, 0.0
  %vm1117 = vcmp.gt.f32.partialorder %v861, 0.0
  %vm1118 = vcmp.gt.f32.partialorder %v862, 0.0
  %vm1119 = vcmp.gt.f32.partialorder %v863, 0.0
  %vm1120 = vcmp.gt.f32.partialorder %v864, 0.0
  %vm1121 = vcmp.gt.f32.partialorder %v865, 0.0
  %vm1122 = vcmp.gt.f32.partialorder %v866, 0.0
  %vm1123 = vcmp.gt.f32.partialorder %v867, 0.0
  %vm1124 = vcmp.gt.f32.partialorder %v868, 0.0
  %vm1125 = vcmp.gt.f32.partialorder %v869, 0.0
  %vm1126 = vcmp.gt.f32.partialorder %v870, 0.0
  %vm1127 = vcmp.gt.f32.partialorder %v871, 0.0
  %vm1128 = vcmp.gt.f32.partialorder %v872, 0.0
  %vm1129 = vcmp.gt.f32.partialorder %v873, 0.0
  %vm1130 = vcmp.gt.f32.partialorder %v874, 0.0
  %vm1131 = vcmp.gt.f32.partialorder %v875, 0.0
  %vm1132 = vcmp.gt.f32.partialorder %v876, 0.0
  %vm1133 = vcmp.gt.f32.partialorder %v877, 0.0
  %vm1134 = vcmp.gt.f32.partialorder %v878, 0.0
  %vm1135 = vcmp.gt.f32.partialorder %v879, 0.0
  %vm1136 = vcmp.gt.f32.partialorder %v880, 0.0
  %vm1137 = vcmp.gt.f32.partialorder %v881, 0.0
  %vm1138 = vcmp.gt.f32.partialorder %v882, 0.0
  %vm1139 = vcmp.gt.f32.partialorder %v883, 0.0
  %vm1140 = vcmp.gt.f32.partialorder %v884, 0.0
  %vm1141 = vcmp.gt.f32.partialorder %v885, 0.0
  %vm1142 = vcmp.gt.f32.partialorder %v886, 0.0
  %vm1143 = vcmp.gt.f32.partialorder %v887, 0.0
  %vm1144 = vcmp.gt.f32.partialorder %v888, 0.0
  %vm1145 = vcmp.gt.f32.partialorder %v889, 0.0
  %vm1146 = vcmp.gt.f32.partialorder %v890, 0.0
  %vm1147 = vcmp.gt.f32.partialorder %v891, 0.0
  %vm1148 = vcmp.gt.f32.partialorder %v892, 0.0
  %vm1149 = vcmp.gt.f32.partialorder %v893, 0.0
  %vm1150 = vcmp.gt.f32.partialorder %v894, 0.0
  %vm1151 = vcmp.gt.f32.partialorder %v895, 0.0
  %vm1152 = vcmp.gt.f32.partialorder %v896, 0.0
  %vm1153 = vcmp.gt.f32.partialorder %v897, 0.0
  %vm1154 = vcmp.gt.f32.partialorder %v898, 0.0
  %vm1155 = vcmp.gt.f32.partialorder %v899, 0.0
  %vm1156 = vcmp.gt.f32.partialorder %v900, 0.0
  %vm1157 = vcmp.gt.f32.partialorder %v901, 0.0
  %vm1158 = vcmp.gt.f32.partialorder %v902, 0.0
  %vm1159 = vcmp.gt.f32.partialorder %v903, 0.0
  %vm1160 = vcmp.gt.f32.partialorder %v904, 0.0
  %vm1161 = vcmp.gt.f32.partialorder %v905, 0.0
  %vm1162 = vcmp.gt.f32.partialorder %v906, 0.0
  %vm1163 = vcmp.gt.f32.partialorder %v907, 0.0
  %vm1164 = vcmp.gt.f32.partialorder %v908, 0.0
  %vm1165 = vcmp.gt.f32.partialorder %v909, 0.0
  %vm1166 = vcmp.gt.f32.partialorder %v910, 0.0
  %vm1167 = vcmp.gt.f32.partialorder %v911, 0.0
  %vm1168 = vcmp.gt.f32.partialorder %v912, 0.0
  %vm1169 = vcmp.gt.f32.partialorder %v913, 0.0
  %vm1170 = vcmp.gt.f32.partialorder %v914, 0.0
  %vm1171 = vcmp.gt.f32.partialorder %v915, 0.0
  %vm1172 = vcmp.gt.f32.partialorder %v916, 0.0
  %vm1173 = vcmp.gt.f32.partialorder %v917, 0.0
  %vm1174 = vcmp.gt.f32.partialorder %v918, 0.0
  %vm1175 = vcmp.gt.f32.partialorder %v919, 0.0
  %vm1176 = vcmp.gt.f32.partialorder %v920, 0.0
  %vm1177 = vcmp.gt.f32.partialorder %v921, 0.0
  %vm1178 = vcmp.gt.f32.partialorder %v922, 0.0
  %vm1179 = vcmp.gt.f32.partialorder %v923, 0.0
  %vm1180 = vcmp.gt.f32.partialorder %v924, 0.0
  %vm1181 = vcmp.gt.f32.partialorder %v925, 0.0
  %vm1182 = vcmp.gt.f32.partialorder %v926, 0.0
  %vm1183 = vcmp.gt.f32.partialorder %v927, 0.0
  %vm1184 = vcmp.gt.f32.partialorder %v928, 0.0
  %vm1185 = vcmp.gt.f32.partialorder %v929, 0.0
  %vm1186 = vcmp.gt.f32.partialorder %v930, 0.0
  %vm1187 = vcmp.gt.f32.partialorder %v931, 0.0
  %vm1188 = vcmp.gt.f32.partialorder %v932, 0.0
  %vm1189 = vcmp.gt.f32.partialorder %v933, 0.0
  %vm1190 = vcmp.gt.f32.partialorder %v934, 0.0
  %vm1191 = vcmp.gt.f32.partialorder %v935, 0.0
  %vm1192 = vcmp.gt.f32.partialorder %v936, 0.0
  %vm1193 = vcmp.gt.f32.partialorder %v937, 0.0
  %vm1194 = vcmp.gt.f32.partialorder %v938, 0.0
  %vm1195 = vcmp.gt.f32.partialorder %v939, 0.0
  %vm1196 = vcmp.gt.f32.partialorder %v940, 0.0
  %vm1197 = vcmp.gt.f32.partialorder %v941, 0.0
  %vm1198 = vcmp.gt.f32.partialorder %v942, 0.0
  %vm1199 = vcmp.gt.f32.partialorder %v943, 0.0
  %vm1200 = vcmp.gt.f32.partialorder %v944, 0.0
  %vm1201 = vcmp.gt.f32.partialorder %v945, 0.0
  %vm1202 = vcmp.gt.f32.partialorder %v946, 0.0
  %vm1203 = vcmp.gt.f32.partialorder %v947, 0.0
  %vm1204 = vcmp.gt.f32.partialorder %v948, 0.0
  %vm1205 = vcmp.gt.f32.partialorder %v949, 0.0
  %vm1206 = vcmp.gt.f32.partialorder %v950, 0.0
  %vm1207 = vcmp.gt.f32.partialorder %v951, 0.0
  %vm1208 = vcmp.gt.f32.partialorder %v952, 0.0
  %vm1209 = vcmp.gt.f32.partialorder %v953, 0.0
  %vm1210 = vcmp.gt.f32.partialorder %v954, 0.0
  %vm1211 = vcmp.gt.f32.partialorder %v955, 0.0
  %vm1212 = vcmp.gt.f32.partialorder %v956, 0.0
  %vm1213 = vcmp.gt.f32.partialorder %v957, 0.0
  %vm1214 = vcmp.gt.f32.partialorder %v958, 0.0
  %vm1215 = vcmp.gt.f32.partialorder %v959, 0.0
  %vm1216 = vcmp.gt.f32.partialorder %v960, 0.0
  %vm1217 = vcmp.gt.f32.partialorder %v961, 0.0
  %vm1218 = vcmp.gt.f32.partialorder %v962, 0.0
  %vm1219 = vcmp.gt.f32.partialorder %v963, 0.0
  %vm1220 = vcmp.gt.f32.partialorder %v964, 0.0
  %vm1221 = vcmp.gt.f32.partialorder %v965, 0.0
  %vm1222 = vcmp.gt.f32.partialorder %v966, 0.0
  %vm1223 = vcmp.gt.f32.partialorder %v967, 0.0
  %vm1224 = vcmp.gt.f32.partialorder %v968, 0.0
  %vm1225 = vcmp.gt.f32.partialorder %v969, 0.0
  %vm1226 = vcmp.gt.f32.partialorder %v970, 0.0
  %vm1227 = vcmp.gt.f32.partialorder %v971, 0.0
  %vm1228 = vcmp.gt.f32.partialorder %v972, 0.0
  %vm1229 = vcmp.gt.f32.partialorder %v973, 0.0
  %vm1230 = vcmp.gt.f32.partialorder %v974, 0.0
  %vm1231 = vcmp.gt.f32.partialorder %v975, 0.0
  %vm1232 = vcmp.gt.f32.partialorder %v976, 0.0
  %vm1233 = vcmp.gt.f32.partialorder %v977, 0.0
  %vm1234 = vcmp.gt.f32.partialorder %v978, 0.0
  %vm1235 = vcmp.gt.f32.partialorder %v979, 0.0
  %vm1236 = vcmp.gt.f32.partialorder %v980, 0.0
  %vm1237 = vcmp.gt.f32.partialorder %v981, 0.0
  %vm1238 = vcmp.gt.f32.partialorder %v982, 0.0
  %vm1239 = vcmp.gt.f32.partialorder %v983, 0.0
  %vm1240 = vcmp.gt.f32.partialorder %v984, 0.0
  %vm1241 = vcmp.gt.f32.partialorder %v985, 0.0
  %vm1242 = vcmp.gt.f32.partialorder %v986, 0.0
  %vm1243 = vcmp.gt.f32.partialorder %v987, 0.0
  %vm1244 = vcmp.gt.f32.partialorder %v988, 0.0
  %vm1245 = vcmp.gt.f32.partialorder %v989, 0.0
  %vm1246 = vcmp.gt.f32.partialorder %v990, 0.0
  %vm1247 = vcmp.gt.f32.partialorder %v991, 0.0
  %vm1248 = vcmp.gt.f32.partialorder %v992, 0.0
  %vm1249 = vcmp.gt.f32.partialorder %v993, 0.0
  %vm1250 = vcmp.gt.f32.partialorder %v994, 0.0
  %vm1251 = vcmp.gt.f32.partialorder %v995, 0.0
  %vm1252 = vcmp.gt.f32.partialorder %v996, 0.0
  %vm1253 = vcmp.gt.f32.partialorder %v997, 0.0
  %vm1254 = vcmp.gt.f32.partialorder %v998, 0.0
  %vm1255 = vcmp.gt.f32.partialorder %v999, 0.0
  %vm1256 = vcmp.gt.f32.partialorder %v1000, 0.0
  %vm1257 = vcmp.gt.f32.partialorder %v1001, 0.0
  %vm1258 = vcmp.gt.f32.partialorder %v1002, 0.0
  %vm1259 = vcmp.gt.f32.partialorder %v1003, 0.0
  %vm1260 = vcmp.gt.f32.partialorder %v1004, 0.0
  %vm1261 = vcmp.gt.f32.partialorder %v1005, 0.0
  %vm1262 = vcmp.gt.f32.partialorder %v1006, 0.0
  %vm1263 = vcmp.gt.f32.partialorder %v1007, 0.0
  %vm1264 = vcmp.gt.f32.partialorder %v1008, 0.0
  %vm1265 = vcmp.gt.f32.partialorder %v1009, 0.0
  %vm1266 = vcmp.gt.f32.partialorder %v1010, 0.0
  %vm1267 = vcmp.gt.f32.partialorder %v1011, 0.0
  %vm1268 = vcmp.gt.f32.partialorder %v1012, 0.0
  %vm1269 = vcmp.gt.f32.partialorder %v1013, 0.0
  %vm1270 = vcmp.gt.f32.partialorder %v1014, 0.0
  %vm1271 = vcmp.gt.f32.partialorder %v1015, 0.0
  %vm1272 = vcmp.gt.f32.partialorder %v1016, 0.0
  %vm1273 = vcmp.gt.f32.partialorder %v1017, 0.0
  %vm1274 = vcmp.gt.f32.partialorder %v1018, 0.0
  %vm1275 = vcmp.gt.f32.partialorder %v1019, 0.0
  %vm1276 = vcmp.gt.f32.partialorder %v1020, 0.0
  %vm1277 = vcmp.gt.f32.partialorder %v1021, 0.0
  %vm1278 = vcmp.gt.f32.partialorder %v1022, 0.0
  %vm1279 = vcmp.gt.f32.partialorder %v1023, 0.0
  %vm1280 = vcmp.gt.f32.partialorder %v1024, 0.0
  %vm1281 = vcmp.gt.f32.partialorder %v1025, 0.0
  %vm1282 = vcmp.gt.f32.partialorder %v1026, 0.0
  %vm1283 = vcmp.gt.f32.partialorder %v1027, 0.0
  %vm1284 = vcmp.gt.f32.partialorder %v1028, 0.0
  %vm1285 = vcmp.gt.f32.partialorder %v1029, 0.0
  %vm1286 = vcmp.gt.f32.partialorder %v1030, 0.0
  %vm1287 = vcmp.gt.f32.partialorder %v1031, 0.0
  %vm1288 = vcmp.gt.f32.partialorder %v1032, 0.0
  %vm1289 = vcmp.gt.f32.partialorder %v1033, 0.0
  %vm1290 = vcmp.gt.f32.partialorder %v1034, 0.0
  %vm1291 = vcmp.gt.f32.partialorder %v1035, 0.0
  %vm1292 = vcmp.gt.f32.partialorder %v1036, 0.0
  %vm1293 = vcmp.gt.f32.partialorder %v1037, 0.0
  %vm1294 = vcmp.gt.f32.partialorder %v1038, 0.0
  %vm1295 = vcmp.gt.f32.partialorder %v1039, 0.0
  %vm1296 = vcmp.gt.f32.partialorder %v1040, 0.0
  %vm1297 = vcmp.gt.f32.partialorder %v1041, 0.0
  %vm1298 = vcmp.gt.f32.partialorder %v1042, 0.0
  %vm1299 = vcmp.gt.f32.partialorder %v1043, 0.0
  %vm1300 = vcmp.gt.f32.partialorder %v1044, 0.0
  %v1301 = vmul.f32 %v789, 0.01
  %v1302 = vmul.f32 %v790, 0.01
  %v1303 = vmul.f32 %v791, 0.01
  %v1304 = vmul.f32 %v792, 0.01
  %v1305 = vmul.f32 %v793, 0.01
  %v1306 = vmul.f32 %v794, 0.01
  %v1307 = vmul.f32 %v795, 0.01
  %v1308 = vmul.f32 %v796, 0.01
  %v1309 = vmul.f32 %v797, 0.01
  %v1310 = vmul.f32 %v798, 0.01
  %v1311 = vmul.f32 %v799, 0.01
  %v1312 = vmul.f32 %v800, 0.01
  %v1313 = vmul.f32 %v801, 0.01
  %v1314 = vmul.f32 %v802, 0.01
  %v1315 = vmul.f32 %v803, 0.01
  %v1316 = vmul.f32 %v804, 0.01
  %v1317 = vmul.f32 %v805, 0.01
  %v1318 = vmul.f32 %v806, 0.01
  %v1319 = vmul.f32 %v807, 0.01
  %v1320 = vmul.f32 %v808, 0.01
  %v1321 = vmul.f32 %v809, 0.01
  %v1322 = vmul.f32 %v810, 0.01
  %v1323 = vmul.f32 %v811, 0.01
  %v1324 = vmul.f32 %v812, 0.01
  %v1325 = vmul.f32 %v813, 0.01
  %v1326 = vmul.f32 %v814, 0.01
  %v1327 = vmul.f32 %v815, 0.01
  %v1328 = vmul.f32 %v816, 0.01
  %v1329 = vmul.f32 %v817, 0.01
  %v1330 = vmul.f32 %v818, 0.01
  %v1331 = vmul.f32 %v819, 0.01
  %v1332 = vmul.f32 %v820, 0.01
  %v1333 = vmul.f32 %v821, 0.01
  %v1334 = vmul.f32 %v822, 0.01
  %v1335 = vmul.f32 %v823, 0.01
  %v1336 = vmul.f32 %v824, 0.01
  %v1337 = vmul.f32 %v825, 0.01
  %v1338 = vmul.f32 %v826, 0.01
  %v1339 = vmul.f32 %v827, 0.01
  %v1340 = vmul.f32 %v828, 0.01
  %v1341 = vmul.f32 %v829, 0.01
  %v1342 = vmul.f32 %v830, 0.01
  %v1343 = vmul.f32 %v831, 0.01
  %v1344 = vmul.f32 %v832, 0.01
  %v1345 = vmul.f32 %v833, 0.01
  %v1346 = vmul.f32 %v834, 0.01
  %v1347 = vmul.f32 %v835, 0.01
  %v1348 = vmul.f32 %v836, 0.01
  %v1349 = vmul.f32 %v837, 0.01
  %v1350 = vmul.f32 %v838, 0.01
  %v1351 = vmul.f32 %v839, 0.01
  %v1352 = vmul.f32 %v840, 0.01
  %v1353 = vmul.f32 %v841, 0.01
  %v1354 = vmul.f32 %v842, 0.01
  %v1355 = vmul.f32 %v843, 0.01
  %v1356 = vmul.f32 %v844, 0.01
  %v1357 = vmul.f32 %v845, 0.01
  %v1358 = vmul.f32 %v846, 0.01
  %v1359 = vmul.f32 %v847, 0.01
  %v1360 = vmul.f32 %v848, 0.01
  %v1361 = vmul.f32 %v849, 0.01
  %v1362 = vmul.f32 %v850, 0.01
  %v1363 = vmul.f32 %v851, 0.01
  %v1364 = vmul.f32 %v852, 0.01
  %v1365 = vmul.f32 %v853, 0.01
  %v1366 = vmul.f32 %v854, 0.01
  %v1367 = vmul.f32 %v855, 0.01
  %v1368 = vmul.f32 %v856, 0.01
  %v1369 = vmul.f32 %v857, 0.01
  %v1370 = vmul.f32 %v858, 0.01
  %v1371 = vmul.f32 %v859, 0.01
  %v1372 = vmul.f32 %v860, 0.01
  %v1373 = vmul.f32 %v861, 0.01
  %v1374 = vmul.f32 %v862, 0.01
  %v1375 = vmul.f32 %v863, 0.01
  %v1376 = vmul.f32 %v864, 0.01
  %v1377 = vmul.f32 %v865, 0.01
  %v1378 = vmul.f32 %v866, 0.01
  %v1379 = vmul.f32 %v867, 0.01
  %v1380 = vmul.f32 %v868, 0.01
  %v1381 = vmul.f32 %v869, 0.01
  %v1382 = vmul.f32 %v870, 0.01
  %v1383 = vmul.f32 %v871, 0.01
  %v1384 = vmul.f32 %v872, 0.01
  %v1385 = vmul.f32 %v873, 0.01
  %v1386 = vmul.f32 %v874, 0.01
  %v1387 = vmul.f32 %v875, 0.01
  %v1388 = vmul.f32 %v876, 0.01
  %v1389 = vmul.f32 %v877, 0.01
  %v1390 = vmul.f32 %v878, 0.01
  %v1391 = vmul.f32 %v879, 0.01
  %v1392 = vmul.f32 %v880, 0.01
  %v1393 = vmul.f32 %v881, 0.01
  %v1394 = vmul.f32 %v882, 0.01
  %v1395 = vmul.f32 %v883, 0.01
  %v1396 = vmul.f32 %v884, 0.01
  %v1397 = vmul.f32 %v885, 0.01
  %v1398 = vmul.f32 %v886, 0.01
  %v1399 = vmul.f32 %v887, 0.01
  %v1400 = vmul.f32 %v888, 0.01
  %v1401 = vmul.f32 %v889, 0.01
  %v1402 = vmul.f32 %v890, 0.01
  %v1403 = vmul.f32 %v891, 0.01
  %v1404 = vmul.f32 %v892, 0.01
  %v1405 = vmul.f32 %v893, 0.01
  %v1406 = vmul.f32 %v894, 0.01
  %v1407 = vmul.f32 %v895, 0.01
  %v1408 = vmul.f32 %v896, 0.01
  %v1409 = vmul.f32 %v897, 0.01
  %v1410 = vmul.f32 %v898, 0.01
  %v1411 = vmul.f32 %v899, 0.01
  %v1412 = vmul.f32 %v900, 0.01
  %v1413 = vmul.f32 %v901, 0.01
  %v1414 = vmul.f32 %v902, 0.01
  %v1415 = vmul.f32 %v903, 0.01
  %v1416 = vmul.f32 %v904, 0.01
  %v1417 = vmul.f32 %v905, 0.01
  %v1418 = vmul.f32 %v906, 0.01
  %v1419 = vmul.f32 %v907, 0.01
  %v1420 = vmul.f32 %v908, 0.01
  %v1421 = vmul.f32 %v909, 0.01
  %v1422 = vmul.f32 %v910, 0.01
  %v1423 = vmul.f32 %v911, 0.01
  %v1424 = vmul.f32 %v912, 0.01
  %v1425 = vmul.f32 %v913, 0.01
  %v1426 = vmul.f32 %v914, 0.01
  %v1427 = vmul.f32 %v915, 0.01
  %v1428 = vmul.f32 %v916, 0.01
  %v1429 = vmul.f32 %v917, 0.01
  %v1430 = vmul.f32 %v918, 0.01
  %v1431 = vmul.f32 %v919, 0.01
  %v1432 = vmul.f32 %v920, 0.01
  %v1433 = vmul.f32 %v921, 0.01
  %v1434 = vmul.f32 %v922, 0.01
  %v1435 = vmul.f32 %v923, 0.01
  %v1436 = vmul.f32 %v924, 0.01
  %v1437 = vmul.f32 %v925, 0.01
  %v1438 = vmul.f32 %v926, 0.01
  %v1439 = vmul.f32 %v927, 0.01
  %v1440 = vmul.f32 %v928, 0.01
  %v1441 = vmul.f32 %v929, 0.01
  %v1442 = vmul.f32 %v930, 0.01
  %v1443 = vmul.f32 %v931, 0.01
  %v1444 = vmul.f32 %v932, 0.01
  %v1445 = vmul.f32 %v933, 0.01
  %v1446 = vmul.f32 %v934, 0.01
  %v1447 = vmul.f32 %v935, 0.01
  %v1448 = vmul.f32 %v936, 0.01
  %v1449 = vmul.f32 %v937, 0.01
  %v1450 = vmul.f32 %v938, 0.01
  %v1451 = vmul.f32 %v939, 0.01
  %v1452 = vmul.f32 %v940, 0.01
  %v1453 = vmul.f32 %v941, 0.01
  %v1454 = vmul.f32 %v942, 0.01
  %v1455 = vmul.f32 %v943, 0.01
  %v1456 = vmul.f32 %v944, 0.01
  %v1457 = vmul.f32 %v945, 0.01
  %v1458 = vmul.f32 %v946, 0.01
  %v1459 = vmul.f32 %v947, 0.01
  %v1460 = vmul.f32 %v948, 0.01
  %v1461 = vmul.f32 %v949, 0.01
  %v1462 = vmul.f32 %v950, 0.01
  %v1463 = vmul.f32 %v951, 0.01
  %v1464 = vmul.f32 %v952, 0.01
  %v1465 = vmul.f32 %v953, 0.01
  %v1466 = vmul.f32 %v954, 0.01
  %v1467 = vmul.f32 %v955, 0.01
  %v1468 = vmul.f32 %v956, 0.01
  %v1469 = vmul.f32 %v957, 0.01
  %v1470 = vmul.f32 %v958, 0.01
  %v1471 = vmul.f32 %v959, 0.01
  %v1472 = vmul.f32 %v960, 0.01
  %v1473 = vmul.f32 %v961, 0.01
  %v1474 = vmul.f32 %v962, 0.01
  %v1475 = vmul.f32 %v963, 0.01
  %v1476 = vmul.f32 %v964, 0.01
  %v1477 = vmul.f32 %v965, 0.01
  %v1478 = vmul.f32 %v966, 0.01
  %v1479 = vmul.f32 %v967, 0.01
  %v1480 = vmul.f32 %v968, 0.01
  %v1481 = vmul.f32 %v969, 0.01
  %v1482 = vmul.f32 %v970, 0.01
  %v1483 = vmul.f32 %v971, 0.01
  %v1484 = vmul.f32 %v972, 0.01
  %v1485 = vmul.f32 %v973, 0.01
  %v1486 = vmul.f32 %v974, 0.01
  %v1487 = vmul.f32 %v975, 0.01
  %v1488 = vmul.f32 %v976, 0.01
  %v1489 = vmul.f32 %v977, 0.01
  %v1490 = vmul.f32 %v978, 0.01
  %v1491 = vmul.f32 %v979, 0.01
  %v1492 = vmul.f32 %v980, 0.01
  %v1493 = vmul.f32 %v981, 0.01
  %v1494 = vmul.f32 %v982, 0.01
  %v1495 = vmul.f32 %v983, 0.01
  %v1496 = vmul.f32 %v984, 0.01
  %v1497 = vmul.f32 %v985, 0.01
  %v1498 = vmul.f32 %v986, 0.01
  %v1499 = vmul.f32 %v987, 0.01
  %v1500 = vmul.f32 %v988, 0.01
  %v1501 = vmul.f32 %v989, 0.01
  %v1502 = vmul.f32 %v990, 0.01
  %v1503 = vmul.f32 %v991, 0.01
  %v1504 = vmul.f32 %v992, 0.01
  %v1505 = vmul.f32 %v993, 0.01
  %v1506 = vmul.f32 %v994, 0.01
  %v1507 = vmul.f32 %v995, 0.01
  %v1508 = vmul.f32 %v996, 0.01
  %v1509 = vmul.f32 %v997, 0.01
  %v1510 = vmul.f32 %v998, 0.01
  %v1511 = vmul.f32 %v999, 0.01
  %v1512 = vmul.f32 %v1000, 0.01
  %v1513 = vmul.f32 %v1001, 0.01
  %v1514 = vmul.f32 %v1002, 0.01
  %v1515 = vmul.f32 %v1003, 0.01
  %v1516 = vmul.f32 %v1004, 0.01
  %v1517 = vmul.f32 %v1005, 0.01
  %v1518 = vmul.f32 %v1006, 0.01
  %v1519 = vmul.f32 %v1007, 0.01
  %v1520 = vmul.f32 %v1008, 0.01
  %v1521 = vmul.f32 %v1009, 0.01
  %v1522 = vmul.f32 %v1010, 0.01
  %v1523 = vmul.f32 %v1011, 0.01
  %v1524 = vmul.f32 %v1012, 0.01
  %v1525 = vmul.f32 %v1013, 0.01
  %v1526 = vmul.f32 %v1014, 0.01
  %v1527 = vmul.f32 %v1015, 0.01
  %v1528 = vmul.f32 %v1016, 0.01
  %v1529 = vmul.f32 %v1017, 0.01
  %v1530 = vmul.f32 %v1018, 0.01
  %v1531 = vmul.f32 %v1019, 0.01
  %v1532 = vmul.f32 %v1020, 0.01
  %v1533 = vmul.f32 %v1021, 0.01
  %v1534 = vmul.f32 %v1022, 0.01
  %v1535 = vmul.f32 %v1023, 0.01
  %v1536 = vmul.f32 %v1024, 0.01
  %v1537 = vmul.f32 %v1025, 0.01
  %v1538 = vmul.f32 %v1026, 0.01
  %v1539 = vmul.f32 %v1027, 0.01
  %v1540 = vmul.f32 %v1028, 0.01
  %v1541 = vmul.f32 %v1029, 0.01
  %v1542 = vmul.f32 %v1030, 0.01
  %v1543 = vmul.f32 %v1031, 0.01
  %v1544 = vmul.f32 %v1032, 0.01
  %v1545 = vmul.f32 %v1033, 0.01
  %v1546 = vmul.f32 %v1034, 0.01
  %v1547 = vmul.f32 %v1035, 0.01
  %v1548 = vmul.f32 %v1036, 0.01
  %v1549 = vmul.f32 %v1037, 0.01
  %v1550 = vmul.f32 %v1038, 0.01
  %v1551 = vmul.f32 %v1039, 0.01
  %v1552 = vmul.f32 %v1040, 0.01
  %v1553 = vmul.f32 %v1041, 0.01
  %v1554 = vmul.f32 %v1042, 0.01
  %v1555 = vmul.f32 %v1043, 0.01
  %v1556 = vmul.f32 %v1044, 0.01
  %v1557 = vsel %vm1045, %v789, %v1301
  %v1558 = vsel %vm1046, %v790, %v1302
  %v1559 = vsel %vm1047, %v791, %v1303
  %v1560 = vsel %vm1048, %v792, %v1304
  %v1561 = vsel %vm1049, %v793, %v1305
  %v1562 = vsel %vm1050, %v794, %v1306
  %v1563 = vsel %vm1051, %v795, %v1307
  %v1564 = vsel %vm1052, %v796, %v1308
  %v1565 = vsel %vm1053, %v797, %v1309
  %v1566 = vsel %vm1054, %v798, %v1310
  %v1567 = vsel %vm1055, %v799, %v1311
  %v1568 = vsel %vm1056, %v800, %v1312
  %v1569 = vsel %vm1057, %v801, %v1313
  %v1570 = vsel %vm1058, %v802, %v1314
  %v1571 = vsel %vm1059, %v803, %v1315
  %v1572 = vsel %vm1060, %v804, %v1316
  %v1573 = vsel %vm1061, %v805, %v1317
  %v1574 = vsel %vm1062, %v806, %v1318
  %v1575 = vsel %vm1063, %v807, %v1319
  %v1576 = vsel %vm1064, %v808, %v1320
  %v1577 = vsel %vm1065, %v809, %v1321
  %v1578 = vsel %vm1066, %v810, %v1322
  %v1579 = vsel %vm1067, %v811, %v1323
  %v1580 = vsel %vm1068, %v812, %v1324
  %v1581 = vsel %vm1069, %v813, %v1325
  %v1582 = vsel %vm1070, %v814, %v1326
  %v1583 = vsel %vm1071, %v815, %v1327
  %v1584 = vsel %vm1072, %v816, %v1328
  %v1585 = vsel %vm1073, %v817, %v1329
  %v1586 = vsel %vm1074, %v818, %v1330
  %v1587 = vsel %vm1075, %v819, %v1331
  %v1588 = vsel %vm1076, %v820, %v1332
  %v1589 = vsel %vm1077, %v821, %v1333
  %v1590 = vsel %vm1078, %v822, %v1334
  %v1591 = vsel %vm1079, %v823, %v1335
  %v1592 = vsel %vm1080, %v824, %v1336
  %v1593 = vsel %vm1081, %v825, %v1337
  %v1594 = vsel %vm1082, %v826, %v1338
  %v1595 = vsel %vm1083, %v827, %v1339
  %v1596 = vsel %vm1084, %v828, %v1340
  %v1597 = vsel %vm1085, %v829, %v1341
  %v1598 = vsel %vm1086, %v830, %v1342
  %v1599 = vsel %vm1087, %v831, %v1343
  %v1600 = vsel %vm1088, %v832, %v1344
  %v1601 = vsel %vm1089, %v833, %v1345
  %v1602 = vsel %vm1090, %v834, %v1346
  %v1603 = vsel %vm1091, %v835, %v1347
  %v1604 = vsel %vm1092, %v836, %v1348
  %v1605 = vsel %vm1093, %v837, %v1349
  %v1606 = vsel %vm1094, %v838, %v1350
  %v1607 = vsel %vm1095, %v839, %v1351
  %v1608 = vsel %vm1096, %v840, %v1352
  %v1609 = vsel %vm1097, %v841, %v1353
  %v1610 = vsel %vm1098, %v842, %v1354
  %v1611 = vsel %vm1099, %v843, %v1355
  %v1612 = vsel %vm1100, %v844, %v1356
  %v1613 = vsel %vm1101, %v845, %v1357
  %v1614 = vsel %vm1102, %v846, %v1358
  %v1615 = vsel %vm1103, %v847, %v1359
  %v1616 = vsel %vm1104, %v848, %v1360
  %v1617 = vsel %vm1105, %v849, %v1361
  %v1618 = vsel %vm1106, %v850, %v1362
  %v1619 = vsel %vm1107, %v851, %v1363
  %v1620 = vsel %vm1108, %v852, %v1364
  %v1621 = vsel %vm1109, %v853, %v1365
  %v1622 = vsel %vm1110, %v854, %v1366
  %v1623 = vsel %vm1111, %v855, %v1367
  %v1624 = vsel %vm1112, %v856, %v1368
  %v1625 = vsel %vm1113, %v857, %v1369
  %v1626 = vsel %vm1114, %v858, %v1370
  %v1627 = vsel %vm1115, %v859, %v1371
  %v1628 = vsel %vm1116, %v860, %v1372
  %v1629 = vsel %vm1117, %v861, %v1373
  %v1630 = vsel %vm1118, %v862, %v1374
  %v1631 = vsel %vm1119, %v863, %v1375
  %v1632 = vsel %vm1120, %v864, %v1376
  %v1633 = vsel %vm1121, %v865, %v1377
  %v1634 = vsel %vm1122, %v866, %v1378
  %v1635 = vsel %vm1123, %v867, %v1379
  %v1636 = vsel %vm1124, %v868, %v1380
  %v1637 = vsel %vm1125, %v869, %v1381
  %v1638 = vsel %vm1126, %v870, %v1382
  %v1639 = vsel %vm1127, %v871, %v1383
  %v1640 = vsel %vm1128, %v872, %v1384
  %v1641 = vsel %vm1129, %v873, %v1385
  %v1642 = vsel %vm1130, %v874, %v1386
  %v1643 = vsel %vm1131, %v875, %v1387
  %v1644 = vsel %vm1132, %v876, %v1388
  %v1645 = vsel %vm1133, %v877, %v1389
  %v1646 = vsel %vm1134, %v878, %v1390
  %v1647 = vsel %vm1135, %v879, %v1391
  %v1648 = vsel %vm1136, %v880, %v1392
  %v1649 = vsel %vm1137, %v881, %v1393
  %v1650 = vsel %vm1138, %v882, %v1394
  %v1651 = vsel %vm1139, %v883, %v1395
  %v1652 = vsel %vm1140, %v884, %v1396
  %v1653 = vsel %vm1141, %v885, %v1397
  %v1654 = vsel %vm1142, %v886, %v1398
  %v1655 = vsel %vm1143, %v887, %v1399
  %v1656 = vsel %vm1144, %v888, %v1400
  %v1657 = vsel %vm1145, %v889, %v1401
  %v1658 = vsel %vm1146, %v890, %v1402
  %v1659 = vsel %vm1147, %v891, %v1403
  %v1660 = vsel %vm1148, %v892, %v1404
  %v1661 = vsel %vm1149, %v893, %v1405
  %v1662 = vsel %vm1150, %v894, %v1406
  %v1663 = vsel %vm1151, %v895, %v1407
  %v1664 = vsel %vm1152, %v896, %v1408
  %v1665 = vsel %vm1153, %v897, %v1409
  %v1666 = vsel %vm1154, %v898, %v1410
  %v1667 = vsel %vm1155, %v899, %v1411
  %v1668 = vsel %vm1156, %v900, %v1412
  %v1669 = vsel %vm1157, %v901, %v1413
  %v1670 = vsel %vm1158, %v902, %v1414
  %v1671 = vsel %vm1159, %v903, %v1415
  %v1672 = vsel %vm1160, %v904, %v1416
  %v1673 = vsel %vm1161, %v905, %v1417
  %v1674 = vsel %vm1162, %v906, %v1418
  %v1675 = vsel %vm1163, %v907, %v1419
  %v1676 = vsel %vm1164, %v908, %v1420
  %v1677 = vsel %vm1165, %v909, %v1421
  %v1678 = vsel %vm1166, %v910, %v1422
  %v1679 = vsel %vm1167, %v911, %v1423
  %v1680 = vsel %vm1168, %v912, %v1424
  %v1681 = vsel %vm1169, %v913, %v1425
  %v1682 = vsel %vm1170, %v914, %v1426
  %v1683 = vsel %vm1171, %v915, %v1427
  %v1684 = vsel %vm1172, %v916, %v1428
  %v1685 = vsel %vm1173, %v917, %v1429
  %v1686 = vsel %vm1174, %v918, %v1430
  %v1687 = vsel %vm1175, %v919, %v1431
  %v1688 = vsel %vm1176, %v920, %v1432
  %v1689 = vsel %vm1177, %v921, %v1433
  %v1690 = vsel %vm1178, %v922, %v1434
  %v1691 = vsel %vm1179, %v923, %v1435
  %v1692 = vsel %vm1180, %v924, %v1436
  %v1693 = vsel %vm1181, %v925, %v1437
  %v1694 = vsel %vm1182, %v926, %v1438
  %v1695 = vsel %vm1183, %v927, %v1439
  %v1696 = vsel %vm1184, %v928, %v1440
  %v1697 = vsel %vm1185, %v929, %v1441
  %v1698 = vsel %vm1186, %v930, %v1442
  %v1699 = vsel %vm1187, %v931, %v1443
  %v1700 = vsel %vm1188, %v932, %v1444
  %v1701 = vsel %vm1189, %v933, %v1445
  %v1702 = vsel %vm1190, %v934, %v1446
  %v1703 = vsel %vm1191, %v935, %v1447
  %v1704 = vsel %vm1192, %v936, %v1448
  %v1705 = vsel %vm1193, %v937, %v1449
  %v1706 = vsel %vm1194, %v938, %v1450
  %v1707 = vsel %vm1195, %v939, %v1451
  %v1708 = vsel %vm1196, %v940, %v1452
  %v1709 = vsel %vm1197, %v941, %v1453
  %v1710 = vsel %vm1198, %v942, %v1454
  %v1711 = vsel %vm1199, %v943, %v1455
  %v1712 = vsel %vm1200, %v944, %v1456
  %v1713 = vsel %vm1201, %v945, %v1457
  %v1714 = vsel %vm1202, %v946, %v1458
  %v1715 = vsel %vm1203, %v947, %v1459
  %v1716 = vsel %vm1204, %v948, %v1460
  %v1717 = vsel %vm1205, %v949, %v1461
  %v1718 = vsel %vm1206, %v950, %v1462
  %v1719 = vsel %vm1207, %v951, %v1463
  %v1720 = vsel %vm1208, %v952, %v1464
  %v1721 = vsel %vm1209, %v953, %v1465
  %v1722 = vsel %vm1210, %v954, %v1466
  %v1723 = vsel %vm1211, %v955, %v1467
  %v1724 = vsel %vm1212, %v956, %v1468
  %v1725 = vsel %vm1213, %v957, %v1469
  %v1726 = vsel %vm1214, %v958, %v1470
  %v1727 = vsel %vm1215, %v959, %v1471
  %v1728 = vsel %vm1216, %v960, %v1472
  %v1729 = vsel %vm1217, %v961, %v1473
  %v1730 = vsel %vm1218, %v962, %v1474
  %v1731 = vsel %vm1219, %v963, %v1475
  %v1732 = vsel %vm1220, %v964, %v1476
  %v1733 = vsel %vm1221, %v965, %v1477
  %v1734 = vsel %vm1222, %v966, %v1478
  %v1735 = vsel %vm1223, %v967, %v1479
  %v1736 = vsel %vm1224, %v968, %v1480
  %v1737 = vsel %vm1225, %v969, %v1481
  %v1738 = vsel %vm1226, %v970, %v1482
  %v1739 = vsel %vm1227, %v971, %v1483
  %v1740 = vsel %vm1228, %v972, %v1484
  %v1741 = vsel %vm1229, %v973, %v1485
  %v1742 = vsel %vm1230, %v974, %v1486
  %v1743 = vsel %vm1231, %v975, %v1487
  %v1744 = vsel %vm1232, %v976, %v1488
  %v1745 = vsel %vm1233, %v977, %v1489
  %v1746 = vsel %vm1234, %v978, %v1490
  %v1747 = vsel %vm1235, %v979, %v1491
  %v1748 = vsel %vm1236, %v980, %v1492
  %v1749 = vsel %vm1237, %v981, %v1493
  %v1750 = vsel %vm1238, %v982, %v1494
  %v1751 = vsel %vm1239, %v983, %v1495
  %v1752 = vsel %vm1240, %v984, %v1496
  %v1753 = vsel %vm1241, %v985, %v1497
  %v1754 = vsel %vm1242, %v986, %v1498
  %v1755 = vsel %vm1243, %v987, %v1499
  %v1756 = vsel %vm1244, %v988, %v1500
  %v1757 = vsel %vm1245, %v989, %v1501
  %v1758 = vsel %vm1246, %v990, %v1502
  %v1759 = vsel %vm1247, %v991, %v1503
  %v1760 = vsel %vm1248, %v992, %v1504
  %v1761 = vsel %vm1249, %v993, %v1505
  %v1762 = vsel %vm1250, %v994, %v1506
  %v1763 = vsel %vm1251, %v995, %v1507
  %v1764 = vsel %vm1252, %v996, %v1508
  %v1765 = vsel %vm1253, %v997, %v1509
  %v1766 = vsel %vm1254, %v998, %v1510
  %v1767 = vsel %vm1255, %v999, %v1511
  %v1768 = vsel %vm1256, %v1000, %v1512
  %v1769 = vsel %vm1257, %v1001, %v1513
  %v1770 = vsel %vm1258, %v1002, %v1514
  %v1771 = vsel %vm1259, %v1003, %v1515
  %v1772 = vsel %vm1260, %v1004, %v1516
  %v1773 = vsel %vm1261, %v1005, %v1517
  %v1774 = vsel %vm1262, %v1006, %v1518
  %v1775 = vsel %vm1263, %v1007, %v1519
  %v1776 = vsel %vm1264, %v1008, %v1520
  %v1777 = vsel %vm1265, %v1009, %v1521
  %v1778 = vsel %vm1266, %v1010, %v1522
  %v1779 = vsel %vm1267, %v1011, %v1523
  %v1780 = vsel %vm1268, %v1012, %v1524
  %v1781 = vsel %vm1269, %v1013, %v1525
  %v1782 = vsel %vm1270, %v1014, %v1526
  %v1783 = vsel %vm1271, %v1015, %v1527
  %v1784 = vsel %vm1272, %v1016, %v1528
  %v1785 = vsel %vm1273, %v1017, %v1529
  %v1786 = vsel %vm1274, %v1018, %v1530
  %v1787 = vsel %vm1275, %v1019, %v1531
  %v1788 = vsel %vm1276, %v1020, %v1532
  %v1789 = vsel %vm1277, %v1021, %v1533
  %v1790 = vsel %vm1278, %v1022, %v1534
  %v1791 = vsel %vm1279, %v1023, %v1535
  %v1792 = vsel %vm1280, %v1024, %v1536
  %v1793 = vsel %vm1281, %v1025, %v1537
  %v1794 = vsel %vm1282, %v1026, %v1538
  %v1795 = vsel %vm1283, %v1027, %v1539
  %v1796 = vsel %vm1284, %v1028, %v1540
  %v1797 = vsel %vm1285, %v1029, %v1541
  %v1798 = vsel %vm1286, %v1030, %v1542
  %v1799 = vsel %vm1287, %v1031, %v1543
  %v1800 = vsel %vm1288, %v1032, %v1544
  %v1801 = vsel %vm1289, %v1033, %v1545
  %v1802 = vsel %vm1290, %v1034, %v1546
  %v1803 = vsel %vm1291, %v1035, %v1547
  %v1804 = vsel %vm1292, %v1036, %v1548
  %v1805 = vsel %vm1293, %v1037, %v1549
  %v1806 = vsel %vm1294, %v1038, %v1550
  %v1807 = vsel %vm1295, %v1039, %v1551
  %v1808 = vsel %vm1296, %v1040, %v1552
  %v1809 = vsel %vm1297, %v1041, %v1553
  %v1810 = vsel %vm1298, %v1042, %v1554
  %v1811 = vsel %vm1299, %v1043, %v1555
  %v1812 = vsel %vm1300, %v1044, %v1556
  %1813 = vst [vmem:[%s2] sm:$0xff] %v1557
  %1814 = vst [vmem:[%s2 + $0x8] sm:$0xff] %v1558
  %1815 = vst [vmem:[%s2 + $0x10] sm:$0xff] %v1559
  %1816 = vst [vmem:[%s2 + $0x18] sm:$0xff] %v1560
  %1817 = vst [vmem:[%s2 + $0x20] sm:$0xff] %v1561
  %1818 = vst [vmem:[%s2 + $0x28] sm:$0xff] %v1562
  %1819 = vst [vmem:[%s2 + $0x30] sm:$0xff] %v1563
  %1820 = vst [vmem:[%s2 + $0x38] sm:$0xff] %v1564
  %1821 = vst [vmem:[%s2 + $0x40] sm:$0xff] %v1565
  %1822 = vst [vmem:[%s2 + $0x48] sm:$0xff] %v1566
  %1823 = vst [vmem:[%s2 + $0x50] sm:$0xff] %v1567
  %1824 = vst [vmem:[%s2 + $0x58] sm:$0xff] %v1568
  %1825 = vst [vmem:[%s2 + $0x60] sm:$0xff] %v1569
  %1826 = vst [vmem:[%s2 + $0x68] sm:$0xff] %v1570
  %1827 = vst [vmem:[%s2 + $0x70] sm:$0xff] %v1571
  %1828 = vst [vmem:[%s2 + $0x78] sm:$0xff] %v1572
  %1829 = vst [vmem:[%s2 + $0x80] sm:$0xff] %v1573
  %1830 = vst [vmem:[%s2 + $0x88] sm:$0xff] %v1574
  %1831 = vst [vmem:[%s2 + $0x90] sm:$0xff] %v1575
  %1832 = vst [vmem:[%s2 + $0x98] sm:$0xff] %v1576
  %1833 = vst [vmem:[%s2 + $0xa0] sm:$0xff] %v1577
  %1834 = vst [vmem:[%s2 + $0xa8] sm:$0xff] %v1578
  %1835 = vst [vmem:[%s2 + $0xb0] sm:$0xff] %v1579
  %1836 = vst [vmem:[%s2 + $0xb8] sm:$0xff] %v1580
  %1837 = vst [vmem:[%s2 + $0xc0] sm:$0xff] %v1581
  %1838 = vst [vmem:[%s2 + $0xc8] sm:$0xff] %v1582
  %1839 = vst [vmem:[%s2 + $0xd0] sm:$0xff] %v1583
  %1840 = vst [vmem:[%s2 + $0xd8] sm:$0xff] %v1584
  %1841 = vst [vmem:[%s2 + $0xe0] sm:$0xff] %v1585
  %1842 = vst [vmem:[%s2 + $0xe8] sm:$0xff] %v1586
  %1843 = vst [vmem:[%s2 + $0xf0] sm:$0xff] %v1587
  %1844 = vst [vmem:[%s2 + $0xf8] sm:$0xff] %v1588
  %1845 = vst [vmem:[%s2 + $0x100] sm:$0xff] %v1589
  %1846 = vst [vmem:[%s2 + $0x108] sm:$0xff] %v1590
  %1847 = vst [vmem:[%s2 + $0x110] sm:$0xff] %v1591
  %1848 = vst [vmem:[%s2 + $0x118] sm:$0xff] %v1592
  %1849 = vst [vmem:[%s2 + $0x120] sm:$0xff] %v1593
  %1850 = vst [vmem:[%s2 + $0x128] sm:$0xff] %v1594
  %1851 = vst [vmem:[%s2 + $0x130] sm:$0xff] %v1595
  %1852 = vst [vmem:[%s2 + $0x138] sm:$0xff] %v1596
  %1853 = vst [vmem:[%s2 + $0x140] sm:$0xff] %v1597
  %1854 = vst [vmem:[%s2 + $0x148] sm:$0xff] %v1598
  %1855 = vst [vmem:[%s2 + $0x150] sm:$0xff] %v1599
  %1856 = vst [vmem:[%s2 + $0x158] sm:$0xff] %v1600
  %1857 = vst [vmem:[%s2 + $0x160] sm:$0xff] %v1601
  %1858 = vst [vmem:[%s2 + $0x168] sm:$0xff] %v1602
  %1859 = vst [vmem:[%s2 + $0x170] sm:$0xff] %v1603
  %1860 = vst [vmem:[%s2 + $0x178] sm:$0xff] %v1604
  %1861 = vst [vmem:[%s2 + $0x180] sm:$0xff] %v1605
  %1862 = vst [vmem:[%s2 + $0x188] sm:$0xff] %v1606
  %1863 = vst [vmem:[%s2 + $0x190] sm:$0xff] %v1607
  %1864 = vst [vmem:[%s2 + $0x198] sm:$0xff] %v1608
  %1865 = vst [vmem:[%s2 + $0x1a0] sm:$0xff] %v1609
  %1866 = vst [vmem:[%s2 + $0x1a8] sm:$0xff] %v1610
  %1867 = vst [vmem:[%s2 + $0x1b0] sm:$0xff] %v1611
  %1868 = vst [vmem:[%s2 + $0x1b8] sm:$0xff] %v1612
  %1869 = vst [vmem:[%s2 + $0x1c0] sm:$0xff] %v1613
  %1870 = vst [vmem:[%s2 + $0x1c8] sm:$0xff] %v1614
  %1871 = vst [vmem:[%s2 + $0x1d0] sm:$0xff] %v1615
  %1872 = vst [vmem:[%s2 + $0x1d8] sm:$0xff] %v1616
  %1873 = vst [vmem:[%s2 + $0x1e0] sm:$0xff] %v1617
  %1874 = vst [vmem:[%s2 + $0x1e8] sm:$0xff] %v1618
  %1875 = vst [vmem:[%s2 + $0x1f0] sm:$0xff] %v1619
  %1876 = vst [vmem:[%s2 + $0x1f8] sm:$0xff] %v1620
  %1877 = vst [vmem:[%s2 + $0x200] sm:$0xff] %v1621
  %1878 = vst [vmem:[%s2 + $0x208] sm:$0xff] %v1622
  %1879 = vst [vmem:[%s2 + $0x210] sm:$0xff] %v1623
  %1880 = vst [vmem:[%s2 + $0x218] sm:$0xff] %v1624
  %1881 = vst [vmem:[%s2 + $0x220] sm:$0xff] %v1625
  %1882 = vst [vmem:[%s2 + $0x228] sm:$0xff] %v1626
  %1883 = vst [vmem:[%s2 + $0x230] sm:$0xff] %v1627
  %1884 = vst [vmem:[%s2 + $0x238] sm:$0xff] %v1628
  %1885 = vst [vmem:[%s2 + $0x240] sm:$0xff] %v1629
  %1886 = vst [vmem:[%s2 + $0x248] sm:$0xff] %v1630
  %1887 = vst [vmem:[%s2 + $0x250] sm:$0xff] %v1631
  %1888 = vst [vmem:[%s2 + $0x258] sm:$0xff] %v1632
  %1889 = vst [vmem:[%s2 + $0x260] sm:$0xff] %v1633
  %1890 = vst [vmem:[%s2 + $0x268] sm:$0xff] %v1634
  %1891 = vst [vmem:[%s2 + $0x270] sm:$0xff] %v1635
  %1892 = vst [vmem:[%s2 + $0x278] sm:$0xff] %v1636
  %1893 = vst [vmem:[%s2 + $0x280] sm:$0xff] %v1637
  %1894 = vst [vmem:[%s2 + $0x288] sm:$0xff] %v1638
  %1895 = vst [vmem:[%s2 + $0x290] sm:$0xff] %v1639
  %1896 = vst [vmem:[%s2 + $0x298] sm:$0xff] %v1640
  %1897 = vst [vmem:[%s2 + $0x2a0] sm:$0xff] %v1641
  %1898 = vst [vmem:[%s2 + $0x2a8] sm:$0xff] %v1642
  %1899 = vst [vmem:[%s2 + $0x2b0] sm:$0xff] %v1643
  %1900 = vst [vmem:[%s2 + $0x2b8] sm:$0xff] %v1644
  %1901 = vst [vmem:[%s2 + $0x2c0] sm:$0xff] %v1645
  %1902 = vst [vmem:[%s2 + $0x2c8] sm:$0xff] %v1646
  %1903 = vst [vmem:[%s2 + $0x2d0] sm:$0xff] %v1647
  %1904 = vst [vmem:[%s2 + $0x2d8] sm:$0xff] %v1648
  %1905 = vst [vmem:[%s2 + $0x2e0] sm:$0xff] %v1649
  %1906 = vst [vmem:[%s2 + $0x2e8] sm:$0xff] %v1650
  %1907 = vst [vmem:[%s2 + $0x2f0] sm:$0xff] %v1651
  %1908 = vst [vmem:[%s2 + $0x2f8] sm:$0xff] %v1652
  %1909 = vst [vmem:[%s2 + $0x300] sm:$0xff] %v1653
  %1910 = vst [vmem:[%s2 + $0x308] sm:$0xff] %v1654
  %1911 = vst [vmem:[%s2 + $0x310] sm:$0xff] %v1655
  %1912 = vst [vmem:[%s2 + $0x318] sm:$0xff] %v1656
  %1913 = vst [vmem:[%s2 + $0x320] sm:$0xff] %v1657
  %1914 = vst [vmem:[%s2 + $0x328] sm:$0xff] %v1658
  %1915 = vst [vmem:[%s2 + $0x330] sm:$0xff] %v1659
  %1916 = vst [vmem:[%s2 + $0x338] sm:$0xff] %v1660
  %1917 = vst [vmem:[%s2 + $0x340] sm:$0xff] %v1661
  %1918 = vst [vmem:[%s2 + $0x348] sm:$0xff] %v1662
  %1919 = vst [vmem:[%s2 + $0x350] sm:$0xff] %v1663
  %1920 = vst [vmem:[%s2 + $0x358] sm:$0xff] %v1664
  %1921 = vst [vmem:[%s2 + $0x360] sm:$0xff] %v1665
  %1922 = vst [vmem:[%s2 + $0x368] sm:$0xff] %v1666
  %1923 = vst [vmem:[%s2 + $0x370] sm:$0xff] %v1667
  %1924 = vst [vmem:[%s2 + $0x378] sm:$0xff] %v1668
  %1925 = vst [vmem:[%s2 + $0x380] sm:$0xff] %v1669
  %1926 = vst [vmem:[%s2 + $0x388] sm:$0xff] %v1670
  %1927 = vst [vmem:[%s2 + $0x390] sm:$0xff] %v1671
  %1928 = vst [vmem:[%s2 + $0x398] sm:$0xff] %v1672
  %1929 = vst [vmem:[%s2 + $0x3a0] sm:$0xff] %v1673
  %1930 = vst [vmem:[%s2 + $0x3a8] sm:$0xff] %v1674
  %1931 = vst [vmem:[%s2 + $0x3b0] sm:$0xff] %v1675
  %1932 = vst [vmem:[%s2 + $0x3b8] sm:$0xff] %v1676
  %1933 = vst [vmem:[%s2 + $0x3c0] sm:$0xff] %v1677
  %1934 = vst [vmem:[%s2 + $0x3c8] sm:$0xff] %v1678
  %1935 = vst [vmem:[%s2 + $0x3d0] sm:$0xff] %v1679
  %1936 = vst [vmem:[%s2 + $0x3d8] sm:$0xff] %v1680
  %1937 = vst [vmem:[%s2 + $0x3e0] sm:$0xff] %v1681
  %1938 = vst [vmem:[%s2 + $0x3e8] sm:$0xff] %v1682
  %1939 = vst [vmem:[%s2 + $0x3f0] sm:$0xff] %v1683
  %1940 = vst [vmem:[%s2 + $0x3f8] sm:$0xff] %v1684
  %1941 = vst [vmem:[%s2 + $0x400] sm:$0xff] %v1685
  %1942 = vst [vmem:[%s2 + $0x408] sm:$0xff] %v1686
  %1943 = vst [vmem:[%s2 + $0x410] sm:$0xff] %v1687
  %1944 = vst [vmem:[%s2 + $0x418] sm:$0xff] %v1688
  %1945 = vst [vmem:[%s2 + $0x420] sm:$0xff] %v1689
  %1946 = vst [vmem:[%s2 + $0x428] sm:$0xff] %v1690
  %1947 = vst [vmem:[%s2 + $0x430] sm:$0xff] %v1691
  %1948 = vst [vmem:[%s2 + $0x438] sm:$0xff] %v1692
  %1949 = vst [vmem:[%s2 + $0x440] sm:$0xff] %v1693
  %1950 = vst [vmem:[%s2 + $0x448] sm:$0xff] %v1694
  %1951 = vst [vmem:[%s2 + $0x450] sm:$0xff] %v1695
  %1952 = vst [vmem:[%s2 + $0x458] sm:$0xff] %v1696
  %1953 = vst [vmem:[%s2 + $0x460] sm:$0xff] %v1697
  %1954 = vst [vmem:[%s2 + $0x468] sm:$0xff] %v1698
  %1955 = vst [vmem:[%s2 + $0x470] sm:$0xff] %v1699
  %1956 = vst [vmem:[%s2 + $0x478] sm:$0xff] %v1700
  %1957 = vst [vmem:[%s2 + $0x480] sm:$0xff] %v1701
  %1958 = vst [vmem:[%s2 + $0x488] sm:$0xff] %v1702
  %1959 = vst [vmem:[%s2 + $0x490] sm:$0xff] %v1703
  %1960 = vst [vmem:[%s2 + $0x498] sm:$0xff] %v1704
  %1961 = vst [vmem:[%s2 + $0x4a0] sm:$0xff] %v1705
  %1962 = vst [vmem:[%s2 + $0x4a8] sm:$0xff] %v1706
  %1963 = vst [vmem:[%s2 + $0x4b0] sm:$0xff] %v1707
  %1964 = vst [vmem:[%s2 + $0x4b8] sm:$0xff] %v1708
  %1965 = vst [vmem:[%s2 + $0x4c0] sm:$0xff] %v1709
  %1966 = vst [vmem:[%s2 + $0x4c8] sm:$0xff] %v1710
  %1967 = vst [vmem:[%s2 + $0x4d0] sm:$0xff] %v1711
  %1968 = vst [vmem:[%s2 + $0x4d8] sm:$0xff] %v1712
  %1969 = vst [vmem:[%s2 + $0x4e0] sm:$0xff] %v1713
  %1970 = vst [vmem:[%s2 + $0x4e8] sm:$0xff] %v1714
  %1971 = vst [vmem:[%s2 + $0x4f0] sm:$0xff] %v1715
  %1972 = vst [vmem:[%s2 + $0x4f8] sm:$0xff] %v1716
  %1973 = vst [vmem:[%s2 + $0x500] sm:$0xff] %v1717
  %1974 = vst [vmem:[%s2 + $0x508] sm:$0xff] %v1718
  %1975 = vst [vmem:[%s2 + $0x510] sm:$0xff] %v1719
  %1976 = vst [vmem:[%s2 + $0x518] sm:$0xff] %v1720
  %1977 = vst [vmem:[%s2 + $0x520] sm:$0xff] %v1721
  %1978 = vst [vmem:[%s2 + $0x528] sm:$0xff] %v1722
  %1979 = vst [vmem:[%s2 + $0x530] sm:$0xff] %v1723
  %1980 = vst [vmem:[%s2 + $0x538] sm:$0xff] %v1724
  %1981 = vst [vmem:[%s2 + $0x540] sm:$0xff] %v1725
  %1982 = vst [vmem:[%s2 + $0x548] sm:$0xff] %v1726
  %1983 = vst [vmem:[%s2 + $0x550] sm:$0xff] %v1727
  %1984 = vst [vmem:[%s2 + $0x558] sm:$0xff] %v1728
  %1985 = vst [vmem:[%s2 + $0x560] sm:$0xff] %v1729
  %1986 = vst [vmem:[%s2 + $0x568] sm:$0xff] %v1730
  %1987 = vst [vmem:[%s2 + $0x570] sm:$0xff] %v1731
  %1988 = vst [vmem:[%s2 + $0x578] sm:$0xff] %v1732
  %1989 = vst [vmem:[%s2 + $0x580] sm:$0xff] %v1733
  %1990 = vst [vmem:[%s2 + $0x588] sm:$0xff] %v1734
  %1991 = vst [vmem:[%s2 + $0x590] sm:$0xff] %v1735
  %1992 = vst [vmem:[%s2 + $0x598] sm:$0xff] %v1736
  %1993 = vst [vmem:[%s2 + $0x5a0] sm:$0xff] %v1737
  %1994 = vst [vmem:[%s2 + $0x5a8] sm:$0xff] %v1738
  %1995 = vst [vmem:[%s2 + $0x5b0] sm:$0xff] %v1739
  %1996 = vst [vmem:[%s2 + $0x5b8] sm:$0xff] %v1740
  %1997 = vst [vmem:[%s2 + $0x5c0] sm:$0xff] %v1741
  %1998 = vst [vmem:[%s2 + $0x5c8] sm:$0xff] %v1742
  %1999 = vst [vmem:[%s2 + $0x5d0] sm:$0xff] %v1743
  %2000 = vst [vmem:[%s2 + $0x5d8] sm:$0xff] %v1744
  %2001 = vst [vmem:[%s2 + $0x5e0] sm:$0xff] %v1745
  %2002 = vst [vmem:[%s2 + $0x5e8] sm:$0xff] %v1746
  %2003 = vst [vmem:[%s2 + $0x5f0] sm:$0xff] %v1747
  %2004 = vst [vmem:[%s2 + $0x5f8] sm:$0xff] %v1748
  %2005 = vst [vmem:[%s2 + $0x600] sm:$0xff] %v1749
  %2006 = vst [vmem:[%s2 + $0x608] sm:$0xff] %v1750
  %2007 = vst [vmem:[%s2 + $0x610] sm:$0xff] %v1751
  %2008 = vst [vmem:[%s2 + $0x618] sm:$0xff] %v1752
  %2009 = vst [vmem:[%s2 + $0x620] sm:$0xff] %v1753
  %2010 = vst [vmem:[%s2 + $0x628] sm:$0xff] %v1754
  %2011 = vst [vmem:[%s2 + $0x630] sm:$0xff] %v1755
  %2012 = vst [vmem:[%s2 + $0x638] sm:$0xff] %v1756
  %2013 = vst [vmem:[%s2 + $0x640] sm:$0xff] %v1757
  %2014 = vst [vmem:[%s2 + $0x648] sm:$0xff] %v1758
  %2015 = vst [vmem:[%s2 + $0x650] sm:$0xff] %v1759
  %2016 = vst [vmem:[%s2 + $0x658] sm:$0xff] %v1760
  %2017 = vst [vmem:[%s2 + $0x660] sm:$0xff] %v1761
  %2018 = vst [vmem:[%s2 + $0x668] sm:$0xff] %v1762
  %2019 = vst [vmem:[%s2 + $0x670] sm:$0xff] %v1763
  %2020 = vst [vmem:[%s2 + $0x678] sm:$0xff] %v1764
  %2021 = vst [vmem:[%s2 + $0x680] sm:$0xff] %v1765
  %2022 = vst [vmem:[%s2 + $0x688] sm:$0xff] %v1766
  %2023 = vst [vmem:[%s2 + $0x690] sm:$0xff] %v1767
  %2024 = vst [vmem:[%s2 + $0x698] sm:$0xff] %v1768
  %2025 = vst [vmem:[%s2 + $0x6a0] sm:$0xff] %v1769
  %2026 = vst [vmem:[%s2 + $0x6a8] sm:$0xff] %v1770
  %2027 = vst [vmem:[%s2 + $0x6b0] sm:$0xff] %v1771
  %2028 = vst [vmem:[%s2 + $0x6b8] sm:$0xff] %v1772
  %2029 = vst [vmem:[%s2 + $0x6c0] sm:$0xff] %v1773
  %2030 = vst [vmem:[%s2 + $0x6c8] sm:$0xff] %v1774
  %2031 = vst [vmem:[%s2 + $0x6d0] sm:$0xff] %v1775
  %2032 = vst [vmem:[%s2 + $0x6d8] sm:$0xff] %v1776
  %2033 = vst [vmem:[%s2 + $0x6e0] sm:$0xff] %v1777
  %2034 = vst [vmem:[%s2 + $0x6e8] sm:$0xff] %v1778
  %2035 = vst [vmem:[%s2 + $0x6f0] sm:$0xff] %v1779
  %2036 = vst [vmem:[%s2 + $0x6f8] sm:$0xff] %v1780
  %2037 = vst [vmem:[%s2 + $0x700] sm:$0xff] %v1781
  %2038 = vst [vmem:[%s2 + $0x708] sm:$0xff] %v1782
  %2039 = vst [vmem:[%s2 + $0x710] sm:$0xff] %v1783
  %2040 = vst [vmem:[%s2 + $0x718] sm:$0xff] %v1784
  %2041 = vst [vmem:[%s2 + $0x720] sm:$0xff] %v1785
  %2042 = vst [vmem:[%s2 + $0x728] sm:$0xff] %v1786
  %2043 = vst [vmem:[%s2 + $0x730] sm:$0xff] %v1787
  %2044 = vst [vmem:[%s2 + $0x738] sm:$0xff] %v1788
  %2045 = vst [vmem:[%s2 + $0x740] sm:$0xff] %v1789
  %2046 = vst [vmem:[%s2 + $0x748] sm:$0xff] %v1790
  %2047 = vst [vmem:[%s2 + $0x750] sm:$0xff] %v1791
  %2048 = vst [vmem:[%s2 + $0x758] sm:$0xff] %v1792
  %2049 = vst [vmem:[%s2 + $0x760] sm:$0xff] %v1793
  %2050 = vst [vmem:[%s2 + $0x768] sm:$0xff] %v1794
  %2051 = vst [vmem:[%s2 + $0x770] sm:$0xff] %v1795
  %2052 = vst [vmem:[%s2 + $0x778] sm:$0xff] %v1796
  %2053 = vst [vmem:[%s2 + $0x780] sm:$0xff] %v1797
  %2054 = vst [vmem:[%s2 + $0x788] sm:$0xff] %v1798
  %2055 = vst [vmem:[%s2 + $0x790] sm:$0xff] %v1799
  %2056 = vst [vmem:[%s2 + $0x798] sm:$0xff] %v1800
  %2057 = vst [vmem:[%s2 + $0x7a0] sm:$0xff] %v1801
  %2058 = vst [vmem:[%s2 + $0x7a8] sm:$0xff] %v1802
  %2059 = vst [vmem:[%s2 + $0x7b0] sm:$0xff] %v1803
  %2060 = vst [vmem:[%s2 + $0x7b8] sm:$0xff] %v1804
  %2061 = vst [vmem:[%s2 + $0x7c0] sm:$0xff] %v1805
  %2062 = vst [vmem:[%s2 + $0x7c8] sm:$0xff] %v1806
  %2063 = vst [vmem:[%s2 + $0x7d0] sm:$0xff] %v1807
  %2064 = vst [vmem:[%s2 + $0x7d8] sm:$0xff] %v1808
  %2065 = vst [vmem:[%s2 + $0x7e0] sm:$0xff] %v1809
  %2066 = vst [vmem:[%s2 + $0x7e8] sm:$0xff] %v1810
  %2067 = vst [vmem:[%s2 + $0x7f0] sm:$0xff] %v1811
  %2068 = vst [vmem:[%s2 + $0x7f8] sm:$0xff] %v1812
  // Predicated region
  $region10: #{block_forward.3} parent=0 // pred_check
    _
  $region11: #{block_forward.3} parent=0 // pred_check_branch
    %2070 = sbr.rel (0) target = $region13
  $region12: #{block_forward.3} parent=0 // pred_region
    _
  $region13: #{block_forward.3} parent=0 // pred_fallthru
    _
  // Predicated region
  $region14: #{block_forward.3} parent=0 // pred_check
    _
  $region15: #{block_forward.3} parent=0 // pred_check_branch
    %2072 = sbr.rel (0) target = $region17
  $region16: #{block_forward.3} parent=0 // pred_region
    _
  $region17: #{block_forward.3} parent=0 // pred_fallthru
    _

</llo_original>
